<compile_context>
chip_gen: v7x
topology: tpu7x:2x2x1
jax: 0.10.0
libtpu: 0.0.40
codegen_flags: <defaults>
</compile_context>

<pallas_src>
import functools

import jax
import jax.numpy as jnp
from jax import lax
from jax.experimental import pallas as pl
from jax.experimental.pallas import tpu as pltpu

NEG_SLOPE_MAIN = 0.01    # nn.LeakyReLU() default
NEG_SLOPE_FRE = 0.1      # FreBlock LeakyReLU(0.1)
VMEM_LIMIT = 32 * 1024 * 1024   # well under the 64 MiB v7x part


def _leaky(x, slope):
    return jnp.where(x >= 0, x, slope * x)


def _round_up(x, m):
    return (x + m - 1) // m * m


def _tiles(m, tm_max=512):
    """Lane tile (multiple of 128, <= tm_max) and padded extent for a (C, m) array."""
    tm = min(tm_max, _round_up(m, 128))
    return tm, _round_up(m, tm)


# ---------------------------------------------------------------------------
# Kernel S: fused spatial branch   x_s = x + conv_2(leaky(conv_1(x)))
# One grid step = one batch element as a (C, (H+2)*(W+2)) padded flat slab.
# ---------------------------------------------------------------------------
def _spatial_kernel(xpf_ref, w1_ref, b1_ref, w2_ref, b2_ref, o_ref, *, wp, lc):
    slab = xpf_ref[...]                        # (C, L) padded, flattened image
    off0 = wp + 1                              # flat index of output pixel (0,0)
    cout = o_ref.shape[0]

    acc = jnp.zeros((cout, lc), jnp.float32)
    for t in range(9):                         # 3x3 taps: static lane-offset slices
        dy, dx = t // 3, t % 3
        s = off0 + (dy - 1) * wp + (dx - 1)
        win = slab[:, s:s + lc]                # (Cin, Lc)
        acc = acc + jnp.dot(w1_ref[t], win, preferred_element_type=jnp.float32)
    h = _leaky(acc + b1_ref[...], NEG_SLOPE_MAIN)

    center = slab[:, off0:off0 + lc]           # == x at the computed positions
    x_s = center + jnp.dot(w2_ref[...], h,
                           preferred_element_type=jnp.float32) + b2_ref[...]

    o_ref[...] = jnp.zeros(o_ref.shape, o_ref.dtype)
    o_ref[:, off0:off0 + lc] = x_s.astype(o_ref.dtype)


def spatial_branch(xpf, w1, b1, w2, b2, *, wp, lc):
    n, c, l = xpf.shape
    kernel = functools.partial(_spatial_kernel, wp=wp, lc=lc)
    return pl.pallas_call(
        kernel,
        out_shape=jax.ShapeDtypeStruct((n, c, l), xpf.dtype),
        grid=(n,),
        in_specs=[
            pl.BlockSpec((None, c, l), lambda i: (i, 0, 0)),
            pl.BlockSpec((9, c, c), lambda i: (0, 0, 0)),
            pl.BlockSpec((c, 1), lambda i: (0, 0)),
            pl.BlockSpec((c, c), lambda i: (0, 0)),
            pl.BlockSpec((c, 1), lambda i: (0, 0)),
        ],
        out_specs=pl.BlockSpec((None, c, l), lambda i: (i, 0, 0)),
        input_output_aliases={0: 0},           # x_s overwrites the padded-x buffer
        compiler_params=pltpu.CompilerParams(
            dimension_semantics=("parallel",),
            vmem_limit_bytes=VMEM_LIMIT),
    )(xpf, w1, b1, w2, b2)


# ---------------------------------------------------------------------------
# Kernel F: fused FreBlock — mag/pha MLPs + cos/sin recombination -> real/imag
# ---------------------------------------------------------------------------
def _fre_kernel(mag_ref, pha_ref, w1m_ref, b1m_ref, w2m_ref, b2m_ref,
                w1p_ref, b1p_ref, w2p_ref, b2p_ref, re_ref, im_ref):
    def mlp(v, w1, b1, w2, b2):
        h = jnp.dot(w1[...], v, preferred_element_type=jnp.float32) + b1[...]
        h = _leaky(h, NEG_SLOPE_FRE)
        return jnp.dot(w2[...], h, preferred_element_type=jnp.float32) + b2[...]

    mag = mlp(mag_ref[...], w1m_ref, b1m_ref, w2m_ref, b2m_ref)
    pha = mlp(pha_ref[...], w1p_ref, b1p_ref, w2p_ref, b2p_ref)
    re_ref[...] = (mag * jnp.cos(pha)).astype(re_ref.dtype)
    im_ref[...] = (mag * jnp.sin(pha)).astype(im_ref.dtype)


def freblock(mag_t, pha_t, p, *, tm_max=512):
    c, mf = mag_t.shape
    tm, mp = _tiles(mf, tm_max)
    pad = mp - mf
    mag_p = jnp.pad(mag_t, ((0, 0), (0, pad)))
    pha_p = jnp.pad(pha_t, ((0, 0), (0, pad)))
    vspec = pl.BlockSpec((c, tm), lambda i: (0, i))
    wspec = pl.BlockSpec((c, c), lambda i: (0, 0))
    bspec = pl.BlockSpec((c, 1), lambda i: (0, 0))
    re, im = pl.pallas_call(
        _fre_kernel,
        out_shape=(jax.ShapeDtypeStruct((c, mp), mag_t.dtype),
                   jax.ShapeDtypeStruct((c, mp), mag_t.dtype)),
        grid=(mp // tm,),
        in_specs=[vspec, vspec, wspec, bspec, wspec, bspec,
                  wspec, bspec, wspec, bspec],
        out_specs=(vspec, vspec),
        compiler_params=pltpu.CompilerParams(
            dimension_semantics=("parallel",),
            vmem_limit_bytes=VMEM_LIMIT),
    )(mag_p, pha_p, p["w1m"], p["b1m"], p["w2m"], p["b2m"],
      p["w1p"], p["b1p"], p["w2p"], p["b2p"])
    return re[:, :mf], im[:, :mf]


# ---------------------------------------------------------------------------
# Kernel C: conv_3 (1x1) over channel-concat of x_s and x_f
# ---------------------------------------------------------------------------
def _conv3_kernel(xs_ref, xf_ref, wa_ref, wb_ref, b_ref, o_ref):
    acc = jnp.dot(wa_ref[...], xs_ref[...], preferred_element_type=jnp.float32)
    acc = acc + jnp.dot(wb_ref[...], xf_ref[...], preferred_element_type=jnp.float32)
    o_ref[...] = (acc + b_ref[...]).astype(o_ref.dtype)


def conv3_fuse(xs_t, xf_t, p, *, tm_max=512):
    c, m = xs_t.shape
    tm, mp = _tiles(m, tm_max)
    pad = mp - m
    xs_p = jnp.pad(xs_t, ((0, 0), (0, pad)))
    xf_p = jnp.pad(xf_t, ((0, 0), (0, pad)))
    vspec = pl.BlockSpec((c, tm), lambda i: (0, i))
    wspec = pl.BlockSpec((c, c), lambda i: (0, 0))
    bspec = pl.BlockSpec((c, 1), lambda i: (0, 0))
    out = pl.pallas_call(
        _conv3_kernel,
        out_shape=jax.ShapeDtypeStruct((c, mp), xs_t.dtype),
        grid=(mp // tm,),
        in_specs=[vspec, vspec, wspec, wspec, bspec],
        out_specs=vspec,
        compiler_params=pltpu.CompilerParams(
            dimension_semantics=("parallel",),
            vmem_limit_bytes=VMEM_LIMIT),
    )(xs_p, xf_p, p["w3a"], p["w3b"], p["b3"])
    return out[:, :m]


# ---------------------------------------------------------------------------
# Full AB_MFFE forward
# ---------------------------------------------------------------------------
def ab_mffe_forward(x_nchw, params):
    n, c, h, w = x_nchw.shape
    hp, wp = h + 2, w + 2
    l = hp * wp
    lc = l - 2 * (wp + 1)
    m = n * h * w

    # spatial branch: fused conv_1(3x3) + LeakyReLU + conv_2(1x1) + residual
    # TODO(synk): for very large H*W the per-image slab should be H-tiled with a
    # halo; one padded image per grid step is plenty at these sizes.
    xpf = jnp.pad(x_nchw, ((0, 0), (0, 0), (1, 1), (1, 1))).reshape(n, c, l)
    xs_pf = spatial_branch(xpf, params["w1"], params["b1"],
                           params["w2"], params["b2"], wp=wp, lc=lc)
    x_s = xs_pf.reshape(n, c, hp, wp)[:, :, 1:h + 1, 1:w + 1]     # (N,C,H,W)
    xs_t = jnp.transpose(x_s, (1, 0, 2, 3)).reshape(c, m)

    # frequency branch
    # TODO(synk): rfft2/irfft2, abs, angle, complex have no Pallas TPU
    # equivalent; they run in plain JAX around the fused FreBlock kernel.
    x_freq = jnp.fft.rfft2(x_nchw, axes=(2, 3), norm="backward")   # (N,C,H,Wf)
    wf = x_freq.shape[-1]
    mf = n * h * wf
    mag_t = jnp.transpose(jnp.abs(x_freq), (1, 0, 2, 3)).reshape(c, mf)
    pha_t = jnp.transpose(jnp.angle(x_freq), (1, 0, 2, 3)).reshape(c, mf)
    re_t, im_t = freblock(mag_t.astype(x_nchw.dtype),
                          pha_t.astype(x_nchw.dtype), params)
    re = jnp.transpose(re_t.reshape(c, n, h, wf), (1, 0, 2, 3))
    im = jnp.transpose(im_t.reshape(c, n, h, wf), (1, 0, 2, 3))
    x_f = jnp.fft.irfft2(lax.complex(re, im), s=(h, w), axes=(2, 3),
                         norm="backward").astype(x_nchw.dtype)     # (N,C,H,W)
    xf_t = jnp.transpose(x_f, (1, 0, 2, 3)).reshape(c, m)

    # fuse: conv_3 (1x1) on channel-concat of x_s and x_f
    out_t = conv3_fuse(xs_t, xf_t, params)                         # (C, M)
    return jnp.transpose(out_t.reshape(c, n, h, w), (1, 0, 2, 3))  # NCHW


# ---------------------------------------------------------------------------
# Parameters & pure-JAX reference (for a correctness self-check)
# ---------------------------------------------------------------------------
def init_params(C, key):
    ks = jax.random.split(key, 15)
    rnd = lambda k, s: (0.1 * jax.random.normal(k, s)).astype(jnp.float32)
    return {
        # conv_1 3x3: (tap = dy*3+dx, out, in); bias (C, 1)
        "w1": rnd(ks[0], (9, C, C)), "b1": rnd(ks[1], (C, 1)),
        # conv_2 1x1: (out, in)
        "w2": rnd(ks[2], (C, C)), "b2": rnd(ks[3], (C, 1)),
        # FreBlock processmag
        "w1m": rnd(ks[4], (C, C)), "b1m": rnd(ks[5], (C, 1)),
        "w2m": rnd(ks[6], (C, C)), "b2m": rnd(ks[7], (C, 1)),
        # FreBlock processpha
        "w1p": rnd(ks[8], (C, C)), "b1p": rnd(ks[9], (C, 1)),
        "w2p": rnd(ks[10], (C, C)), "b2p": rnd(ks[11], (C, 1)),
        # conv_3 1x1 over 2C channels, split into x_s / x_f halves
        "w3a": rnd(ks[12], (C, C)), "w3b": rnd(ks[13], (C, C)),
        "b3": rnd(ks[14], (C, 1)),
    }


def _ref_forward(x, p):
    n, c, h, w = x.shape
    hi = lax.Precision.HIGHEST
    pw = lambda wgt, v: jnp.einsum("oi,nihw->nohw", wgt, v, precision=hi)
    bias = lambda b: b.reshape(1, c, 1, 1)

    w1 = jnp.transpose(p["w1"].reshape(3, 3, c, c), (2, 3, 0, 1))   # OIHW
    hs = lax.conv_general_dilated(x, w1, (1, 1), "SAME",
                                  dimension_numbers=("NCHW", "OIHW", "NCHW"),
                                  precision=hi)
    hs = _leaky(hs + bias(p["b1"]), NEG_SLOPE_MAIN)
    x_s = x + pw(p["w2"], hs) + bias(p["b2"])

    xf = jnp.fft.rfft2(x, axes=(2, 3), norm="backward")
    mag, pha = jnp.abs(xf), jnp.angle(xf)
    mlp = lambda v, w1_, b1_, w2_, b2_: pw(
        w2_, _leaky(pw(w1_, v) + bias(b1_), NEG_SLOPE_FRE)) + bias(b2_)
    mag2 = mlp(mag, p["w1m"], p["b1m"], p["w2m"], p["b2m"])
    pha2 = mlp(pha, p["w1p"], p["b1p"], p["w2p"], p["b2p"])
    x_f = jnp.fft.irfft2(lax.complex(mag2 * jnp.cos(pha2), mag2 * jnp.sin(pha2)),
                         s=(h, w), axes=(2, 3), norm="backward")
    return pw(p["w3a"], x_s) + pw(p["w3b"], x_f) + bias(p["b3"])


if __name__ == "__main__":
    N, C, H, W = 2, 4, 16, 16          # in_channels == out_channels == 4
    key = jax.random.PRNGKey(0)
    k_x, k_p = jax.random.split(key)
    x = jax.random.normal(k_x, (N, C, H, W), dtype=jnp.float32)
    params = init_params(C, k_p)

    out = jax.block_until_ready(jax.jit(ab_mffe_forward)(x, params))
    assert out.shape == (N, C, H, W)
    assert bool(jnp.all(jnp.isfinite(out)))

    ref = _ref_forward(x, params)
    err = float(jnp.max(jnp.abs(out - ref)))
    assert err < 1e-2, f"mismatch vs JAX reference: max|diff|={err}"
    print("KERNEL_OK")
</pallas_src>

<mosaic_0001>
module attributes {stable_mosaic.version = 11 : i64} {
  func.func @_fre_kernel(%arg0: i32, %arg1: memref<4x384xf32, #tpu.memory_space<vmem>>, %arg2: memref<4x384xf32, #tpu.memory_space<vmem>>, %arg3: memref<4x4xf32, #tpu.memory_space<vmem>>, %arg4: memref<4x1xf32, #tpu.memory_space<vmem>>, %arg5: memref<4x4xf32, #tpu.memory_space<vmem>>, %arg6: memref<4x1xf32, #tpu.memory_space<vmem>>, %arg7: memref<4x4xf32, #tpu.memory_space<vmem>>, %arg8: memref<4x1xf32, #tpu.memory_space<vmem>>, %arg9: memref<4x4xf32, #tpu.memory_space<vmem>>, %arg10: memref<4x1xf32, #tpu.memory_space<vmem>>, %arg11: memref<4x384xf32, #tpu.memory_space<vmem>>, %arg12: memref<4x384xf32, #tpu.memory_space<vmem>>) attributes {dimension_semantics = [#tpu.dimension_semantics<parallel>], iteration_bounds = array<i64: 1>, scalar_prefetch = 0 : i64, scratch_operands = 0 : i64, tpu.core_type = #tpu.core_type<tc>, window_params = [{transform_indices = @transform_0, window_bounds = array<i64: 4, 384>}, {transform_indices = @transform_1, window_bounds = array<i64: 4, 384>}, {pipeline_mode = #tpu.pipeline_mode<synchronous>, transform_indices = @transform_2, window_bounds = array<i64: 4, 4>}, {pipeline_mode = #tpu.pipeline_mode<synchronous>, transform_indices = @transform_3, window_bounds = array<i64: 4, 1>}, {pipeline_mode = #tpu.pipeline_mode<synchronous>, transform_indices = @transform_4, window_bounds = array<i64: 4, 4>}, {pipeline_mode = #tpu.pipeline_mode<synchronous>, transform_indices = @transform_5, window_bounds = array<i64: 4, 1>}, {pipeline_mode = #tpu.pipeline_mode<synchronous>, transform_indices = @transform_6, window_bounds = array<i64: 4, 4>}, {pipeline_mode = #tpu.pipeline_mode<synchronous>, transform_indices = @transform_7, window_bounds = array<i64: 4, 1>}, {pipeline_mode = #tpu.pipeline_mode<synchronous>, transform_indices = @transform_8, window_bounds = array<i64: 4, 4>}, {pipeline_mode = #tpu.pipeline_mode<synchronous>, transform_indices = @transform_9, window_bounds = array<i64: 4, 1>}, {transform_indices = @transform_10, window_bounds = array<i64: 4, 384>}, {transform_indices = @transform_11, window_bounds = array<i64: 4, 384>}]} {
    %c0 = arith.constant 0 : index
    %c0_0 = arith.constant 0 : index
    %0 = vector.load %arg1[%c0, %c0_0] : memref<4x384xf32, #tpu.memory_space<vmem>>, vector<4x384xf32>
    %c0_1 = arith.constant 0 : index
    %c0_2 = arith.constant 0 : index
    %1 = vector.load %arg3[%c0_1, %c0_2] : memref<4x4xf32, #tpu.memory_space<vmem>>, vector<4x4xf32>
    %cst = arith.constant dense<0.000000e+00> : vector<4x384xf32>
    %2 = tpu.matmul %1, %0, %cst {dimension_numbers = #tpu.dot_dimension_numbers<[1], [0], [0], [1], [0, 0, 1, 1], [], []>} : vector<4x4xf32>, vector<4x384xf32>, vector<4x384xf32> -> vector<4x384xf32>
    %c0_3 = arith.constant 0 : index
    %c0_4 = arith.constant 0 : index
    %3 = vector.load %arg4[%c0_3, %c0_4] : memref<4x1xf32, #tpu.memory_space<vmem>>, vector<4x1xf32>
    %4 = vector.broadcast %3 : vector<4x1xf32> to vector<4x384xf32>
    %5 = arith.addf %2, %4 : vector<4x384xf32>
    %cst_5 = arith.constant 0.000000e+00 : f32
    %6 = vector.broadcast %cst_5 : f32 to vector<4x384xf32>
    %7 = arith.cmpf oge, %5, %6 : vector<4x384xf32>
    %cst_6 = arith.constant 1.000000e-01 : f32
    %8 = vector.broadcast %cst_6 : f32 to vector<4x384xf32>
    %9 = arith.mulf %8, %5 : vector<4x384xf32>
    %10 = arith.select %7, %5, %9 : vector<4x384xi1>, vector<4x384xf32>
    %c0_7 = arith.constant 0 : index
    %c0_8 = arith.constant 0 : index
    %11 = vector.load %arg5[%c0_7, %c0_8] : memref<4x4xf32, #tpu.memory_space<vmem>>, vector<4x4xf32>
    %cst_9 = arith.constant dense<0.000000e+00> : vector<4x384xf32>
    %12 = tpu.matmul %11, %10, %cst_9 {dimension_numbers = #tpu.dot_dimension_numbers<[1], [0], [0], [1], [0, 0, 1, 1], [], []>} : vector<4x4xf32>, vector<4x384xf32>, vector<4x384xf32> -> vector<4x384xf32>
    %c0_10 = arith.constant 0 : index
    %c0_11 = arith.constant 0 : index
    %13 = vector.load %arg6[%c0_10, %c0_11] : memref<4x1xf32, #tpu.memory_space<vmem>>, vector<4x1xf32>
    %14 = vector.broadcast %13 : vector<4x1xf32> to vector<4x384xf32>
    %15 = arith.addf %12, %14 : vector<4x384xf32>
    %c0_12 = arith.constant 0 : index
    %c0_13 = arith.constant 0 : index
    %16 = vector.load %arg2[%c0_12, %c0_13] : memref<4x384xf32, #tpu.memory_space<vmem>>, vector<4x384xf32>
    %c0_14 = arith.constant 0 : index
    %c0_15 = arith.constant 0 : index
    %17 = vector.load %arg7[%c0_14, %c0_15] : memref<4x4xf32, #tpu.memory_space<vmem>>, vector<4x4xf32>
    %cst_16 = arith.constant dense<0.000000e+00> : vector<4x384xf32>
    %18 = tpu.matmul %17, %16, %cst_16 {dimension_numbers = #tpu.dot_dimension_numbers<[1], [0], [0], [1], [0, 0, 1, 1], [], []>} : vector<4x4xf32>, vector<4x384xf32>, vector<4x384xf32> -> vector<4x384xf32>
    %c0_17 = arith.constant 0 : index
    %c0_18 = arith.constant 0 : index
    %19 = vector.load %arg8[%c0_17, %c0_18] : memref<4x1xf32, #tpu.memory_space<vmem>>, vector<4x1xf32>
    %20 = vector.broadcast %19 : vector<4x1xf32> to vector<4x384xf32>
    %21 = arith.addf %18, %20 : vector<4x384xf32>
    %cst_19 = arith.constant 0.000000e+00 : f32
    %22 = vector.broadcast %cst_19 : f32 to vector<4x384xf32>
    %23 = arith.cmpf oge, %21, %22 : vector<4x384xf32>
    %cst_20 = arith.constant 1.000000e-01 : f32
    %24 = vector.broadcast %cst_20 : f32 to vector<4x384xf32>
    %25 = arith.mulf %24, %21 : vector<4x384xf32>
    %26 = arith.select %23, %21, %25 : vector<4x384xi1>, vector<4x384xf32>
    %c0_21 = arith.constant 0 : index
    %c0_22 = arith.constant 0 : index
    %27 = vector.load %arg9[%c0_21, %c0_22] : memref<4x4xf32, #tpu.memory_space<vmem>>, vector<4x4xf32>
    %cst_23 = arith.constant dense<0.000000e+00> : vector<4x384xf32>
    %28 = tpu.matmul %27, %26, %cst_23 {dimension_numbers = #tpu.dot_dimension_numbers<[1], [0], [0], [1], [0, 0, 1, 1], [], []>} : vector<4x4xf32>, vector<4x384xf32>, vector<4x384xf32> -> vector<4x384xf32>
    %c0_24 = arith.constant 0 : index
    %c0_25 = arith.constant 0 : index
    %29 = vector.load %arg10[%c0_24, %c0_25] : memref<4x1xf32, #tpu.memory_space<vmem>>, vector<4x1xf32>
    %30 = vector.broadcast %29 : vector<4x1xf32> to vector<4x384xf32>
    %31 = arith.addf %28, %30 : vector<4x384xf32>
    %32 = math.cos %31 : vector<4x384xf32>
    %33 = arith.mulf %15, %32 : vector<4x384xf32>
    %c0_26 = arith.constant 0 : index
    %c0_27 = arith.constant 0 : index
    %34 = vector.load %arg11[%c0_26, %c0_27] : memref<4x384xf32, #tpu.memory_space<vmem>>, vector<4x384xf32>
    tpu.vector_store %arg11[%c0_26, %c0_27], %33 {strides = array<i32>} : memref<4x384xf32, #tpu.memory_space<vmem>>, vector<4x384xf32>,
    %35 = math.sin %31 : vector<4x384xf32>
    %36 = arith.mulf %15, %35 : vector<4x384xf32>
    %c0_28 = arith.constant 0 : index
    %c0_29 = arith.constant 0 : index
    %37 = vector.load %arg12[%c0_28, %c0_29] : memref<4x384xf32, #tpu.memory_space<vmem>>, vector<4x384xf32>
    tpu.vector_store %arg12[%c0_28, %c0_29], %36 {strides = array<i32>} : memref<4x384xf32, #tpu.memory_space<vmem>>, vector<4x384xf32>,
    return
  }
  func.func @transform_0(%arg0: i32) -> (i32, i32) {
    %c0_i32 = arith.constant 0 : i32
    %c0_i32_0 = arith.constant 0 : i32
    return %c0_i32, %arg0 : i32, i32
  }
  func.func @transform_1(%arg0: i32) -> (i32, i32) {
    %c0_i32 = arith.constant 0 : i32
    %c0_i32_0 = arith.constant 0 : i32
    return %c0_i32, %arg0 : i32, i32
  }
  func.func @transform_2(%arg0: i32) -> (i32, i32) {
    %c0_i32 = arith.constant 0 : i32
    %c0_i32_0 = arith.constant 0 : i32
    %c0_i32_1 = arith.constant 0 : i32
    return %c0_i32, %c0_i32_0 : i32, i32
  }
  func.func @transform_3(%arg0: i32) -> (i32, i32) {
    %c0_i32 = arith.constant 0 : i32
    %c0_i32_0 = arith.constant 0 : i32
    %c0_i32_1 = arith.constant 0 : i32
    return %c0_i32, %c0_i32_0 : i32, i32
  }
  func.func @transform_4(%arg0: i32) -> (i32, i32) {
    %c0_i32 = arith.constant 0 : i32
    %c0_i32_0 = arith.constant 0 : i32
    %c0_i32_1 = arith.constant 0 : i32
    return %c0_i32, %c0_i32_0 : i32, i32
  }
  func.func @transform_5(%arg0: i32) -> (i32, i32) {
    %c0_i32 = arith.constant 0 : i32
    %c0_i32_0 = arith.constant 0 : i32
    %c0_i32_1 = arith.constant 0 : i32
    return %c0_i32, %c0_i32_0 : i32, i32
  }
  func.func @transform_6(%arg0: i32) -> (i32, i32) {
    %c0_i32 = arith.constant 0 : i32
    %c0_i32_0 = arith.constant 0 : i32
    %c0_i32_1 = arith.constant 0 : i32
    return %c0_i32, %c0_i32_0 : i32, i32
  }
  func.func @transform_7(%arg0: i32) -> (i32, i32) {
    %c0_i32 = arith.constant 0 : i32
    %c0_i32_0 = arith.constant 0 : i32
    %c0_i32_1 = arith.constant 0 : i32
    return %c0_i32, %c0_i32_0 : i32, i32
  }
  func.func @transform_8(%arg0: i32) -> (i32, i32) {
    %c0_i32 = arith.constant 0 : i32
    %c0_i32_0 = arith.constant 0 : i32
    %c0_i32_1 = arith.constant 0 : i32
    return %c0_i32, %c0_i32_0 : i32, i32
  }
  func.func @transform_9(%arg0: i32) -> (i32, i32) {
    %c0_i32 = arith.constant 0 : i32
    %c0_i32_0 = arith.constant 0 : i32
    %c0_i32_1 = arith.constant 0 : i32
    return %c0_i32, %c0_i32_0 : i32, i32
  }
  func.func @transform_10(%arg0: i32) -> (i32, i32) {
    %c0_i32 = arith.constant 0 : i32
    %c0_i32_0 = arith.constant 0 : i32
    return %c0_i32, %arg0 : i32, i32
  }
  func.func @transform_11(%arg0: i32) -> (i32, i32) {
    %c0_i32 = arith.constant 0 : i32
    %c0_i32_0 = arith.constant 0 : i32
    return %c0_i32, %arg0 : i32, i32
  }
}

module attributes {stable_mosaic.version = 11 : i64} {
  func.func @_spatial_kernel(%arg0: i32, %arg1: memref<1x4x324xf32, #tpu.memory_space<vmem>>, %arg2: memref<9x4x4xf32, #tpu.memory_space<vmem>>, %arg3: memref<4x1xf32, #tpu.memory_space<vmem>>, %arg4: memref<4x4xf32, #tpu.memory_space<vmem>>, %arg5: memref<4x1xf32, #tpu.memory_space<vmem>>, %arg6: memref<1x4x324xf32, #tpu.memory_space<vmem>>) attributes {dimension_semantics = [#tpu.dimension_semantics<parallel>], iteration_bounds = array<i64: 2>, scalar_prefetch = 0 : i64, scratch_operands = 0 : i64, tpu.core_type = #tpu.core_type<tc>, window_params = [{transform_indices = @transform_0, window_bounds = array<i64: 1, 4, 324>}, {pipeline_mode = #tpu.pipeline_mode<synchronous>, transform_indices = @transform_1, window_bounds = array<i64: 9, 4, 4>}, {pipeline_mode = #tpu.pipeline_mode<synchronous>, transform_indices = @transform_2, window_bounds = array<i64: 4, 1>}, {pipeline_mode = #tpu.pipeline_mode<synchronous>, transform_indices = @transform_3, window_bounds = array<i64: 4, 4>}, {pipeline_mode = #tpu.pipeline_mode<synchronous>, transform_indices = @transform_4, window_bounds = array<i64: 4, 1>}, {transform_indices = @transform_5, window_bounds = array<i64: 1, 4, 324>}]} {
    %c0 = arith.constant 0 : index
    %c0_0 = arith.constant 0 : index
    %c0_1 = arith.constant 0 : index
    %0 = vector.load %arg1[%c0, %c0_0, %c0_1] : memref<1x4x324xf32, #tpu.memory_space<vmem>>, vector<1x4x324xf32>
    %1 = vector.shape_cast %0 : vector<1x4x324xf32> to vector<4x324xf32>
    %cst = arith.constant 0.000000e+00 : f32
    %2 = vector.broadcast %cst : f32 to vector<4x286xf32>
    %3 = vector.extract_strided_slice %1 {offsets = [0, 0], sizes = [4, 286], strides = [1, 1]} : vector<4x324xf32> to vector<4x286xf32>
    %c0_2 = arith.constant 0 : index
    %c0_3 = arith.constant 0 : index
    %c0_4 = arith.constant 0 : index
    %4 = vector.load %arg2[%c0_2, %c0_3, %c0_4] : memref<9x4x4xf32, #tpu.memory_space<vmem>>, vector<1x4x4xf32>
    %5 = vector.shape_cast %4 : vector<1x4x4xf32> to vector<4x4xf32>
    %cst_5 = arith.constant dense<0.000000e+00> : vector<4x286xf32>
    %6 = tpu.matmul %5, %3, %cst_5 {dimension_numbers = #tpu.dot_dimension_numbers<[1], [0], [0], [1], [0, 0, 1, 1], [], []>} : vector<4x4xf32>, vector<4x286xf32>, vector<4x286xf32> -> vector<4x286xf32>
    %7 = arith.addf %2, %6 : vector<4x286xf32>
    %8 = vector.extract_strided_slice %1 {offsets = [0, 1], sizes = [4, 286], strides = [1, 1]} : vector<4x324xf32> to vector<4x286xf32>
    %c1 = arith.constant 1 : index
    %c0_6 = arith.constant 0 : index
    %c0_7 = arith.constant 0 : index
    %9 = vector.load %arg2[%c1, %c0_6, %c0_7] : memref<9x4x4xf32, #tpu.memory_space<vmem>>, vector<1x4x4xf32>
    %10 = vector.shape_cast %9 : vector<1x4x4xf32> to vector<4x4xf32>
    %cst_8 = arith.constant dense<0.000000e+00> : vector<4x286xf32>
    %11 = tpu.matmul %10, %8, %cst_8 {dimension_numbers = #tpu.dot_dimension_numbers<[1], [0], [0], [1], [0, 0, 1, 1], [], []>} : vector<4x4xf32>, vector<4x286xf32>, vector<4x286xf32> -> vector<4x286xf32>
    %12 = arith.addf %7, %11 : vector<4x286xf32>
    %13 = vector.extract_strided_slice %1 {offsets = [0, 2], sizes = [4, 286], strides = [1, 1]} : vector<4x324xf32> to vector<4x286xf32>
    %c2 = arith.constant 2 : index
    %c0_9 = arith.constant 0 : index
    %c0_10 = arith.constant 0 : index
    %14 = vector.load %arg2[%c2, %c0_9, %c0_10] : memref<9x4x4xf32, #tpu.memory_space<vmem>>, vector<1x4x4xf32>
    %15 = vector.shape_cast %14 : vector<1x4x4xf32> to vector<4x4xf32>
    %cst_11 = arith.constant dense<0.000000e+00> : vector<4x286xf32>
    %16 = tpu.matmul %15, %13, %cst_11 {dimension_numbers = #tpu.dot_dimension_numbers<[1], [0], [0], [1], [0, 0, 1, 1], [], []>} : vector<4x4xf32>, vector<4x286xf32>, vector<4x286xf32> -> vector<4x286xf32>
    %17 = arith.addf %12, %16 : vector<4x286xf32>
    %18 = vector.extract_strided_slice %1 {offsets = [0, 18], sizes = [4, 286], strides = [1, 1]} : vector<4x324xf32> to vector<4x286xf32>
    %c3 = arith.constant 3 : index
    %c0_12 = arith.constant 0 : index
    %c0_13 = arith.constant 0 : index
    %19 = vector.load %arg2[%c3, %c0_12, %c0_13] : memref<9x4x4xf32, #tpu.memory_space<vmem>>, vector<1x4x4xf32>
    %20 = vector.shape_cast %19 : vector<1x4x4xf32> to vector<4x4xf32>
    %cst_14 = arith.constant dense<0.000000e+00> : vector<4x286xf32>
    %21 = tpu.matmul %20, %18, %cst_14 {dimension_numbers = #tpu.dot_dimension_numbers<[1], [0], [0], [1], [0, 0, 1, 1], [], []>} : vector<4x4xf32>, vector<4x286xf32>, vector<4x286xf32> -> vector<4x286xf32>
    %22 = arith.addf %17, %21 : vector<4x286xf32>
    %23 = vector.extract_strided_slice %1 {offsets = [0, 19], sizes = [4, 286], strides = [1, 1]} : vector<4x324xf32> to vector<4x286xf32>
    %c4 = arith.constant 4 : index
    %c0_15 = arith.constant 0 : index
    %c0_16 = arith.constant 0 : index
    %24 = vector.load %arg2[%c4, %c0_15, %c0_16] : memref<9x4x4xf32, #tpu.memory_space<vmem>>, vector<1x4x4xf32>
    %25 = vector.shape_cast %24 : vector<1x4x4xf32> to vector<4x4xf32>
    %cst_17 = arith.constant dense<0.000000e+00> : vector<4x286xf32>
    %26 = tpu.matmul %25, %23, %cst_17 {dimension_numbers = #tpu.dot_dimension_numbers<[1], [0], [0], [1], [0, 0, 1, 1], [], []>} : vector<4x4xf32>, vector<4x286xf32>, vector<4x286xf32> -> vector<4x286xf32>
    %27 = arith.addf %22, %26 : vector<4x286xf32>
    %28 = vector.extract_strided_slice %1 {offsets = [0, 20], sizes = [4, 286], strides = [1, 1]} : vector<4x324xf32> to vector<4x286xf32>
    %c5 = arith.constant 5 : index
    %c0_18 = arith.constant 0 : index
    %c0_19 = arith.constant 0 : index
    %29 = vector.load %arg2[%c5, %c0_18, %c0_19] : memref<9x4x4xf32, #tpu.memory_space<vmem>>, vector<1x4x4xf32>
    %30 = vector.shape_cast %29 : vector<1x4x4xf32> to vector<4x4xf32>
    %cst_20 = arith.constant dense<0.000000e+00> : vector<4x286xf32>
    %31 = tpu.matmul %30, %28, %cst_20 {dimension_numbers = #tpu.dot_dimension_numbers<[1], [0], [0], [1], [0, 0, 1, 1], [], []>} : vector<4x4xf32>, vector<4x286xf32>, vector<4x286xf32> -> vector<4x286xf32>
    %32 = arith.addf %27, %31 : vector<4x286xf32>
    %33 = vector.extract_strided_slice %1 {offsets = [0, 36], sizes = [4, 286], strides = [1, 1]} : vector<4x324xf32> to vector<4x286xf32>
    %c6 = arith.constant 6 : index
    %c0_21 = arith.constant 0 : index
    %c0_22 = arith.constant 0 : index
    %34 = vector.load %arg2[%c6, %c0_21, %c0_22] : memref<9x4x4xf32, #tpu.memory_space<vmem>>, vector<1x4x4xf32>
    %35 = vector.shape_cast %34 : vector<1x4x4xf32> to vector<4x4xf32>
    %cst_23 = arith.constant dense<0.000000e+00> : vector<4x286xf32>
    %36 = tpu.matmul %35, %33, %cst_23 {dimension_numbers = #tpu.dot_dimension_numbers<[1], [0], [0], [1], [0, 0, 1, 1], [], []>} : vector<4x4xf32>, vector<4x286xf32>, vector<4x286xf32> -> vector<4x286xf32>
    %37 = arith.addf %32, %36 : vector<4x286xf32>
    %38 = vector.extract_strided_slice %1 {offsets = [0, 37], sizes = [4, 286], strides = [1, 1]} : vector<4x324xf32> to vector<4x286xf32>
    %c7 = arith.constant 7 : index
    %c0_24 = arith.constant 0 : index
    %c0_25 = arith.constant 0 : index
    %39 = vector.load %arg2[%c7, %c0_24, %c0_25] : memref<9x4x4xf32, #tpu.memory_space<vmem>>, vector<1x4x4xf32>
    %40 = vector.shape_cast %39 : vector<1x4x4xf32> to vector<4x4xf32>
    %cst_26 = arith.constant dense<0.000000e+00> : vector<4x286xf32>
    %41 = tpu.matmul %40, %38, %cst_26 {dimension_numbers = #tpu.dot_dimension_numbers<[1], [0], [0], [1], [0, 0, 1, 1], [], []>} : vector<4x4xf32>, vector<4x286xf32>, vector<4x286xf32> -> vector<4x286xf32>
    %42 = arith.addf %37, %41 : vector<4x286xf32>
    %43 = vector.extract_strided_slice %1 {offsets = [0, 38], sizes = [4, 286], strides = [1, 1]} : vector<4x324xf32> to vector<4x286xf32>
    %c8 = arith.constant 8 : index
    %c0_27 = arith.constant 0 : index
    %c0_28 = arith.constant 0 : index
    %44 = vector.load %arg2[%c8, %c0_27, %c0_28] : memref<9x4x4xf32, #tpu.memory_space<vmem>>, vector<1x4x4xf32>
    %45 = vector.shape_cast %44 : vector<1x4x4xf32> to vector<4x4xf32>
    %cst_29 = arith.constant dense<0.000000e+00> : vector<4x286xf32>
    %46 = tpu.matmul %45, %43, %cst_29 {dimension_numbers = #tpu.dot_dimension_numbers<[1], [0], [0], [1], [0, 0, 1, 1], [], []>} : vector<4x4xf32>, vector<4x286xf32>, vector<4x286xf32> -> vector<4x286xf32>
    %47 = arith.addf %42, %46 : vector<4x286xf32>
    %c0_30 = arith.constant 0 : index
    %c0_31 = arith.constant 0 : index
    %48 = vector.load %arg3[%c0_30, %c0_31] : memref<4x1xf32, #tpu.memory_space<vmem>>, vector<4x1xf32>
    %49 = vector.broadcast %48 : vector<4x1xf32> to vector<4x286xf32>
    %50 = arith.addf %47, %49 : vector<4x286xf32>
    %cst_32 = arith.constant 0.000000e+00 : f32
    %51 = vector.broadcast %cst_32 : f32 to vector<4x286xf32>
    %52 = arith.cmpf oge, %50, %51 : vector<4x286xf32>
    %cst_33 = arith.constant 0.00999999977 : f32
    %53 = vector.broadcast %cst_33 : f32 to vector<4x286xf32>
    %54 = arith.mulf %53, %50 : vector<4x286xf32>
    %55 = arith.select %52, %50, %54 : vector<4x286xi1>, vector<4x286xf32>
    %56 = vector.extract_strided_slice %1 {offsets = [0, 19], sizes = [4, 286], strides = [1, 1]} : vector<4x324xf32> to vector<4x286xf32>
    %c0_34 = arith.constant 0 : index
    %c0_35 = arith.constant 0 : index
    %57 = vector.load %arg4[%c0_34, %c0_35] : memref<4x4xf32, #tpu.memory_space<vmem>>, vector<4x4xf32>
    %cst_36 = arith.constant dense<0.000000e+00> : vector<4x286xf32>
    %58 = tpu.matmul %57, %55, %cst_36 {dimension_numbers = #tpu.dot_dimension_numbers<[1], [0], [0], [1], [0, 0, 1, 1], [], []>} : vector<4x4xf32>, vector<4x286xf32>, vector<4x286xf32> -> vector<4x286xf32>
    %59 = arith.addf %56, %58 : vector<4x286xf32>
    %c0_37 = arith.constant 0 : index
    %c0_38 = arith.constant 0 : index
    %60 = vector.load %arg5[%c0_37, %c0_38] : memref<4x1xf32, #tpu.memory_space<vmem>>, vector<4x1xf32>
    %61 = vector.broadcast %60 : vector<4x1xf32> to vector<4x286xf32>
    %62 = arith.addf %59, %61 : vector<4x286xf32>
    %cst_39 = arith.constant 0.000000e+00 : f32
    %63 = vector.broadcast %cst_39 : f32 to vector<4x324xf32>
    %c0_40 = arith.constant 0 : index
    %c0_41 = arith.constant 0 : index
    %c0_42 = arith.constant 0 : index
    %64 = vector.load %arg6[%c0_40, %c0_41, %c0_42] : memref<1x4x324xf32, #tpu.memory_space<vmem>>, vector<1x4x324xf32>
    %65 = vector.shape_cast %64 : vector<1x4x324xf32> to vector<4x324xf32>
    %66 = vector.shape_cast %63 : vector<4x324xf32> to vector<1x4x324xf32>
    tpu.vector_store %arg6[%c0_40, %c0_41, %c0_42], %66 {strides = array<i32>} : memref<1x4x324xf32, #tpu.memory_space<vmem>>, vector<1x4x324xf32>,
    %c0_43 = arith.constant 0 : index
    %c0_44 = arith.constant 0 : index
    %c19 = arith.constant 19 : index
    %67 = vector.load %arg6[%c0_43, %c0_44, %c19] : memref<1x4x324xf32, #tpu.memory_space<vmem>>, vector<1x4x286xf32>
    %68 = vector.shape_cast %67 : vector<1x4x286xf32> to vector<4x286xf32>
    %69 = vector.shape_cast %62 : vector<4x286xf32> to vector<1x4x286xf32>
    tpu.vector_store %arg6[%c0_43, %c0_44, %c19], %69 {strides = array<i32>} : memref<1x4x324xf32, #tpu.memory_space<vmem>>, vector<1x4x286xf32>,
    return
  }
  func.func @transform_0(%arg0: i32) -> (i32, i32, i32) {
    %c0_i32 = arith.constant 0 : i32
    %c0_i32_0 = arith.constant 0 : i32
    %c0_i32_1 = arith.constant 0 : i32
    return %arg0, %c0_i32, %c0_i32_0 : i32, i32, i32
  }
  func.func @transform_1(%arg0: i32) -> (i32, i32, i32) {
    %c0_i32 = arith.constant 0 : i32
    %c0_i32_0 = arith.constant 0 : i32
    %c0_i32_1 = arith.constant 0 : i32
    %c0_i32_2 = arith.constant 0 : i32
    return %c0_i32, %c0_i32_0, %c0_i32_1 : i32, i32, i32
  }
  func.func @transform_2(%arg0: i32) -> (i32, i32) {
    %c0_i32 = arith.constant 0 : i32
    %c0_i32_0 = arith.constant 0 : i32
    %c0_i32_1 = arith.constant 0 : i32
    return %c0_i32, %c0_i32_0 : i32, i32
  }
  func.func @transform_3(%arg0: i32) -> (i32, i32) {
    %c0_i32 = arith.constant 0 : i32
    %c0_i32_0 = arith.constant 0 : i32
    %c0_i32_1 = arith.constant 0 : i32
    return %c0_i32, %c0_i32_0 : i32, i32
  }
  func.func @transform_4(%arg0: i32) -> (i32, i32) {
    %c0_i32 = arith.constant 0 : i32
    %c0_i32_0 = arith.constant 0 : i32
    %c0_i32_1 = arith.constant 0 : i32
    return %c0_i32, %c0_i32_0 : i32, i32
  }
  func.func @transform_5(%arg0: i32) -> (i32, i32, i32) {
    %c0_i32 = arith.constant 0 : i32
    %c0_i32_0 = arith.constant 0 : i32
    %c0_i32_1 = arith.constant 0 : i32
    return %arg0, %c0_i32, %c0_i32_0 : i32, i32, i32
  }
}

module attributes {stable_mosaic.version = 11 : i64} {
  func.func @_conv3_kernel(%arg0: i32, %arg1: memref<4x512xf32, #tpu.memory_space<vmem>>, %arg2: memref<4x512xf32, #tpu.memory_space<vmem>>, %arg3: memref<4x4xf32, #tpu.memory_space<vmem>>, %arg4: memref<4x4xf32, #tpu.memory_space<vmem>>, %arg5: memref<4x1xf32, #tpu.memory_space<vmem>>, %arg6: memref<4x512xf32, #tpu.memory_space<vmem>>) attributes {dimension_semantics = [#tpu.dimension_semantics<parallel>], iteration_bounds = array<i64: 1>, scalar_prefetch = 0 : i64, scratch_operands = 0 : i64, tpu.core_type = #tpu.core_type<tc>, window_params = [{transform_indices = @transform_0, window_bounds = array<i64: 4, 512>}, {transform_indices = @transform_1, window_bounds = array<i64: 4, 512>}, {pipeline_mode = #tpu.pipeline_mode<synchronous>, transform_indices = @transform_2, window_bounds = array<i64: 4, 4>}, {pipeline_mode = #tpu.pipeline_mode<synchronous>, transform_indices = @transform_3, window_bounds = array<i64: 4, 4>}, {pipeline_mode = #tpu.pipeline_mode<synchronous>, transform_indices = @transform_4, window_bounds = array<i64: 4, 1>}, {transform_indices = @transform_5, window_bounds = array<i64: 4, 512>}]} {
    %c0 = arith.constant 0 : index
    %c0_0 = arith.constant 0 : index
    %0 = vector.load %arg3[%c0, %c0_0] : memref<4x4xf32, #tpu.memory_space<vmem>>, vector<4x4xf32>
    %c0_1 = arith.constant 0 : index
    %c0_2 = arith.constant 0 : index
    %1 = vector.load %arg1[%c0_1, %c0_2] : memref<4x512xf32, #tpu.memory_space<vmem>>, vector<4x512xf32>
    %cst = arith.constant dense<0.000000e+00> : vector<4x512xf32>
    %2 = tpu.matmul %0, %1, %cst {dimension_numbers = #tpu.dot_dimension_numbers<[1], [0], [0], [1], [0, 0, 1, 1], [], []>} : vector<4x4xf32>, vector<4x512xf32>, vector<4x512xf32> -> vector<4x512xf32>
    %c0_3 = arith.constant 0 : index
    %c0_4 = arith.constant 0 : index
    %3 = vector.load %arg4[%c0_3, %c0_4] : memref<4x4xf32, #tpu.memory_space<vmem>>, vector<4x4xf32>
    %c0_5 = arith.constant 0 : index
    %c0_6 = arith.constant 0 : index
    %4 = vector.load %arg2[%c0_5, %c0_6] : memref<4x512xf32, #tpu.memory_space<vmem>>, vector<4x512xf32>
    %cst_7 = arith.constant dense<0.000000e+00> : vector<4x512xf32>
    %5 = tpu.matmul %3, %4, %cst_7 {dimension_numbers = #tpu.dot_dimension_numbers<[1], [0], [0], [1], [0, 0, 1, 1], [], []>} : vector<4x4xf32>, vector<4x512xf32>, vector<4x512xf32> -> vector<4x512xf32>
    %6 = arith.addf %2, %5 : vector<4x512xf32>
    %c0_8 = arith.constant 0 : index
    %c0_9 = arith.constant 0 : index
    %7 = vector.load %arg5[%c0_8, %c0_9] : memref<4x1xf32, #tpu.memory_space<vmem>>, vector<4x1xf32>
    %8 = vector.broadcast %7 : vector<4x1xf32> to vector<4x512xf32>
    %9 = arith.addf %6, %8 : vector<4x512xf32>
    %c0_10 = arith.constant 0 : index
    %c0_11 = arith.constant 0 : index
    %10 = vector.load %arg6[%c0_10, %c0_11] : memref<4x512xf32, #tpu.memory_space<vmem>>, vector<4x512xf32>
    tpu.vector_store %arg6[%c0_10, %c0_11], %9 {strides = array<i32>} : memref<4x512xf32, #tpu.memory_space<vmem>>, vector<4x512xf32>,
    return
  }
  func.func @transform_0(%arg0: i32) -> (i32, i32) {
    %c0_i32 = arith.constant 0 : i32
    %c0_i32_0 = arith.constant 0 : i32
    return %c0_i32, %arg0 : i32, i32
  }
  func.func @transform_1(%arg0: i32) -> (i32, i32) {
    %c0_i32 = arith.constant 0 : i32
    %c0_i32_0 = arith.constant 0 : i32
    return %c0_i32, %arg0 : i32, i32
  }
  func.func @transform_2(%arg0: i32) -> (i32, i32) {
    %c0_i32 = arith.constant 0 : i32
    %c0_i32_0 = arith.constant 0 : i32
    %c0_i32_1 = arith.constant 0 : i32
    return %c0_i32, %c0_i32_0 : i32, i32
  }
  func.func @transform_3(%arg0: i32) -> (i32, i32) {
    %c0_i32 = arith.constant 0 : i32
    %c0_i32_0 = arith.constant 0 : i32
    %c0_i32_1 = arith.constant 0 : i32
    return %c0_i32, %c0_i32_0 : i32, i32
  }
  func.func @transform_4(%arg0: i32) -> (i32, i32) {
    %c0_i32 = arith.constant 0 : i32
    %c0_i32_0 = arith.constant 0 : i32
    %c0_i32_1 = arith.constant 0 : i32
    return %c0_i32, %c0_i32_0 : i32, i32
  }
  func.func @transform_5(%arg0: i32) -> (i32, i32) {
    %c0_i32 = arith.constant 0 : i32
    %c0_i32_0 = arith.constant 0 : i32
    return %c0_i32, %arg0 : i32, i32
  }
}

</mosaic_0001>

<llo_original>
// kernel: reverse.0
$region0: #{reverse.0}
  %s0 = inlined_call_operand.vmem [shape: f32[2,4,16,7], index: 0, kind: input, shape index: {}]
  %s1 = inlined_call_operand.vmem [shape: f32[2,4,16,7], index: 1, kind: output, shape index: {}]
  $region1: #{reverse.0} parent=0
    #allocation0 [shape = 'u8[65536]{0}', space=vmem, size = 0x10000, scoped, tag = 'operand span for operand 0']
    #allocation1 [shape = 'u8[32768]{0}', space=vmem, size = 0x8000, scoped, tag = 'operand span for operand 1']
    %s2 = scalar_lea.vmem [#allocation0], 8
    // Predicated region
    $region2: #{reverse.0} parent=1 // pred_check
      _
    $region3: #{reverse.0} parent=1 // pred_check_branch
      %4 = sbr.rel (0) target = $region5
    $region4: #{reverse.0} parent=1 // pred_region
      // Predicated region
      $region6: #{reverse.0} parent=4 // pred_check
        _
      $region7: #{reverse.0} parent=4 // pred_check_branch
        %6 = sbr.rel (0) target = $region9
      $region8: #{reverse.0} parent=4 // pred_region
        // Predicated region
        $region21: #{reverse.0} parent=8 // pred_check
          _
        $region22: #{reverse.0} parent=8 // pred_check_branch
          %35 = sbr.rel (0) target = $region24
        $region23: #{reverse.0} parent=8 // pred_region
          loop: start=0, step=1, limit=1
          $region25: #{reverse.0} parent=23 // loop_pre_header
            _
          $region26: #{reverse.0} parent=23 // loop_header
            %s37 = sphi 0, %s41
            %p38 = scmp.ge.s32.totalorder %s37, 1
            %s42 = sphi %s0, %s0
            %s43 = sphi %s2, %s2
          $region27: #{reverse.0} parent=23 // loop_header_branch
            %40 = sbr.rel (%p38) target = $region31
          $region28: #{reverse.0} parent=23 // loop_body
            %v44 = vld [vmem:[%s42] sm:$0xff]
            %45 = vst [vmem:[%s43] sm:$0xff] %v44
            %v46 = vld [vmem:[%s42 + $0x8] sm:$0xff]
            %47 = vst [vmem:[%s43 + $0x10] sm:$0xff] %v46
            %v48 = vld [vmem:[%s42 + $0x10] sm:$0xff]
            %49 = vst [vmem:[%s43 + $0x20] sm:$0xff] %v48
            %v50 = vld [vmem:[%s42 + $0x18] sm:$0xff]
            %51 = vst [vmem:[%s43 + $0x30] sm:$0xff] %v50
            %v52 = vld [vmem:[%s42 + $0x20] sm:$0xff]
            %53 = vst [vmem:[%s43 + $0x40] sm:$0xff] %v52
            %v54 = vld [vmem:[%s42 + $0x28] sm:$0xff]
            %55 = vst [vmem:[%s43 + $0x50] sm:$0xff] %v54
            %v56 = vld [vmem:[%s42 + $0x30] sm:$0xff]
            %57 = vst [vmem:[%s43 + $0x60] sm:$0xff] %v56
            %v58 = vld [vmem:[%s42 + $0x38] sm:$0xff]
            %59 = vst [vmem:[%s43 + $0x70] sm:$0xff] %v58
          $region29: #{reverse.0} parent=23 // loop_footer
            %s41 = sadd.s32 1, %s37
          $region30: #{reverse.0} parent=23 // loop_footer_branch
            %36 = sbr.rel target = $region26
          $region31: #{reverse.0} parent=23 // loop_exit
            _
        $region24: #{reverse.0} parent=8 // pred_fallthru
          _
        // Predicated region
        $region32: #{reverse.0} parent=8 // pred_check
          _
        $region33: #{reverse.0} parent=8 // pred_check_branch
          %61 = sbr.rel target = $region35
        $region34: #{reverse.0} parent=8 // pred_region
          _
        $region35: #{reverse.0} parent=8 // pred_fallthru
          _
      $region9: #{reverse.0} parent=4 // pred_fallthru
        _
      // Predicated region
      $region10: #{reverse.0} parent=4 // pred_check
        _
      $region11: #{reverse.0} parent=4 // pred_check_branch
        %8 = sbr.rel target = $region13
      $region12: #{reverse.0} parent=4 // pred_region
        loop: start=0, step=1, limit=1
        $region14: #{reverse.0} parent=12 // loop_pre_header
          _
        $region15: #{reverse.0} parent=12 // loop_header
          %s11 = sphi 0, %s15
          %p12 = scmp.ge.s32.totalorder %s11, 1
          %s16 = sphi %s0, %s0
          %s17 = sphi %s2, %s2
        $region16: #{reverse.0} parent=12 // loop_header_branch
          %14 = sbr.rel (%p12) target = $region20
        $region17: #{reverse.0} parent=12 // loop_body
          %v18 = vld [vmem:[%s16] sm:$0xff]
          %19 = vst [vmem:[%s17] sm:$0xff] %v18
          %v20 = vld [vmem:[%s16 + $0x8] sm:$0xff]
          %21 = vst [vmem:[%s17 + $0x10] sm:$0xff] %v20
          %v22 = vld [vmem:[%s16 + $0x10] sm:$0xff]
          %23 = vst [vmem:[%s17 + $0x20] sm:$0xff] %v22
          %v24 = vld [vmem:[%s16 + $0x18] sm:$0xff]
          %25 = vst [vmem:[%s17 + $0x30] sm:$0xff] %v24
          %v26 = vld [vmem:[%s16 + $0x20] sm:$0xff]
          %27 = vst [vmem:[%s17 + $0x40] sm:$0xff] %v26
          %v28 = vld [vmem:[%s16 + $0x28] sm:$0xff]
          %29 = vst [vmem:[%s17 + $0x50] sm:$0xff] %v28
          %v30 = vld [vmem:[%s16 + $0x30] sm:$0xff]
          %31 = vst [vmem:[%s17 + $0x60] sm:$0xff] %v30
          %v32 = vld [vmem:[%s16 + $0x38] sm:$0xff]
          %33 = vst [vmem:[%s17 + $0x70] sm:$0xff] %v32
        $region18: #{reverse.0} parent=12 // loop_footer
          %s15 = sadd.s32 1, %s11
        $region19: #{reverse.0} parent=12 // loop_footer_branch
          %10 = sbr.rel target = $region15
        $region20: #{reverse.0} parent=12 // loop_exit
          _
      $region13: #{reverse.0} parent=4 // pred_fallthru
        _
    $region5: #{reverse.0} parent=1 // pred_fallthru
      _
    %62 = vnop
    %s63 = scalar_lea.vmem [#allocation0], 7
    %v64 = vld [vmem:[%s63] ss:$-1 sm:$0xff]
    %v65 = vrot.slane %v64, 1
    %66 = vst [vmem:[#allocation1] sm:$0xff] %v65
    %s67 = scalar_lea.vmem [#allocation0], 8
    %s68 = scalar_lea.vmem %s67, 7 [#allocation0]
    %v69 = vld [vmem:[%s68] ss:$-1 sm:$0xff]
    %v70 = vrot.slane %v69, 1
    %v71 = vlaneseq
    %v72 = vshrl.u32 %v71, 7
    %vm73 = vcmp.lt.s32.totalorder %v72, 7
    %74 = vst.msk [vmem:[#allocation1] sm:$0xff] %vm73, %v70
    %s75 = scalar_lea.vmem [#allocation1], 8
    %s76 = scalar_lea.vmem [#allocation0], 16
    %s77 = scalar_lea.vmem %s76, 7 [#allocation0]
    %v78 = vld [vmem:[%s77] ss:$-1 sm:$0xff]
    %v79 = vrot.slane %v78, 1
    %80 = vst [vmem:[%s75] sm:$0xff] %v79
    %s81 = scalar_lea.vmem %s76, 8 [#allocation0]
    %s82 = scalar_lea.vmem %s81, 7 [#allocation0]
    %v83 = vld [vmem:[%s82] ss:$-1 sm:$0xff]
    %v84 = vrot.slane %v83, 1
    %v85 = vlaneseq
    %v86 = vshrl.u32 %v85, 7
    %vm87 = vcmp.lt.s32.totalorder %v86, 7
    %88 = vst.msk [vmem:[%s75] sm:$0xff] %vm87, %v84
    %s89 = scalar_lea.vmem [#allocation1], 16
    %s90 = scalar_lea.vmem [#allocation0], 32
    %s91 = scalar_lea.vmem %s90, 7 [#allocation0]
    %v92 = vld [vmem:[%s91] ss:$-1 sm:$0xff]
    %v93 = vrot.slane %v92, 1
    %94 = vst [vmem:[%s89] sm:$0xff] %v93
    %s95 = scalar_lea.vmem %s90, 8 [#allocation0]
    %s96 = scalar_lea.vmem %s95, 7 [#allocation0]
    %v97 = vld [vmem:[%s96] ss:$-1 sm:$0xff]
    %v98 = vrot.slane %v97, 1
    %v99 = vlaneseq
    %v100 = vshrl.u32 %v99, 7
    %vm101 = vcmp.lt.s32.totalorder %v100, 7
    %102 = vst.msk [vmem:[%s89] sm:$0xff] %vm101, %v98
    %s103 = scalar_lea.vmem [#allocation1], 24
    %s104 = scalar_lea.vmem [#allocation0], 48
    %s105 = scalar_lea.vmem %s104, 7 [#allocation0]
    %v106 = vld [vmem:[%s105] ss:$-1 sm:$0xff]
    %v107 = vrot.slane %v106, 1
    %108 = vst [vmem:[%s103] sm:$0xff] %v107
    %s109 = scalar_lea.vmem %s104, 8 [#allocation0]
    %s110 = scalar_lea.vmem %s109, 7 [#allocation0]
    %v111 = vld [vmem:[%s110] ss:$-1 sm:$0xff]
    %v112 = vrot.slane %v111, 1
    %v113 = vlaneseq
    %v114 = vshrl.u32 %v113, 7
    %vm115 = vcmp.lt.s32.totalorder %v114, 7
    %116 = vst.msk [vmem:[%s103] sm:$0xff] %vm115, %v112
    %s117 = scalar_lea.vmem [#allocation1], 32
    %s118 = scalar_lea.vmem [#allocation0], 64
    %s119 = scalar_lea.vmem %s118, 7 [#allocation0]
    %v120 = vld [vmem:[%s119] ss:$-1 sm:$0xff]
    %v121 = vrot.slane %v120, 1
    %122 = vst [vmem:[%s117] sm:$0xff] %v121
    %s123 = scalar_lea.vmem %s118, 8 [#allocation0]
    %s124 = scalar_lea.vmem %s123, 7 [#allocation0]
    %v125 = vld [vmem:[%s124] ss:$-1 sm:$0xff]
    %v126 = vrot.slane %v125, 1
    %v127 = vlaneseq
    %v128 = vshrl.u32 %v127, 7
    %vm129 = vcmp.lt.s32.totalorder %v128, 7
    %130 = vst.msk [vmem:[%s117] sm:$0xff] %vm129, %v126
    %s131 = scalar_lea.vmem [#allocation1], 40
    %s132 = scalar_lea.vmem [#allocation0], 80
    %s133 = scalar_lea.vmem %s132, 7 [#allocation0]
    %v134 = vld [vmem:[%s133] ss:$-1 sm:$0xff]
    %v135 = vrot.slane %v134, 1
    %136 = vst [vmem:[%s131] sm:$0xff] %v135
    %s137 = scalar_lea.vmem %s132, 8 [#allocation0]
    %s138 = scalar_lea.vmem %s137, 7 [#allocation0]
    %v139 = vld [vmem:[%s138] ss:$-1 sm:$0xff]
    %v140 = vrot.slane %v139, 1
    %v141 = vlaneseq
    %v142 = vshrl.u32 %v141, 7
    %vm143 = vcmp.lt.s32.totalorder %v142, 7
    %144 = vst.msk [vmem:[%s131] sm:$0xff] %vm143, %v140
    %s145 = scalar_lea.vmem [#allocation1], 48
    %s146 = scalar_lea.vmem [#allocation0], 96
    %s147 = scalar_lea.vmem %s146, 7 [#allocation0]
    %v148 = vld [vmem:[%s147] ss:$-1 sm:$0xff]
    %v149 = vrot.slane %v148, 1
    %150 = vst [vmem:[%s145] sm:$0xff] %v149
    %s151 = scalar_lea.vmem %s146, 8 [#allocation0]
    %s152 = scalar_lea.vmem %s151, 7 [#allocation0]
    %v153 = vld [vmem:[%s152] ss:$-1 sm:$0xff]
    %v154 = vrot.slane %v153, 1
    %v155 = vlaneseq
    %v156 = vshrl.u32 %v155, 7
    %vm157 = vcmp.lt.s32.totalorder %v156, 7
    %158 = vst.msk [vmem:[%s145] sm:$0xff] %vm157, %v154
    %s159 = scalar_lea.vmem [#allocation1], 56
    %s160 = scalar_lea.vmem [#allocation0], 112
    %s161 = scalar_lea.vmem %s160, 7 [#allocation0]
    %v162 = vld [vmem:[%s161] ss:$-1 sm:$0xff]
    %v163 = vrot.slane %v162, 1
    %164 = vst [vmem:[%s159] sm:$0xff] %v163
    %s165 = scalar_lea.vmem %s160, 8 [#allocation0]
    %s166 = scalar_lea.vmem %s165, 7 [#allocation0]
    %v167 = vld [vmem:[%s166] ss:$-1 sm:$0xff]
    %v168 = vrot.slane %v167, 1
    %v169 = vlaneseq
    %v170 = vshrl.u32 %v169, 7
    %vm171 = vcmp.lt.s32.totalorder %v170, 7
    %172 = vst.msk [vmem:[%s159] sm:$0xff] %vm171, %v168
    // Predicated region
    $region36: #{reverse.0} parent=1 // pred_check
      _
    $region37: #{reverse.0} parent=1 // pred_check_branch
      %174 = sbr.rel (0) target = $region39
    $region38: #{reverse.0} parent=1 // pred_region
      // Predicated region
      $region40: #{reverse.0} parent=38 // pred_check
        _
      $region41: #{reverse.0} parent=38 // pred_check_branch
        %176 = sbr.rel (0) target = $region43
      $region42: #{reverse.0} parent=38 // pred_region
        // Predicated region
        $region55: #{reverse.0} parent=42 // pred_check
          _
        $region56: #{reverse.0} parent=42 // pred_check_branch
          %205 = sbr.rel (0) target = $region58
        $region57: #{reverse.0} parent=42 // pred_region
          loop: start=0, step=1, limit=1
          $region59: #{reverse.0} parent=57 // loop_pre_header
            _
          $region60: #{reverse.0} parent=57 // loop_header
            %s207 = sphi 0, %s211
            %p208 = scmp.ge.s32.totalorder %s207, 1
            %s212 = sphi [#allocation1], [#allocation1]
            %s213 = sphi %s1, %s1
          $region61: #{reverse.0} parent=57 // loop_header_branch
            %210 = sbr.rel (%p208) target = $region65
          $region62: #{reverse.0} parent=57 // loop_body
            %v214 = vld [vmem:[%s212] sm:$0xff]
            %215 = vst [vmem:[%s213] sm:$0xff] %v214
            %v216 = vld [vmem:[%s212 + $0x8] sm:$0xff]
            %217 = vst [vmem:[%s213 + $0x8] sm:$0xff] %v216
            %v218 = vld [vmem:[%s212 + $0x10] sm:$0xff]
            %219 = vst [vmem:[%s213 + $0x10] sm:$0xff] %v218
            %v220 = vld [vmem:[%s212 + $0x18] sm:$0xff]
            %221 = vst [vmem:[%s213 + $0x18] sm:$0xff] %v220
            %v222 = vld [vmem:[%s212 + $0x20] sm:$0xff]
            %223 = vst [vmem:[%s213 + $0x20] sm:$0xff] %v222
            %v224 = vld [vmem:[%s212 + $0x28] sm:$0xff]
            %225 = vst [vmem:[%s213 + $0x28] sm:$0xff] %v224
            %v226 = vld [vmem:[%s212 + $0x30] sm:$0xff]
            %227 = vst [vmem:[%s213 + $0x30] sm:$0xff] %v226
            %v228 = vld [vmem:[%s212 + $0x38] sm:$0xff]
            %229 = vst [vmem:[%s213 + $0x38] sm:$0xff] %v228
          $region63: #{reverse.0} parent=57 // loop_footer
            %s211 = sadd.s32 1, %s207
          $region64: #{reverse.0} parent=57 // loop_footer_branch
            %206 = sbr.rel target = $region60
          $region65: #{reverse.0} parent=57 // loop_exit
            _
        $region58: #{reverse.0} parent=42 // pred_fallthru
          _
        // Predicated region
        $region66: #{reverse.0} parent=42 // pred_check
          _
        $region67: #{reverse.0} parent=42 // pred_check_branch
          %231 = sbr.rel target = $region69
        $region68: #{reverse.0} parent=42 // pred_region
          _
        $region69: #{reverse.0} parent=42 // pred_fallthru
          _
      $region43: #{reverse.0} parent=38 // pred_fallthru
        _
      // Predicated region
      $region44: #{reverse.0} parent=38 // pred_check
        _
      $region45: #{reverse.0} parent=38 // pred_check_branch
        %178 = sbr.rel target = $region47
      $region46: #{reverse.0} parent=38 // pred_region
        loop: start=0, step=1, limit=1
        $region48: #{reverse.0} parent=46 // loop_pre_header
          _
        $region49: #{reverse.0} parent=46 // loop_header
          %s181 = sphi 0, %s185
          %p182 = scmp.ge.s32.totalorder %s181, 1
          %s186 = sphi [#allocation1], [#allocation1]
          %s187 = sphi %s1, %s1
        $region50: #{reverse.0} parent=46 // loop_header_branch
          %184 = sbr.rel (%p182) target = $region54
        $region51: #{reverse.0} parent=46 // loop_body
          %v188 = vld [vmem:[%s186] sm:$0xff]
          %189 = vst [vmem:[%s187] sm:$0xff] %v188
          %v190 = vld [vmem:[%s186 + $0x8] sm:$0xff]
          %191 = vst [vmem:[%s187 + $0x8] sm:$0xff] %v190
          %v192 = vld [vmem:[%s186 + $0x10] sm:$0xff]
          %193 = vst [vmem:[%s187 + $0x10] sm:$0xff] %v192
          %v194 = vld [vmem:[%s186 + $0x18] sm:$0xff]
          %195 = vst [vmem:[%s187 + $0x18] sm:$0xff] %v194
          %v196 = vld [vmem:[%s186 + $0x20] sm:$0xff]
          %197 = vst [vmem:[%s187 + $0x20] sm:$0xff] %v196
          %v198 = vld [vmem:[%s186 + $0x28] sm:$0xff]
          %199 = vst [vmem:[%s187 + $0x28] sm:$0xff] %v198
          %v200 = vld [vmem:[%s186 + $0x30] sm:$0xff]
          %201 = vst [vmem:[%s187 + $0x30] sm:$0xff] %v200
          %v202 = vld [vmem:[%s186 + $0x38] sm:$0xff]
          %203 = vst [vmem:[%s187 + $0x38] sm:$0xff] %v202
        $region52: #{reverse.0} parent=46 // loop_footer
          %s185 = sadd.s32 1, %s181
        $region53: #{reverse.0} parent=46 // loop_footer_branch
          %180 = sbr.rel target = $region49
        $region54: #{reverse.0} parent=46 // loop_exit
          _
      $region47: #{reverse.0} parent=38 // pred_fallthru
        _
    $region39: #{reverse.0} parent=1 // pred_fallthru
      _
    %232 = vnop

// kernel: ab_mffe_forward.4
$region0: #{ab_mffe_forward.4}
  #allocation0 [shape = 'u32[]', space=smem, size = 0x4, offset = 0x4, fixed_abs, tag = 'smem constant byte address 0x4 - core index']
  #allocation1 [shape = 'u32[144,128]{1,0:T(1,128)}', space=vmem, size = 0x12000, scoped, tag = 'internal scratch']
  %s0 = inlined_call_operand.vmem [shape: f32[4,384], index: 0, kind: input, shape index: {}]
  %s1 = inlined_call_operand.vmem [shape: f32[4,384], index: 1, kind: input, shape index: {}]
  %s2 = inlined_call_operand.vmem [shape: f32[4,4], index: 2, kind: input, shape index: {}]
  %s3 = inlined_call_operand.vmem [shape: f32[4,1], index: 3, kind: input, shape index: {}]
  %s4 = inlined_call_operand.vmem [shape: f32[4,4], index: 4, kind: input, shape index: {}]
  %s5 = inlined_call_operand.vmem [shape: f32[4,1], index: 5, kind: input, shape index: {}]
  %s6 = inlined_call_operand.vmem [shape: f32[4,4], index: 6, kind: input, shape index: {}]
  %s7 = inlined_call_operand.vmem [shape: f32[4,1], index: 7, kind: input, shape index: {}]
  %s8 = inlined_call_operand.vmem [shape: f32[4,4], index: 8, kind: input, shape index: {}]
  %s9 = inlined_call_operand.vmem [shape: f32[4,1], index: 9, kind: input, shape index: {}]
  %s10 = inlined_call_operand.vmem [shape: f32[4,384], index: 10, kind: output, shape index: {0}]
  %s11 = inlined_call_operand.vmem [shape: f32[4,384], index: 11, kind: output, shape index: {1}]
  %12 = xla_tuple %s10, %s11
  %s13 = sld [smem:[#allocation0]]
  $region58: #{ab_mffe_forward.4} parent=0
    _
  %s15 = ssub.s32 1, %s13
  %s16 = scalar_select 0, %s15, %s13
  // Predicated region
  $region2: #{ab_mffe_forward.4} parent=0 // pred_check
    _
  $region3: #{ab_mffe_forward.4} parent=0 // pred_check_branch
    %18 = sbr.rel (0) target = $region5
  $region4: #{ab_mffe_forward.4} parent=0 // pred_region
    _
  $region5: #{ab_mffe_forward.4} parent=0 // pred_fallthru
    _
  // Predicated region
  $region6: #{ab_mffe_forward.4} parent=0 // pred_check
    _
  $region7: #{ab_mffe_forward.4} parent=0 // pred_check_branch
    %20 = sbr.rel (0) target = $region9
  $region8: #{ab_mffe_forward.4} parent=0 // pred_region
    _
  $region9: #{ab_mffe_forward.4} parent=0 // pred_fallthru
    _
  // Predicated region
  $region10: #{ab_mffe_forward.4} parent=0 // pred_check
    _
  $region11: #{ab_mffe_forward.4} parent=0 // pred_check_branch
    %22 = sbr.rel (0) target = $region13
  $region12: #{ab_mffe_forward.4} parent=0 // pred_region
    _
  $region13: #{ab_mffe_forward.4} parent=0 // pred_fallthru
    _
  // Predicated region
  $region14: #{ab_mffe_forward.4} parent=0 // pred_check
    _
  $region15: #{ab_mffe_forward.4} parent=0 // pred_check_branch
    %24 = sbr.rel (0) target = $region17
  $region16: #{ab_mffe_forward.4} parent=0 // pred_region
    _
  $region17: #{ab_mffe_forward.4} parent=0 // pred_fallthru
    _
  // Predicated region
  $region18: #{ab_mffe_forward.4} parent=0 // pred_check
    _
  $region19: #{ab_mffe_forward.4} parent=0 // pred_check_branch
    %26 = sbr.rel (0) target = $region21
  $region20: #{ab_mffe_forward.4} parent=0 // pred_region
    _
  $region21: #{ab_mffe_forward.4} parent=0 // pred_fallthru
    _
  // Predicated region
  $region22: #{ab_mffe_forward.4} parent=0 // pred_check
    _
  $region23: #{ab_mffe_forward.4} parent=0 // pred_check_branch
    %28 = sbr.rel (0) target = $region25
  $region24: #{ab_mffe_forward.4} parent=0 // pred_region
    _
  $region25: #{ab_mffe_forward.4} parent=0 // pred_fallthru
    _
  // Predicated region
  $region26: #{ab_mffe_forward.4} parent=0 // pred_check
    _
  $region27: #{ab_mffe_forward.4} parent=0 // pred_check_branch
    %30 = sbr.rel (0) target = $region29
  $region28: #{ab_mffe_forward.4} parent=0 // pred_region
    _
  $region29: #{ab_mffe_forward.4} parent=0 // pred_fallthru
    _
  // Predicated region
  $region30: #{ab_mffe_forward.4} parent=0 // pred_check
    _
  $region31: #{ab_mffe_forward.4} parent=0 // pred_check_branch
    %32 = sbr.rel (0) target = $region33
  $region32: #{ab_mffe_forward.4} parent=0 // pred_region
    _
  $region33: #{ab_mffe_forward.4} parent=0 // pred_fallthru
    _
  // Predicated region
  $region34: #{ab_mffe_forward.4} parent=0 // pred_check
    _
  $region35: #{ab_mffe_forward.4} parent=0 // pred_check_branch
    %34 = sbr.rel (0) target = $region37
  $region36: #{ab_mffe_forward.4} parent=0 // pred_region
    _
  $region37: #{ab_mffe_forward.4} parent=0 // pred_fallthru
    _
  // Predicated region
  $region38: #{ab_mffe_forward.4} parent=0 // pred_check
    _
  $region39: #{ab_mffe_forward.4} parent=0 // pred_check_branch
    %36 = sbr.rel (0) target = $region41
  $region40: #{ab_mffe_forward.4} parent=0 // pred_region
    _
  $region41: #{ab_mffe_forward.4} parent=0 // pred_fallthru
    _
  %v37 = vld [vmem:[%s0] sm:$0xff]
  %v38 = vld [vmem:[%s0 + $0x8] sm:$0xf]
  %v39 = vld [vmem:[%s2] sm:$0xf]
  %v40 = vld [vmem:[%s3] sm:$0xf]
  %42 = vset.pattern.permute.xlu0 0
  %43 = vperm.xlu0 %42, %v40
  %v44 = vpop.permute.xlu0 %43
  %v48 = vcombine.high %v37, %v37
  %vm49 = vcmask 31744
  %v51 = vsel %vm49, %v39, 0
  %vm53 = vcmask 1043456
  %v54 = vsel %vm53, %v37, 0
  %v56 = vsel %vm53, %v48, 0
  %v58 = vsel %vm53, %v38, 0
  %60 = vmatprep.subr.mxu0 %v56
  %61 = vmatpush1.msra.mxu0 %v54
  %62 = vmatprep.subr.mxu0 0.0
  %63 = vmatpush1.msra.mxu0 0.0
  %64 = vmatprep.subr.mxu0 0.0
  %65 = vmatpush1.msra.mxu0 0.0
  %66 = vmatprep.subr.mxu0 0.0
  %67 = vmatpush1.msra.mxu0 0.0
  %68 = vmatprep.subr.mxu0 0.0
  %69 = vmatpush1.msra.mxu0 0.0
  %70 = vmatprep.subr.mxu0 0.0
  %71 = vmatpush1.msra.mxu0 0.0
  %72 = vmatprep.subr.mxu0 0.0
  %73 = vmatpush1.msra.mxu0 0.0
  %74 = vmatprep.subr.mxu0 0.0
  %75 = vmatpush1.msra.mxu0 0.0
  %76 = vmatprep.subr.mxu0 0.0
  %77 = vmatpush1.msra.mxu0 0.0
  %78 = vmatprep.subr.mxu0 0.0
  %79 = vmatpush1.msra.mxu0 0.0
  %80 = vmatprep.subr.mxu0 0.0
  %81 = vmatpush1.msra.mxu0 0.0
  %82 = vmatprep.subr.mxu0 0.0
  %83 = vmatpush1.msra.mxu0 0.0
  %84 = vmatprep.subr.mxu0 0.0
  %85 = vmatpush1.msra.mxu0 0.0
  %86 = vmatprep.subr.mxu0 0.0
  %87 = vmatpush1.msra.mxu0 0.0
  %88 = vmatprep.subr.mxu0 0.0
  %89 = vmatpush1.msra.mxu0 0.0
  %90 = vmatprep.subr.mxu0 0.0
  %91 = vmatpush1.msra.mxu0 0.0
  %92 = vmatprep.subr.mxu0 0.0
  %93 = vmatpush1.msra.mxu0 0.0
  %94 = vmatprep.subr.mxu0 0.0
  %95 = vmatpush1.msra.mxu0 0.0
  %96 = vmatprep.subr.mxu0 0.0
  %97 = vmatpush1.msra.mxu0 0.0
  %98 = vmatprep.subr.mxu0 0.0
  %99 = vmatpush1.msra.mxu0 0.0
  %100 = vmatprep.subr.mxu0 0.0
  %101 = vmatpush1.msra.mxu0 0.0
  %102 = vmatprep.subr.mxu0 0.0
  %103 = vmatpush1.msra.mxu0 0.0
  %104 = vmatprep.subr.mxu0 0.0
  %105 = vmatpush1.msra.mxu0 0.0
  %106 = vmatprep.subr.mxu0 0.0
  %107 = vmatpush1.msra.mxu0 0.0
  %108 = vmatprep.subr.mxu0 0.0
  %109 = vmatpush1.msra.mxu0 0.0
  %110 = vmatprep.subr.mxu0 0.0
  %111 = vmatpush1.msra.mxu0 0.0
  %112 = vmatprep.subr.mxu0 0.0
  %113 = vmatpush1.msra.mxu0 0.0
  %114 = vmatprep.subr.mxu0 0.0
  %115 = vmatpush1.msra.mxu0 0.0
  %116 = vmatprep.subr.mxu0 0.0
  %117 = vmatpush1.msra.mxu0 0.0
  %118 = vmatprep.subr.mxu0 0.0
  %119 = vmatpush1.msra.mxu0 0.0
  %120 = vmatprep.subr.mxu0 0.0
  %121 = vmatpush1.msra.mxu0 0.0
  %122 = vmatprep.subr.mxu0 0.0
  %123 = vmatpush1.msra.mxu0 0.0
  %124 = vmatprep.mubr.f32.mxu0 0.0
  %125 = vmatmul.mubr.f32.gmra.mrb[0].mxu0 %v51
  %v126 = vpop.f32.mrb[0].mxu0
  %v127 = vadd.f32 %v44, %v126
  %v128 = vpop.f32.mrb[0].mxu0
  %v129 = vadd.f32 %v44, %v128
  %130 = vdwg.mxu0
  %131 = vmatprep.subr.mxu0 0.0
  %132 = vmatpush1.msra.mxu0 %v58
  %133 = vmatprep.subr.mxu0 0.0
  %134 = vmatpush1.msra.mxu0 0.0
  %135 = vmatprep.subr.mxu0 0.0
  %136 = vmatpush1.msra.mxu0 0.0
  %137 = vmatprep.subr.mxu0 0.0
  %138 = vmatpush1.msra.mxu0 0.0
  %139 = vmatprep.subr.mxu0 0.0
  %140 = vmatpush1.msra.mxu0 0.0
  %141 = vmatprep.subr.mxu0 0.0
  %142 = vmatpush1.msra.mxu0 0.0
  %143 = vmatprep.subr.mxu0 0.0
  %144 = vmatpush1.msra.mxu0 0.0
  %145 = vmatprep.subr.mxu0 0.0
  %146 = vmatpush1.msra.mxu0 0.0
  %147 = vmatprep.subr.mxu0 0.0
  %148 = vmatpush1.msra.mxu0 0.0
  %149 = vmatprep.subr.mxu0 0.0
  %150 = vmatpush1.msra.mxu0 0.0
  %151 = vmatprep.subr.mxu0 0.0
  %152 = vmatpush1.msra.mxu0 0.0
  %153 = vmatprep.subr.mxu0 0.0
  %154 = vmatpush1.msra.mxu0 0.0
  %155 = vmatprep.subr.mxu0 0.0
  %156 = vmatpush1.msra.mxu0 0.0
  %157 = vmatprep.subr.mxu0 0.0
  %158 = vmatpush1.msra.mxu0 0.0
  %159 = vmatprep.subr.mxu0 0.0
  %160 = vmatpush1.msra.mxu0 0.0
  %161 = vmatprep.subr.mxu0 0.0
  %162 = vmatpush1.msra.mxu0 0.0
  %163 = vmatprep.subr.mxu0 0.0
  %164 = vmatpush1.msra.mxu0 0.0
  %165 = vmatprep.subr.mxu0 0.0
  %166 = vmatpush1.msra.mxu0 0.0
  %167 = vmatprep.subr.mxu0 0.0
  %168 = vmatpush1.msra.mxu0 0.0
  %169 = vmatprep.subr.mxu0 0.0
  %170 = vmatpush1.msra.mxu0 0.0
  %171 = vmatprep.subr.mxu0 0.0
  %172 = vmatpush1.msra.mxu0 0.0
  %173 = vmatprep.subr.mxu0 0.0
  %174 = vmatpush1.msra.mxu0 0.0
  %175 = vmatprep.subr.mxu0 0.0
  %176 = vmatpush1.msra.mxu0 0.0
  %177 = vmatprep.subr.mxu0 0.0
  %178 = vmatpush1.msra.mxu0 0.0
  %179 = vmatprep.subr.mxu0 0.0
  %180 = vmatpush1.msra.mxu0 0.0
  %181 = vmatprep.subr.mxu0 0.0
  %182 = vmatpush1.msra.mxu0 0.0
  %183 = vmatprep.subr.mxu0 0.0
  %184 = vmatpush1.msra.mxu0 0.0
  %185 = vmatprep.subr.mxu0 0.0
  %186 = vmatpush1.msra.mxu0 0.0
  %187 = vmatprep.subr.mxu0 0.0
  %188 = vmatpush1.msra.mxu0 0.0
  %189 = vmatprep.subr.mxu0 0.0
  %190 = vmatpush1.msra.mxu0 0.0
  %191 = vmatprep.subr.mxu0 0.0
  %192 = vmatpush1.msra.mxu0 0.0
  %193 = vmatprep.subr.mxu0 0.0
  %194 = vmatpush1.msra.mxu0 0.0
  %195 = vmatprep.mubr.f32.mxu0 0.0
  %196 = vmatmul.mubr.f32.gmra.mrb[0].mxu0 %v51
  %v197 = vpop.f32.mrb[0].mxu0
  %v198 = vadd.f32 %v44, %v197
  %v199 = vpop.f32.mrb[0].mxu0
  %200 = vdwg.mxu0
  %vm201 = vcmp.ge.f32.partialorder %v127, 0.0
  %vm202 = vcmp.ge.f32.partialorder %v129, 0.0
  %vm203 = vcmp.ge.f32.partialorder %v198, 0.0
  %v204 = vmul.f32 %v127, 0.1
  %v205 = vmul.f32 %v129, 0.1
  %v206 = vmul.f32 %v198, 0.1
  %v207 = vsel %vm201, %v127, %v204
  %v208 = vsel %vm202, %v129, %v205
  %v209 = vsel %vm203, %v198, %v206
  %v210 = vld [vmem:[%s4] sm:$0xf]
  %v211 = vld [vmem:[%s5] sm:$0xf]
  %213 = vset.pattern.permute.xlu0 0
  %214 = vperm.xlu0 %213, %v211
  %v215 = vpop.permute.xlu0 %214
  %v218 = vsel %vm49, %v210, 0
  %v221 = vsel %vm53, %v207, 0
  %v224 = vsel %vm53, %v208, 0
  %v227 = vsel %vm53, %v209, 0
  %229 = vmatprep.subr.mxu0 %v224
  %230 = vmatpush1.msra.mxu0 %v221
  %231 = vmatprep.subr.mxu0 0.0
  %232 = vmatpush1.msra.mxu0 0.0
  %233 = vmatprep.subr.mxu0 0.0
  %234 = vmatpush1.msra.mxu0 0.0
  %235 = vmatprep.subr.mxu0 0.0
  %236 = vmatpush1.msra.mxu0 0.0
  %237 = vmatprep.subr.mxu0 0.0
  %238 = vmatpush1.msra.mxu0 0.0
  %239 = vmatprep.subr.mxu0 0.0
  %240 = vmatpush1.msra.mxu0 0.0
  %241 = vmatprep.subr.mxu0 0.0
  %242 = vmatpush1.msra.mxu0 0.0
  %243 = vmatprep.subr.mxu0 0.0
  %244 = vmatpush1.msra.mxu0 0.0
  %245 = vmatprep.subr.mxu0 0.0
  %246 = vmatpush1.msra.mxu0 0.0
  %247 = vmatprep.subr.mxu0 0.0
  %248 = vmatpush1.msra.mxu0 0.0
  %249 = vmatprep.subr.mxu0 0.0
  %250 = vmatpush1.msra.mxu0 0.0
  %251 = vmatprep.subr.mxu0 0.0
  %252 = vmatpush1.msra.mxu0 0.0
  %253 = vmatprep.subr.mxu0 0.0
  %254 = vmatpush1.msra.mxu0 0.0
  %255 = vmatprep.subr.mxu0 0.0
  %256 = vmatpush1.msra.mxu0 0.0
  %257 = vmatprep.subr.mxu0 0.0
  %258 = vmatpush1.msra.mxu0 0.0
  %259 = vmatprep.subr.mxu0 0.0
  %260 = vmatpush1.msra.mxu0 0.0
  %261 = vmatprep.subr.mxu0 0.0
  %262 = vmatpush1.msra.mxu0 0.0
  %263 = vmatprep.subr.mxu0 0.0
  %264 = vmatpush1.msra.mxu0 0.0
  %265 = vmatprep.subr.mxu0 0.0
  %266 = vmatpush1.msra.mxu0 0.0
  %267 = vmatprep.subr.mxu0 0.0
  %268 = vmatpush1.msra.mxu0 0.0
  %269 = vmatprep.subr.mxu0 0.0
  %270 = vmatpush1.msra.mxu0 0.0
  %271 = vmatprep.subr.mxu0 0.0
  %272 = vmatpush1.msra.mxu0 0.0
  %273 = vmatprep.subr.mxu0 0.0
  %274 = vmatpush1.msra.mxu0 0.0
  %275 = vmatprep.subr.mxu0 0.0
  %276 = vmatpush1.msra.mxu0 0.0
  %277 = vmatprep.subr.mxu0 0.0
  %278 = vmatpush1.msra.mxu0 0.0
  %279 = vmatprep.subr.mxu0 0.0
  %280 = vmatpush1.msra.mxu0 0.0
  %281 = vmatprep.subr.mxu0 0.0
  %282 = vmatpush1.msra.mxu0 0.0
  %283 = vmatprep.subr.mxu0 0.0
  %284 = vmatpush1.msra.mxu0 0.0
  %285 = vmatprep.subr.mxu0 0.0
  %286 = vmatpush1.msra.mxu0 0.0
  %287 = vmatprep.subr.mxu0 0.0
  %288 = vmatpush1.msra.mxu0 0.0
  %289 = vmatprep.subr.mxu0 0.0
  %290 = vmatpush1.msra.mxu0 0.0
  %291 = vmatprep.subr.mxu0 0.0
  %292 = vmatpush1.msra.mxu0 0.0
  %293 = vmatprep.mubr.f32.mxu0 0.0
  %294 = vmatmul.mubr.f32.gmra.mrb[0].mxu0 %v218
  %v295 = vpop.f32.mrb[0].mxu0
  %v296 = vadd.f32 %v215, %v295
  %v297 = vpop.f32.mrb[0].mxu0
  %v298 = vadd.f32 %v215, %v297
  %299 = vdwg.mxu0
  %300 = vmatprep.subr.mxu0 0.0
  %301 = vmatpush1.msra.mxu0 %v227
  %302 = vmatprep.subr.mxu0 0.0
  %303 = vmatpush1.msra.mxu0 0.0
  %304 = vmatprep.subr.mxu0 0.0
  %305 = vmatpush1.msra.mxu0 0.0
  %306 = vmatprep.subr.mxu0 0.0
  %307 = vmatpush1.msra.mxu0 0.0
  %308 = vmatprep.subr.mxu0 0.0
  %309 = vmatpush1.msra.mxu0 0.0
  %310 = vmatprep.subr.mxu0 0.0
  %311 = vmatpush1.msra.mxu0 0.0
  %312 = vmatprep.subr.mxu0 0.0
  %313 = vmatpush1.msra.mxu0 0.0
  %314 = vmatprep.subr.mxu0 0.0
  %315 = vmatpush1.msra.mxu0 0.0
  %316 = vmatprep.subr.mxu0 0.0
  %317 = vmatpush1.msra.mxu0 0.0
  %318 = vmatprep.subr.mxu0 0.0
  %319 = vmatpush1.msra.mxu0 0.0
  %320 = vmatprep.subr.mxu0 0.0
  %321 = vmatpush1.msra.mxu0 0.0
  %322 = vmatprep.subr.mxu0 0.0
  %323 = vmatpush1.msra.mxu0 0.0
  %324 = vmatprep.subr.mxu0 0.0
  %325 = vmatpush1.msra.mxu0 0.0
  %326 = vmatprep.subr.mxu0 0.0
  %327 = vmatpush1.msra.mxu0 0.0
  %328 = vmatprep.subr.mxu0 0.0
  %329 = vmatpush1.msra.mxu0 0.0
  %330 = vmatprep.subr.mxu0 0.0
  %331 = vmatpush1.msra.mxu0 0.0
  %332 = vmatprep.subr.mxu0 0.0
  %333 = vmatpush1.msra.mxu0 0.0
  %334 = vmatprep.subr.mxu0 0.0
  %335 = vmatpush1.msra.mxu0 0.0
  %336 = vmatprep.subr.mxu0 0.0
  %337 = vmatpush1.msra.mxu0 0.0
  %338 = vmatprep.subr.mxu0 0.0
  %339 = vmatpush1.msra.mxu0 0.0
  %340 = vmatprep.subr.mxu0 0.0
  %341 = vmatpush1.msra.mxu0 0.0
  %342 = vmatprep.subr.mxu0 0.0
  %343 = vmatpush1.msra.mxu0 0.0
  %344 = vmatprep.subr.mxu0 0.0
  %345 = vmatpush1.msra.mxu0 0.0
  %346 = vmatprep.subr.mxu0 0.0
  %347 = vmatpush1.msra.mxu0 0.0
  %348 = vmatprep.subr.mxu0 0.0
  %349 = vmatpush1.msra.mxu0 0.0
  %350 = vmatprep.subr.mxu0 0.0
  %351 = vmatpush1.msra.mxu0 0.0
  %352 = vmatprep.subr.mxu0 0.0
  %353 = vmatpush1.msra.mxu0 0.0
  %354 = vmatprep.subr.mxu0 0.0
  %355 = vmatpush1.msra.mxu0 0.0
  %356 = vmatprep.subr.mxu0 0.0
  %357 = vmatpush1.msra.mxu0 0.0
  %358 = vmatprep.subr.mxu0 0.0
  %359 = vmatpush1.msra.mxu0 0.0
  %360 = vmatprep.subr.mxu0 0.0
  %361 = vmatpush1.msra.mxu0 0.0
  %362 = vmatprep.subr.mxu0 0.0
  %363 = vmatpush1.msra.mxu0 0.0
  %364 = vmatprep.mubr.f32.mxu0 0.0
  %365 = vmatmul.mubr.f32.gmra.mrb[0].mxu0 %v218
  %v366 = vpop.f32.mrb[0].mxu0
  %v367 = vadd.f32 %v215, %v366
  %v368 = vpop.f32.mrb[0].mxu0
  %369 = vdwg.mxu0
  %v370 = vld [vmem:[%s1] sm:$0xff]
  %v371 = vld [vmem:[%s1 + $0x8] sm:$0xf]
  %v372 = vld [vmem:[%s6] sm:$0xf]
  %v373 = vld [vmem:[%s7] sm:$0xf]
  %375 = vset.pattern.permute.xlu0 0
  %376 = vperm.xlu0 %375, %v373
  %v377 = vpop.permute.xlu0 %376
  %v381 = vcombine.high %v370, %v370
  %v383 = vsel %vm49, %v372, 0
  %v385 = vsel %vm53, %v370, 0
  %v387 = vsel %vm53, %v381, 0
  %v389 = vsel %vm53, %v371, 0
  %391 = vmatprep.subr.mxu0 %v387
  %392 = vmatpush1.msra.mxu0 %v385
  %393 = vmatprep.subr.mxu0 0.0
  %394 = vmatpush1.msra.mxu0 0.0
  %395 = vmatprep.subr.mxu0 0.0
  %396 = vmatpush1.msra.mxu0 0.0
  %397 = vmatprep.subr.mxu0 0.0
  %398 = vmatpush1.msra.mxu0 0.0
  %399 = vmatprep.subr.mxu0 0.0
  %400 = vmatpush1.msra.mxu0 0.0
  %401 = vmatprep.subr.mxu0 0.0
  %402 = vmatpush1.msra.mxu0 0.0
  %403 = vmatprep.subr.mxu0 0.0
  %404 = vmatpush1.msra.mxu0 0.0
  %405 = vmatprep.subr.mxu0 0.0
  %406 = vmatpush1.msra.mxu0 0.0
  %407 = vmatprep.subr.mxu0 0.0
  %408 = vmatpush1.msra.mxu0 0.0
  %409 = vmatprep.subr.mxu0 0.0
  %410 = vmatpush1.msra.mxu0 0.0
  %411 = vmatprep.subr.mxu0 0.0
  %412 = vmatpush1.msra.mxu0 0.0
  %413 = vmatprep.subr.mxu0 0.0
  %414 = vmatpush1.msra.mxu0 0.0
  %415 = vmatprep.subr.mxu0 0.0
  %416 = vmatpush1.msra.mxu0 0.0
  %417 = vmatprep.subr.mxu0 0.0
  %418 = vmatpush1.msra.mxu0 0.0
  %419 = vmatprep.subr.mxu0 0.0
  %420 = vmatpush1.msra.mxu0 0.0
  %421 = vmatprep.subr.mxu0 0.0
  %422 = vmatpush1.msra.mxu0 0.0
  %423 = vmatprep.subr.mxu0 0.0
  %424 = vmatpush1.msra.mxu0 0.0
  %425 = vmatprep.subr.mxu0 0.0
  %426 = vmatpush1.msra.mxu0 0.0
  %427 = vmatprep.subr.mxu0 0.0
  %428 = vmatpush1.msra.mxu0 0.0
  %429 = vmatprep.subr.mxu0 0.0
  %430 = vmatpush1.msra.mxu0 0.0
  %431 = vmatprep.subr.mxu0 0.0
  %432 = vmatpush1.msra.mxu0 0.0
  %433 = vmatprep.subr.mxu0 0.0
  %434 = vmatpush1.msra.mxu0 0.0
  %435 = vmatprep.subr.mxu0 0.0
  %436 = vmatpush1.msra.mxu0 0.0
  %437 = vmatprep.subr.mxu0 0.0
  %438 = vmatpush1.msra.mxu0 0.0
  %439 = vmatprep.subr.mxu0 0.0
  %440 = vmatpush1.msra.mxu0 0.0
  %441 = vmatprep.subr.mxu0 0.0
  %442 = vmatpush1.msra.mxu0 0.0
  %443 = vmatprep.subr.mxu0 0.0
  %444 = vmatpush1.msra.mxu0 0.0
  %445 = vmatprep.subr.mxu0 0.0
  %446 = vmatpush1.msra.mxu0 0.0
  %447 = vmatprep.subr.mxu0 0.0
  %448 = vmatpush1.msra.mxu0 0.0
  %449 = vmatprep.subr.mxu0 0.0
  %450 = vmatpush1.msra.mxu0 0.0
  %451 = vmatprep.subr.mxu0 0.0
  %452 = vmatpush1.msra.mxu0 0.0
  %453 = vmatprep.subr.mxu0 0.0
  %454 = vmatpush1.msra.mxu0 0.0
  %455 = vmatprep.mubr.f32.mxu0 0.0
  %456 = vmatmul.mubr.f32.gmra.mrb[0].mxu0 %v383
  %v457 = vpop.f32.mrb[0].mxu0
  %v458 = vadd.f32 %v377, %v457
  %v459 = vpop.f32.mrb[0].mxu0
  %v460 = vadd.f32 %v377, %v459
  %461 = vdwg.mxu0
  %462 = vmatprep.subr.mxu0 0.0
  %463 = vmatpush1.msra.mxu0 %v389
  %464 = vmatprep.subr.mxu0 0.0
  %465 = vmatpush1.msra.mxu0 0.0
  %466 = vmatprep.subr.mxu0 0.0
  %467 = vmatpush1.msra.mxu0 0.0
  %468 = vmatprep.subr.mxu0 0.0
  %469 = vmatpush1.msra.mxu0 0.0
  %470 = vmatprep.subr.mxu0 0.0
  %471 = vmatpush1.msra.mxu0 0.0
  %472 = vmatprep.subr.mxu0 0.0
  %473 = vmatpush1.msra.mxu0 0.0
  %474 = vmatprep.subr.mxu0 0.0
  %475 = vmatpush1.msra.mxu0 0.0
  %476 = vmatprep.subr.mxu0 0.0
  %477 = vmatpush1.msra.mxu0 0.0
  %478 = vmatprep.subr.mxu0 0.0
  %479 = vmatpush1.msra.mxu0 0.0
  %480 = vmatprep.subr.mxu0 0.0
  %481 = vmatpush1.msra.mxu0 0.0
  %482 = vmatprep.subr.mxu0 0.0
  %483 = vmatpush1.msra.mxu0 0.0
  %484 = vmatprep.subr.mxu0 0.0
  %485 = vmatpush1.msra.mxu0 0.0
  %486 = vmatprep.subr.mxu0 0.0
  %487 = vmatpush1.msra.mxu0 0.0
  %488 = vmatprep.subr.mxu0 0.0
  %489 = vmatpush1.msra.mxu0 0.0
  %490 = vmatprep.subr.mxu0 0.0
  %491 = vmatpush1.msra.mxu0 0.0
  %492 = vmatprep.subr.mxu0 0.0
  %493 = vmatpush1.msra.mxu0 0.0
  %494 = vmatprep.subr.mxu0 0.0
  %495 = vmatpush1.msra.mxu0 0.0
  %496 = vmatprep.subr.mxu0 0.0
  %497 = vmatpush1.msra.mxu0 0.0
  %498 = vmatprep.subr.mxu0 0.0
  %499 = vmatpush1.msra.mxu0 0.0
  %500 = vmatprep.subr.mxu0 0.0
  %501 = vmatpush1.msra.mxu0 0.0
  %502 = vmatprep.subr.mxu0 0.0
  %503 = vmatpush1.msra.mxu0 0.0
  %504 = vmatprep.subr.mxu0 0.0
  %505 = vmatpush1.msra.mxu0 0.0
  %506 = vmatprep.subr.mxu0 0.0
  %507 = vmatpush1.msra.mxu0 0.0
  %508 = vmatprep.subr.mxu0 0.0
  %509 = vmatpush1.msra.mxu0 0.0
  %510 = vmatprep.subr.mxu0 0.0
  %511 = vmatpush1.msra.mxu0 0.0
  %512 = vmatprep.subr.mxu0 0.0
  %513 = vmatpush1.msra.mxu0 0.0
  %514 = vmatprep.subr.mxu0 0.0
  %515 = vmatpush1.msra.mxu0 0.0
  %516 = vmatprep.subr.mxu0 0.0
  %517 = vmatpush1.msra.mxu0 0.0
  %518 = vmatprep.subr.mxu0 0.0
  %519 = vmatpush1.msra.mxu0 0.0
  %520 = vmatprep.subr.mxu0 0.0
  %521 = vmatpush1.msra.mxu0 0.0
  %522 = vmatprep.subr.mxu0 0.0
  %523 = vmatpush1.msra.mxu0 0.0
  %524 = vmatprep.subr.mxu0 0.0
  %525 = vmatpush1.msra.mxu0 0.0
  %526 = vmatprep.mubr.f32.mxu0 0.0
  %527 = vmatmul.mubr.f32.gmra.mrb[0].mxu0 %v383
  %v528 = vpop.f32.mrb[0].mxu0
  %v529 = vadd.f32 %v377, %v528
  %v530 = vpop.f32.mrb[0].mxu0
  %531 = vdwg.mxu0
  %vm532 = vcmp.ge.f32.partialorder %v458, 0.0
  %vm533 = vcmp.ge.f32.partialorder %v460, 0.0
  %vm534 = vcmp.ge.f32.partialorder %v529, 0.0
  %v535 = vmul.f32 %v458, 0.1
  %v536 = vmul.f32 %v460, 0.1
  %v537 = vmul.f32 %v529, 0.1
  %v538 = vsel %vm532, %v458, %v535
  %v539 = vsel %vm533, %v460, %v536
  %v540 = vsel %vm534, %v529, %v537
  %v541 = vld [vmem:[%s8] sm:$0xf]
  %v542 = vld [vmem:[%s9] sm:$0xf]
  %544 = vset.pattern.permute.xlu0 0
  %545 = vperm.xlu0 %544, %v542
  %v546 = vpop.permute.xlu0 %545
  %v549 = vsel %vm49, %v541, 0
  %v552 = vsel %vm53, %v538, 0
  %v555 = vsel %vm53, %v539, 0
  %v558 = vsel %vm53, %v540, 0
  %560 = vmatprep.subr.mxu0 %v555
  %561 = vmatpush1.msra.mxu0 %v552
  %562 = vmatprep.subr.mxu0 0.0
  %563 = vmatpush1.msra.mxu0 0.0
  %564 = vmatprep.subr.mxu0 0.0
  %565 = vmatpush1.msra.mxu0 0.0
  %566 = vmatprep.subr.mxu0 0.0
  %567 = vmatpush1.msra.mxu0 0.0
  %568 = vmatprep.subr.mxu0 0.0
  %569 = vmatpush1.msra.mxu0 0.0
  %570 = vmatprep.subr.mxu0 0.0
  %571 = vmatpush1.msra.mxu0 0.0
  %572 = vmatprep.subr.mxu0 0.0
  %573 = vmatpush1.msra.mxu0 0.0
  %574 = vmatprep.subr.mxu0 0.0
  %575 = vmatpush1.msra.mxu0 0.0
  %576 = vmatprep.subr.mxu0 0.0
  %577 = vmatpush1.msra.mxu0 0.0
  %578 = vmatprep.subr.mxu0 0.0
  %579 = vmatpush1.msra.mxu0 0.0
  %580 = vmatprep.subr.mxu0 0.0
  %581 = vmatpush1.msra.mxu0 0.0
  %582 = vmatprep.subr.mxu0 0.0
  %583 = vmatpush1.msra.mxu0 0.0
  %584 = vmatprep.subr.mxu0 0.0
  %585 = vmatpush1.msra.mxu0 0.0
  %586 = vmatprep.subr.mxu0 0.0
  %587 = vmatpush1.msra.mxu0 0.0
  %588 = vmatprep.subr.mxu0 0.0
  %589 = vmatpush1.msra.mxu0 0.0
  %590 = vmatprep.subr.mxu0 0.0
  %591 = vmatpush1.msra.mxu0 0.0
  %592 = vmatprep.subr.mxu0 0.0
  %593 = vmatpush1.msra.mxu0 0.0
  %594 = vmatprep.subr.mxu0 0.0
  %595 = vmatpush1.msra.mxu0 0.0
  %596 = vmatprep.subr.mxu0 0.0
  %597 = vmatpush1.msra.mxu0 0.0
  %598 = vmatprep.subr.mxu0 0.0
  %599 = vmatpush1.msra.mxu0 0.0
  %600 = vmatprep.subr.mxu0 0.0
  %601 = vmatpush1.msra.mxu0 0.0
  %602 = vmatprep.subr.mxu0 0.0
  %603 = vmatpush1.msra.mxu0 0.0
  %604 = vmatprep.subr.mxu0 0.0
  %605 = vmatpush1.msra.mxu0 0.0
  %606 = vmatprep.subr.mxu0 0.0
  %607 = vmatpush1.msra.mxu0 0.0
  %608 = vmatprep.subr.mxu0 0.0
  %609 = vmatpush1.msra.mxu0 0.0
  %610 = vmatprep.subr.mxu0 0.0
  %611 = vmatpush1.msra.mxu0 0.0
  %612 = vmatprep.subr.mxu0 0.0
  %613 = vmatpush1.msra.mxu0 0.0
  %614 = vmatprep.subr.mxu0 0.0
  %615 = vmatpush1.msra.mxu0 0.0
  %616 = vmatprep.subr.mxu0 0.0
  %617 = vmatpush1.msra.mxu0 0.0
  %618 = vmatprep.subr.mxu0 0.0
  %619 = vmatpush1.msra.mxu0 0.0
  %620 = vmatprep.subr.mxu0 0.0
  %621 = vmatpush1.msra.mxu0 0.0
  %622 = vmatprep.subr.mxu0 0.0
  %623 = vmatpush1.msra.mxu0 0.0
  %624 = vmatprep.mubr.f32.mxu0 0.0
  %625 = vmatmul.mubr.f32.gmra.mrb[0].mxu0 %v549
  %v626 = vpop.f32.mrb[0].mxu0
  %v627 = vadd.f32 %v546, %v626
  %v628 = vpop.f32.mrb[0].mxu0
  %v629 = vadd.f32 %v546, %v628
  %630 = vdwg.mxu0
  %631 = vmatprep.subr.mxu0 0.0
  %632 = vmatpush1.msra.mxu0 %v558
  %633 = vmatprep.subr.mxu0 0.0
  %634 = vmatpush1.msra.mxu0 0.0
  %635 = vmatprep.subr.mxu0 0.0
  %636 = vmatpush1.msra.mxu0 0.0
  %637 = vmatprep.subr.mxu0 0.0
  %638 = vmatpush1.msra.mxu0 0.0
  %639 = vmatprep.subr.mxu0 0.0
  %640 = vmatpush1.msra.mxu0 0.0
  %641 = vmatprep.subr.mxu0 0.0
  %642 = vmatpush1.msra.mxu0 0.0
  %643 = vmatprep.subr.mxu0 0.0
  %644 = vmatpush1.msra.mxu0 0.0
  %645 = vmatprep.subr.mxu0 0.0
  %646 = vmatpush1.msra.mxu0 0.0
  %647 = vmatprep.subr.mxu0 0.0
  %648 = vmatpush1.msra.mxu0 0.0
  %649 = vmatprep.subr.mxu0 0.0
  %650 = vmatpush1.msra.mxu0 0.0
  %651 = vmatprep.subr.mxu0 0.0
  %652 = vmatpush1.msra.mxu0 0.0
  %653 = vmatprep.subr.mxu0 0.0
  %654 = vmatpush1.msra.mxu0 0.0
  %655 = vmatprep.subr.mxu0 0.0
  %656 = vmatpush1.msra.mxu0 0.0
  %657 = vmatprep.subr.mxu0 0.0
  %658 = vmatpush1.msra.mxu0 0.0
  %659 = vmatprep.subr.mxu0 0.0
  %660 = vmatpush1.msra.mxu0 0.0
  %661 = vmatprep.subr.mxu0 0.0
  %662 = vmatpush1.msra.mxu0 0.0
  %663 = vmatprep.subr.mxu0 0.0
  %664 = vmatpush1.msra.mxu0 0.0
  %665 = vmatprep.subr.mxu0 0.0
  %666 = vmatpush1.msra.mxu0 0.0
  %667 = vmatprep.subr.mxu0 0.0
  %668 = vmatpush1.msra.mxu0 0.0
  %669 = vmatprep.subr.mxu0 0.0
  %670 = vmatpush1.msra.mxu0 0.0
  %671 = vmatprep.subr.mxu0 0.0
  %672 = vmatpush1.msra.mxu0 0.0
  %673 = vmatprep.subr.mxu0 0.0
  %674 = vmatpush1.msra.mxu0 0.0
  %675 = vmatprep.subr.mxu0 0.0
  %676 = vmatpush1.msra.mxu0 0.0
  %677 = vmatprep.subr.mxu0 0.0
  %678 = vmatpush1.msra.mxu0 0.0
  %679 = vmatprep.subr.mxu0 0.0
  %680 = vmatpush1.msra.mxu0 0.0
  %681 = vmatprep.subr.mxu0 0.0
  %682 = vmatpush1.msra.mxu0 0.0
  %683 = vmatprep.subr.mxu0 0.0
  %684 = vmatpush1.msra.mxu0 0.0
  %685 = vmatprep.subr.mxu0 0.0
  %686 = vmatpush1.msra.mxu0 0.0
  %687 = vmatprep.subr.mxu0 0.0
  %688 = vmatpush1.msra.mxu0 0.0
  %689 = vmatprep.subr.mxu0 0.0
  %690 = vmatpush1.msra.mxu0 0.0
  %691 = vmatprep.subr.mxu0 0.0
  %692 = vmatpush1.msra.mxu0 0.0
  %693 = vmatprep.subr.mxu0 0.0
  %694 = vmatpush1.msra.mxu0 0.0
  %695 = vmatprep.mubr.f32.mxu0 0.0
  %696 = vmatmul.mubr.f32.gmra.mrb[0].mxu0 %v549
  %v697 = vpop.f32.mrb[0].mxu0
  %v698 = vadd.f32 %v546, %v697
  %v699 = vpop.f32.mrb[0].mxu0
  %700 = vdwg.mxu0
  %v701 = vand.u32 2147483647, %v627
  %vm702 = vcmp.le.f32.partialorder %v701, 0.7853982
  %vm703 = vcmp.lt.s32.totalorder %v627, 0
  %v704 = vand.u32 %v627, 2139095040
  %v705 = vshrl.u32 %v704, 23
  %v706 = vsub.s32 %v705, 127
  %v707 = vand.u32 2147483647, %v627
  %v708 = vand.u32 %v707, 8388607
  %v709 = vor.u32 %v708, 8388608
  %v710 = vsub.s32 0, %v709
  %v711 = vadd.s32 %v706, 1
  %vm712 = vcmp.gt.s32.totalorder %v711, 0
  %v713 = vsel %vm712, %v711, 0
  %v714 = vshrl.u32 %v713, 5
  %v715 = vand.u32 %v713, 31
  %v716 = vsub.s32 32, %v715
  %v717 = vshrl.u32 683565275, %v716
  %v718 = vshll.u32 683565275, %v715
  %v719 = vshrl.u32 2475754826, %v716
  %v720 = vor.u32 %v718, %v719
  %v721 = vshll.u32 2475754826, %v715
  %v722 = vshrl.u32 2131351028, %v716
  %v723 = vor.u32 %v721, %v722
  %v724 = vshll.u32 2131351028, %v715
  %v725 = vshrl.u32 2102212464, %v716
  %v726 = vor.u32 %v724, %v725
  %v727 = vshll.u32 2102212464, %v715
  %v728 = vshrl.u32 920167782, %v716
  %v729 = vor.u32 %v727, %v728
  %v730 = vshll.u32 920167782, %v715
  %v731 = vshrl.u32 1326507024, %v716
  %v732 = vor.u32 %v730, %v731
  %vm733 = vcmp.lt.s32.totalorder %v714, 1
  %vm734 = vcmp.lt.s32.totalorder %v714, 2
  %vm735 = vcmp.lt.s32.totalorder %v714, 3
  %vm736 = vcmp.lt.s32.totalorder %v714, 4
  %v737 = vsel %vm733, %v717, %v720
  %v738 = vsel %vm736, %v726, 2102212464
  %v739 = vsel %vm735, %v723, %v738
  %v740 = vsel %vm734, %v737, %v739
  %v741 = vsel %vm733, %v720, %v723
  %v742 = vsel %vm736, %v729, 920167782
  %v743 = vsel %vm735, %v726, %v742
  %v744 = vsel %vm734, %v741, %v743
  %v745 = vsel %vm733, %v723, %v726
  %v746 = vsel %vm736, %v732, 1326507024
  %v747 = vsel %vm735, %v729, %v746
  %v748 = vsel %vm734, %v745, %v747
  %v749 = vshll.u32 %v709, 8
  %v750 = vmul.u32.u64.compose %v749, %v748
  %v751 = vextract.low.u32 %v750
  %v752 = vextract.high.u32 %v750
  %v753 = vmul.u32.u64.compose %v749, %v744
  %v754 = vextract.low.u32 %v753
  %v755 = vextract.high.u32 %v753
  %v756 = vmul.u32 %v749, %v740
  %v757 = vadd.s32 %v752, %v754
  %vm758 = vc.u32 %v752, %v754
  %v759 = vadd.s32 %v755, 1
  %v760 = vsel %vm758, %v759, %v755
  %v761 = vadd.s32 %v756, %v760
  %v762 = vadd.s32 %v761, 536870912
  %v763 = vshrl.u32 %v762, 30
  %v764 = vshll.u32 %v763, 30
  %v765 = vsub.s32 %v761, %v764
  %vm766 = vcmp.lt.s32.totalorder %v765, 0
  %v767 = vsub.s32 0, %v765
  %v768 = vsel %vm766, %v767, %v765
  %v769 = vclz %v768
  %v770 = vsub.s32 %v769, 2
  %vm771 = vcmp.gt.s32.totalorder 0, %v770
  %v772 = vsel %vm771, 0, %v770
  %v773 = vsub.s32 32, %v772
  %v774 = vshll.u32 %v765, %v772
  %v775 = vshrl.u32 %v757, %v773
  %v776 = vor.u32 %v774, %v775
  %v777 = vsub.s32 4294967266, %v772
  %v778 = vadd.s32 %v777, 127
  %v779 = vshll.u32 %v778, 23
  %v780 = vor.u32 4788187, %v779
  %v781 = vand.u32 2147483647, %v780
  %v783 = vcvt.s32.f32 %v776
  %v784 = vmul.f32 %v783, %v781
  %v785 = vxor.u32 %v784, 2147483648
  %v786 = vsel %vm703, %v785, %v784
  %v787 = vsub.s32 4, %v763
  %v788 = vsel %vm703, %v787, %v763
  %v789 = vsel %vm702, %v627, %v786
  %v790 = vsel %vm702, 0, %v788
  %v791 = vcosq.f32.pop %v789
  %v792 = vsinq.f32.pop %v789
  %vm793 = vweird.f32 %v627
  %v794 = vand.u32 %v790, 3
  %vm795 = vcmp.lt.s32.totalorder %v794, 2
  %vm796 = vcmp.eq.s32.totalorder %v794, 0
  %v797 = vxor.u32 %v792, 2147483648
  %v798 = vsel %vm796, %v791, %v797
  %vm799 = vcmp.eq.s32.totalorder %v794, 2
  %v800 = vxor.u32 %v791, 2147483648
  %v801 = vsel %vm799, %v800, %v792
  %v802 = vsel %vm795, %v798, %v801
  %v803 = vsel %vm793, nan, %v802
  %v804 = vand.u32 2147483647, %v629
  %vm805 = vcmp.le.f32.partialorder %v804, 0.7853982
  %vm806 = vcmp.lt.s32.totalorder %v629, 0
  %v807 = vand.u32 %v629, 2139095040
  %v808 = vshrl.u32 %v807, 23
  %v809 = vsub.s32 %v808, 127
  %v810 = vand.u32 2147483647, %v629
  %v811 = vand.u32 %v810, 8388607
  %v812 = vor.u32 %v811, 8388608
  %v813 = vsub.s32 0, %v812
  %v814 = vadd.s32 %v809, 1
  %vm815 = vcmp.gt.s32.totalorder %v814, 0
  %v816 = vsel %vm815, %v814, 0
  %v817 = vshrl.u32 %v816, 5
  %v818 = vand.u32 %v816, 31
  %v819 = vsub.s32 32, %v818
  %v820 = vshrl.u32 683565275, %v819
  %v821 = vshll.u32 683565275, %v818
  %v822 = vshrl.u32 2475754826, %v819
  %v823 = vor.u32 %v821, %v822
  %v824 = vshll.u32 2475754826, %v818
  %v825 = vshrl.u32 2131351028, %v819
  %v826 = vor.u32 %v824, %v825
  %v827 = vshll.u32 2131351028, %v818
  %v828 = vshrl.u32 2102212464, %v819
  %v829 = vor.u32 %v827, %v828
  %v830 = vshll.u32 2102212464, %v818
  %v831 = vshrl.u32 920167782, %v819
  %v832 = vor.u32 %v830, %v831
  %v833 = vshll.u32 920167782, %v818
  %v834 = vshrl.u32 1326507024, %v819
  %v835 = vor.u32 %v833, %v834
  %vm836 = vcmp.lt.s32.totalorder %v817, 1
  %vm837 = vcmp.lt.s32.totalorder %v817, 2
  %vm838 = vcmp.lt.s32.totalorder %v817, 3
  %vm839 = vcmp.lt.s32.totalorder %v817, 4
  %v840 = vsel %vm836, %v820, %v823
  %v841 = vsel %vm839, %v829, 2102212464
  %v842 = vsel %vm838, %v826, %v841
  %v843 = vsel %vm837, %v840, %v842
  %v844 = vsel %vm836, %v823, %v826
  %v845 = vsel %vm839, %v832, 920167782
  %v846 = vsel %vm838, %v829, %v845
  %v847 = vsel %vm837, %v844, %v846
  %v848 = vsel %vm836, %v826, %v829
  %v849 = vsel %vm839, %v835, 1326507024
  %v850 = vsel %vm838, %v832, %v849
  %v851 = vsel %vm837, %v848, %v850
  %v852 = vshll.u32 %v812, 8
  %v853 = vmul.u32.u64.compose %v852, %v851
  %v854 = vextract.low.u32 %v853
  %v855 = vextract.high.u32 %v853
  %v856 = vmul.u32.u64.compose %v852, %v847
  %v857 = vextract.low.u32 %v856
  %v858 = vextract.high.u32 %v856
  %v859 = vmul.u32 %v852, %v843
  %v860 = vadd.s32 %v855, %v857
  %vm861 = vc.u32 %v855, %v857
  %v862 = vadd.s32 %v858, 1
  %v863 = vsel %vm861, %v862, %v858
  %v864 = vadd.s32 %v859, %v863
  %v865 = vadd.s32 %v864, 536870912
  %v866 = vshrl.u32 %v865, 30
  %v867 = vshll.u32 %v866, 30
  %v868 = vsub.s32 %v864, %v867
  %vm869 = vcmp.lt.s32.totalorder %v868, 0
  %v870 = vsub.s32 0, %v868
  %v871 = vsel %vm869, %v870, %v868
  %v872 = vclz %v871
  %v873 = vsub.s32 %v872, 2
  %vm874 = vcmp.gt.s32.totalorder 0, %v873
  %v875 = vsel %vm874, 0, %v873
  %v876 = vsub.s32 32, %v875
  %v877 = vshll.u32 %v868, %v875
  %v878 = vshrl.u32 %v860, %v876
  %v879 = vor.u32 %v877, %v878
  %v880 = vsub.s32 4294967266, %v875
  %v881 = vadd.s32 %v880, 127
  %v882 = vshll.u32 %v881, 23
  %v883 = vor.u32 4788187, %v882
  %v884 = vand.u32 2147483647, %v883
  %v886 = vcvt.s32.f32 %v879
  %v887 = vmul.f32 %v886, %v884
  %v888 = vxor.u32 %v887, 2147483648
  %v889 = vsel %vm806, %v888, %v887
  %v890 = vsub.s32 4, %v866
  %v891 = vsel %vm806, %v890, %v866
  %v892 = vsel %vm805, %v629, %v889
  %v893 = vsel %vm805, 0, %v891
  %v894 = vcosq.f32.pop %v892
  %v895 = vsinq.f32.pop %v892
  %vm896 = vweird.f32 %v629
  %v897 = vand.u32 %v893, 3
  %vm898 = vcmp.lt.s32.totalorder %v897, 2
  %vm899 = vcmp.eq.s32.totalorder %v897, 0
  %v900 = vxor.u32 %v895, 2147483648
  %v901 = vsel %vm899, %v894, %v900
  %vm902 = vcmp.eq.s32.totalorder %v897, 2
  %v903 = vxor.u32 %v894, 2147483648
  %v904 = vsel %vm902, %v903, %v895
  %v905 = vsel %vm898, %v901, %v904
  %v906 = vsel %vm896, nan, %v905
  %v907 = vand.u32 2147483647, %v698
  %vm908 = vcmp.le.f32.partialorder %v907, 0.7853982
  %vm909 = vcmp.lt.s32.totalorder %v698, 0
  %v910 = vand.u32 %v698, 2139095040
  %v911 = vshrl.u32 %v910, 23
  %v912 = vsub.s32 %v911, 127
  %v913 = vand.u32 2147483647, %v698
  %v914 = vand.u32 %v913, 8388607
  %v915 = vor.u32 %v914, 8388608
  %v916 = vsub.s32 0, %v915
  %v917 = vadd.s32 %v912, 1
  %vm918 = vcmp.gt.s32.totalorder %v917, 0
  %v919 = vsel %vm918, %v917, 0
  %v920 = vshrl.u32 %v919, 5
  %v921 = vand.u32 %v919, 31
  %v922 = vsub.s32 32, %v921
  %v923 = vshrl.u32 683565275, %v922
  %v924 = vshll.u32 683565275, %v921
  %v925 = vshrl.u32 2475754826, %v922
  %v926 = vor.u32 %v924, %v925
  %v927 = vshll.u32 2475754826, %v921
  %v928 = vshrl.u32 2131351028, %v922
  %v929 = vor.u32 %v927, %v928
  %v930 = vshll.u32 2131351028, %v921
  %v931 = vshrl.u32 2102212464, %v922
  %v932 = vor.u32 %v930, %v931
  %v933 = vshll.u32 2102212464, %v921
  %v934 = vshrl.u32 920167782, %v922
  %v935 = vor.u32 %v933, %v934
  %v936 = vshll.u32 920167782, %v921
  %v937 = vshrl.u32 1326507024, %v922
  %v938 = vor.u32 %v936, %v937
  %vm939 = vcmp.lt.s32.totalorder %v920, 1
  %vm940 = vcmp.lt.s32.totalorder %v920, 2
  %vm941 = vcmp.lt.s32.totalorder %v920, 3
  %vm942 = vcmp.lt.s32.totalorder %v920, 4
  %v943 = vsel %vm939, %v923, %v926
  %v944 = vsel %vm942, %v932, 2102212464
  %v945 = vsel %vm941, %v929, %v944
  %v946 = vsel %vm940, %v943, %v945
  %v947 = vsel %vm939, %v926, %v929
  %v948 = vsel %vm942, %v935, 920167782
  %v949 = vsel %vm941, %v932, %v948
  %v950 = vsel %vm940, %v947, %v949
  %v951 = vsel %vm939, %v929, %v932
  %v952 = vsel %vm942, %v938, 1326507024
  %v953 = vsel %vm941, %v935, %v952
  %v954 = vsel %vm940, %v951, %v953
  %v955 = vshll.u32 %v915, 8
  %v956 = vmul.u32.u64.compose %v955, %v954
  %v957 = vextract.low.u32 %v956
  %v958 = vextract.high.u32 %v956
  %v959 = vmul.u32.u64.compose %v955, %v950
  %v960 = vextract.low.u32 %v959
  %v961 = vextract.high.u32 %v959
  %v962 = vmul.u32 %v955, %v946
  %v963 = vadd.s32 %v958, %v960
  %vm964 = vc.u32 %v958, %v960
  %v965 = vadd.s32 %v961, 1
  %v966 = vsel %vm964, %v965, %v961
  %v967 = vadd.s32 %v962, %v966
  %v968 = vadd.s32 %v967, 536870912
  %v969 = vshrl.u32 %v968, 30
  %v970 = vshll.u32 %v969, 30
  %v971 = vsub.s32 %v967, %v970
  %vm972 = vcmp.lt.s32.totalorder %v971, 0
  %v973 = vsub.s32 0, %v971
  %v974 = vsel %vm972, %v973, %v971
  %v975 = vclz %v974
  %v976 = vsub.s32 %v975, 2
  %vm977 = vcmp.gt.s32.totalorder 0, %v976
  %v978 = vsel %vm977, 0, %v976
  %v979 = vsub.s32 32, %v978
  %v980 = vshll.u32 %v971, %v978
  %v981 = vshrl.u32 %v963, %v979
  %v982 = vor.u32 %v980, %v981
  %v983 = vsub.s32 4294967266, %v978
  %v984 = vadd.s32 %v983, 127
  %v985 = vshll.u32 %v984, 23
  %v986 = vor.u32 4788187, %v985
  %v987 = vand.u32 2147483647, %v986
  %v989 = vcvt.s32.f32 %v982
  %v990 = vmul.f32 %v989, %v987
  %v991 = vxor.u32 %v990, 2147483648
  %v992 = vsel %vm909, %v991, %v990
  %v993 = vsub.s32 4, %v969
  %v994 = vsel %vm909, %v993, %v969
  %v995 = vsel %vm908, %v698, %v992
  %v996 = vsel %vm908, 0, %v994
  %v997 = vcosq.f32.pop %v995
  %v998 = vsinq.f32.pop %v995
  %vm999 = vweird.f32 %v698
  %v1000 = vand.u32 %v996, 3
  %vm1001 = vcmp.lt.s32.totalorder %v1000, 2
  %vm1002 = vcmp.eq.s32.totalorder %v1000, 0
  %v1003 = vxor.u32 %v998, 2147483648
  %v1004 = vsel %vm1002, %v997, %v1003
  %vm1005 = vcmp.eq.s32.totalorder %v1000, 2
  %v1006 = vxor.u32 %v997, 2147483648
  %v1007 = vsel %vm1005, %v1006, %v998
  %v1008 = vsel %vm1001, %v1004, %v1007
  %v1009 = vsel %vm999, nan, %v1008
  %v1010 = vmul.f32 %v296, %v803
  %v1011 = vmul.f32 %v298, %v906
  %v1012 = vmul.f32 %v367, %v1009
  %v1015 = vcombine.low %v1010, %v1011
  %1017 = vst [vmem:[%s10] sm:$0xff] %v1015
  %1018 = vst [vmem:[%s10 + $0x8] sm:$0xf] %v1012
  %v1019 = vand.u32 2147483647, %v627
  %vm1020 = vcmp.le.f32.partialorder %v1019, 0.7853982
  %vm1021 = vcmp.lt.s32.totalorder %v627, 0
  %v1022 = vand.u32 %v627, 2139095040
  %v1023 = vshrl.u32 %v1022, 23
  %v1024 = vsub.s32 %v1023, 127
  %v1025 = vand.u32 2147483647, %v627
  %v1026 = vand.u32 %v1025, 8388607
  %v1027 = vor.u32 %v1026, 8388608
  %v1028 = vsub.s32 0, %v1027
  %v1029 = vadd.s32 %v1024, 1
  %vm1030 = vcmp.gt.s32.totalorder %v1029, 0
  %v1031 = vsel %vm1030, %v1029, 0
  %v1032 = vshrl.u32 %v1031, 5
  %v1033 = vand.u32 %v1031, 31
  %v1034 = vsub.s32 32, %v1033
  %v1035 = vshrl.u32 683565275, %v1034
  %v1036 = vshll.u32 683565275, %v1033
  %v1037 = vshrl.u32 2475754826, %v1034
  %v1038 = vor.u32 %v1036, %v1037
  %v1039 = vshll.u32 2475754826, %v1033
  %v1040 = vshrl.u32 2131351028, %v1034
  %v1041 = vor.u32 %v1039, %v1040
  %v1042 = vshll.u32 2131351028, %v1033
  %v1043 = vshrl.u32 2102212464, %v1034
  %v1044 = vor.u32 %v1042, %v1043
  %v1045 = vshll.u32 2102212464, %v1033
  %v1046 = vshrl.u32 920167782, %v1034
  %v1047 = vor.u32 %v1045, %v1046
  %v1048 = vshll.u32 920167782, %v1033
  %v1049 = vshrl.u32 1326507024, %v1034
  %v1050 = vor.u32 %v1048, %v1049
  %vm1051 = vcmp.lt.s32.totalorder %v1032, 1
  %vm1052 = vcmp.lt.s32.totalorder %v1032, 2
  %vm1053 = vcmp.lt.s32.totalorder %v1032, 3
  %vm1054 = vcmp.lt.s32.totalorder %v1032, 4
  %v1055 = vsel %vm1051, %v1035, %v1038
  %v1056 = vsel %vm1054, %v1044, 2102212464
  %v1057 = vsel %vm1053, %v1041, %v1056
  %v1058 = vsel %vm1052, %v1055, %v1057
  %v1059 = vsel %vm1051, %v1038, %v1041
  %v1060 = vsel %vm1054, %v1047, 920167782
  %v1061 = vsel %vm1053, %v1044, %v1060
  %v1062 = vsel %vm1052, %v1059, %v1061
  %v1063 = vsel %vm1051, %v1041, %v1044
  %v1064 = vsel %vm1054, %v1050, 1326507024
  %v1065 = vsel %vm1053, %v1047, %v1064
  %v1066 = vsel %vm1052, %v1063, %v1065
  %v1067 = vshll.u32 %v1027, 8
  %v1068 = vmul.u32.u64.compose %v1067, %v1066
  %v1069 = vextract.low.u32 %v1068
  %v1070 = vextract.high.u32 %v1068
  %v1071 = vmul.u32.u64.compose %v1067, %v1062
  %v1072 = vextract.low.u32 %v1071
  %v1073 = vextract.high.u32 %v1071
  %v1074 = vmul.u32 %v1067, %v1058
  %v1075 = vadd.s32 %v1070, %v1072
  %vm1076 = vc.u32 %v1070, %v1072
  %v1077 = vadd.s32 %v1073, 1
  %v1078 = vsel %vm1076, %v1077, %v1073
  %v1079 = vadd.s32 %v1074, %v1078
  %v1080 = vadd.s32 %v1079, 536870912
  %v1081 = vshrl.u32 %v1080, 30
  %v1082 = vshll.u32 %v1081, 30
  %v1083 = vsub.s32 %v1079, %v1082
  %vm1084 = vcmp.lt.s32.totalorder %v1083, 0
  %v1085 = vsub.s32 0, %v1083
  %v1086 = vsel %vm1084, %v1085, %v1083
  %v1087 = vclz %v1086
  %v1088 = vsub.s32 %v1087, 2
  %vm1089 = vcmp.gt.s32.totalorder 0, %v1088
  %v1090 = vsel %vm1089, 0, %v1088
  %v1091 = vsub.s32 32, %v1090
  %v1092 = vshll.u32 %v1083, %v1090
  %v1093 = vshrl.u32 %v1075, %v1091
  %v1094 = vor.u32 %v1092, %v1093
  %v1095 = vsub.s32 4294967266, %v1090
  %v1096 = vadd.s32 %v1095, 127
  %v1097 = vshll.u32 %v1096, 23
  %v1098 = vor.u32 4788187, %v1097
  %v1099 = vand.u32 2147483647, %v1098
  %v1101 = vcvt.s32.f32 %v1094
  %v1102 = vmul.f32 %v1101, %v1099
  %v1103 = vxor.u32 %v1102, 2147483648
  %v1104 = vsel %vm1021, %v1103, %v1102
  %v1105 = vsub.s32 4, %v1081
  %v1106 = vsel %vm1021, %v1105, %v1081
  %v1107 = vsel %vm1020, %v627, %v1104
  %v1108 = vsel %vm1020, 0, %v1106
  %v1109 = vcosq.f32.pop %v1107
  %v1110 = vsinq.f32.pop %v1107
  %vm1111 = vweird.f32 %v627
  %v1112 = vadd.s32 %v1108, 3
  %v1113 = vand.u32 %v1112, 3
  %vm1114 = vcmp.lt.s32.totalorder %v1113, 2
  %vm1115 = vcmp.eq.s32.totalorder %v1113, 0
  %v1116 = vxor.u32 %v1110, 2147483648
  %v1117 = vsel %vm1115, %v1109, %v1116
  %vm1118 = vcmp.eq.s32.totalorder %v1113, 2
  %v1119 = vxor.u32 %v1109, 2147483648
  %v1120 = vsel %vm1118, %v1119, %v1110
  %v1121 = vsel %vm1114, %v1117, %v1120
  %v1122 = vsel %vm1111, nan, %v1121
  %v1123 = vand.u32 2147483647, %v629
  %vm1124 = vcmp.le.f32.partialorder %v1123, 0.7853982
  %vm1125 = vcmp.lt.s32.totalorder %v629, 0
  %v1126 = vand.u32 %v629, 2139095040
  %v1127 = vshrl.u32 %v1126, 23
  %v1128 = vsub.s32 %v1127, 127
  %v1129 = vand.u32 2147483647, %v629
  %v1130 = vand.u32 %v1129, 8388607
  %v1131 = vor.u32 %v1130, 8388608
  %v1132 = vsub.s32 0, %v1131
  %v1133 = vadd.s32 %v1128, 1
  %vm1134 = vcmp.gt.s32.totalorder %v1133, 0
  %v1135 = vsel %vm1134, %v1133, 0
  %v1136 = vshrl.u32 %v1135, 5
  %v1137 = vand.u32 %v1135, 31
  %v1138 = vsub.s32 32, %v1137
  %v1139 = vshrl.u32 683565275, %v1138
  %v1140 = vshll.u32 683565275, %v1137
  %v1141 = vshrl.u32 2475754826, %v1138
  %v1142 = vor.u32 %v1140, %v1141
  %v1143 = vshll.u32 2475754826, %v1137
  %v1144 = vshrl.u32 2131351028, %v1138
  %v1145 = vor.u32 %v1143, %v1144
  %v1146 = vshll.u32 2131351028, %v1137
  %v1147 = vshrl.u32 2102212464, %v1138
  %v1148 = vor.u32 %v1146, %v1147
  %v1149 = vshll.u32 2102212464, %v1137
  %v1150 = vshrl.u32 920167782, %v1138
  %v1151 = vor.u32 %v1149, %v1150
  %v1152 = vshll.u32 920167782, %v1137
  %v1153 = vshrl.u32 1326507024, %v1138
  %v1154 = vor.u32 %v1152, %v1153
  %vm1155 = vcmp.lt.s32.totalorder %v1136, 1
  %vm1156 = vcmp.lt.s32.totalorder %v1136, 2
  %vm1157 = vcmp.lt.s32.totalorder %v1136, 3
  %vm1158 = vcmp.lt.s32.totalorder %v1136, 4
  %v1159 = vsel %vm1155, %v1139, %v1142
  %v1160 = vsel %vm1158, %v1148, 2102212464
  %v1161 = vsel %vm1157, %v1145, %v1160
  %v1162 = vsel %vm1156, %v1159, %v1161
  %v1163 = vsel %vm1155, %v1142, %v1145
  %v1164 = vsel %vm1158, %v1151, 920167782
  %v1165 = vsel %vm1157, %v1148, %v1164
  %v1166 = vsel %vm1156, %v1163, %v1165
  %v1167 = vsel %vm1155, %v1145, %v1148
  %v1168 = vsel %vm1158, %v1154, 1326507024
  %v1169 = vsel %vm1157, %v1151, %v1168
  %v1170 = vsel %vm1156, %v1167, %v1169
  %v1171 = vshll.u32 %v1131, 8
  %v1172 = vmul.u32.u64.compose %v1171, %v1170
  %v1173 = vextract.low.u32 %v1172
  %v1174 = vextract.high.u32 %v1172
  %v1175 = vmul.u32.u64.compose %v1171, %v1166
  %v1176 = vextract.low.u32 %v1175
  %v1177 = vextract.high.u32 %v1175
  %v1178 = vmul.u32 %v1171, %v1162
  %v1179 = vadd.s32 %v1174, %v1176
  %vm1180 = vc.u32 %v1174, %v1176
  %v1181 = vadd.s32 %v1177, 1
  %v1182 = vsel %vm1180, %v1181, %v1177
  %v1183 = vadd.s32 %v1178, %v1182
  %v1184 = vadd.s32 %v1183, 536870912
  %v1185 = vshrl.u32 %v1184, 30
  %v1186 = vshll.u32 %v1185, 30
  %v1187 = vsub.s32 %v1183, %v1186
  %vm1188 = vcmp.lt.s32.totalorder %v1187, 0
  %v1189 = vsub.s32 0, %v1187
  %v1190 = vsel %vm1188, %v1189, %v1187
  %v1191 = vclz %v1190
  %v1192 = vsub.s32 %v1191, 2
  %vm1193 = vcmp.gt.s32.totalorder 0, %v1192
  %v1194 = vsel %vm1193, 0, %v1192
  %v1195 = vsub.s32 32, %v1194
  %v1196 = vshll.u32 %v1187, %v1194
  %v1197 = vshrl.u32 %v1179, %v1195
  %v1198 = vor.u32 %v1196, %v1197
  %v1199 = vsub.s32 4294967266, %v1194
  %v1200 = vadd.s32 %v1199, 127
  %v1201 = vshll.u32 %v1200, 23
  %v1202 = vor.u32 4788187, %v1201
  %v1203 = vand.u32 2147483647, %v1202
  %v1205 = vcvt.s32.f32 %v1198
  %v1206 = vmul.f32 %v1205, %v1203
  %v1207 = vxor.u32 %v1206, 2147483648
  %v1208 = vsel %vm1125, %v1207, %v1206
  %v1209 = vsub.s32 4, %v1185
  %v1210 = vsel %vm1125, %v1209, %v1185
  %v1211 = vsel %vm1124, %v629, %v1208
  %v1212 = vsel %vm1124, 0, %v1210
  %v1213 = vcosq.f32.pop %v1211
  %v1214 = vsinq.f32.pop %v1211
  %vm1215 = vweird.f32 %v629
  %v1216 = vadd.s32 %v1212, 3
  %v1217 = vand.u32 %v1216, 3
  %vm1218 = vcmp.lt.s32.totalorder %v1217, 2
  %vm1219 = vcmp.eq.s32.totalorder %v1217, 0
  %v1220 = vxor.u32 %v1214, 2147483648
  %v1221 = vsel %vm1219, %v1213, %v1220
  %vm1222 = vcmp.eq.s32.totalorder %v1217, 2
  %v1223 = vxor.u32 %v1213, 2147483648
  %v1224 = vsel %vm1222, %v1223, %v1214
  %v1225 = vsel %vm1218, %v1221, %v1224
  %v1226 = vsel %vm1215, nan, %v1225
  %v1227 = vand.u32 2147483647, %v698
  %vm1228 = vcmp.le.f32.partialorder %v1227, 0.7853982
  %vm1229 = vcmp.lt.s32.totalorder %v698, 0
  %v1230 = vand.u32 %v698, 2139095040
  %v1231 = vshrl.u32 %v1230, 23
  %v1232 = vsub.s32 %v1231, 127
  %v1233 = vand.u32 2147483647, %v698
  %v1234 = vand.u32 %v1233, 8388607
  %v1235 = vor.u32 %v1234, 8388608
  %v1236 = vsub.s32 0, %v1235
  %v1237 = vadd.s32 %v1232, 1
  %vm1238 = vcmp.gt.s32.totalorder %v1237, 0
  %v1239 = vsel %vm1238, %v1237, 0
  %v1240 = vshrl.u32 %v1239, 5
  %v1241 = vand.u32 %v1239, 31
  %v1242 = vsub.s32 32, %v1241
  %v1243 = vshrl.u32 683565275, %v1242
  %v1244 = vshll.u32 683565275, %v1241
  %v1245 = vshrl.u32 2475754826, %v1242
  %v1246 = vor.u32 %v1244, %v1245
  %v1247 = vshll.u32 2475754826, %v1241
  %v1248 = vshrl.u32 2131351028, %v1242
  %v1249 = vor.u32 %v1247, %v1248
  %v1250 = vshll.u32 2131351028, %v1241
  %v1251 = vshrl.u32 2102212464, %v1242
  %v1252 = vor.u32 %v1250, %v1251
  %v1253 = vshll.u32 2102212464, %v1241
  %v1254 = vshrl.u32 920167782, %v1242
  %v1255 = vor.u32 %v1253, %v1254
  %v1256 = vshll.u32 920167782, %v1241
  %v1257 = vshrl.u32 1326507024, %v1242
  %v1258 = vor.u32 %v1256, %v1257
  %vm1259 = vcmp.lt.s32.totalorder %v1240, 1
  %vm1260 = vcmp.lt.s32.totalorder %v1240, 2
  %vm1261 = vcmp.lt.s32.totalorder %v1240, 3
  %vm1262 = vcmp.lt.s32.totalorder %v1240, 4
  %v1263 = vsel %vm1259, %v1243, %v1246
  %v1264 = vsel %vm1262, %v1252, 2102212464
  %v1265 = vsel %vm1261, %v1249, %v1264
  %v1266 = vsel %vm1260, %v1263, %v1265
  %v1267 = vsel %vm1259, %v1246, %v1249
  %v1268 = vsel %vm1262, %v1255, 920167782
  %v1269 = vsel %vm1261, %v1252, %v1268
  %v1270 = vsel %vm1260, %v1267, %v1269
  %v1271 = vsel %vm1259, %v1249, %v1252
  %v1272 = vsel %vm1262, %v1258, 1326507024
  %v1273 = vsel %vm1261, %v1255, %v1272
  %v1274 = vsel %vm1260, %v1271, %v1273
  %v1275 = vshll.u32 %v1235, 8
  %v1276 = vmul.u32.u64.compose %v1275, %v1274
  %v1277 = vextract.low.u32 %v1276
  %v1278 = vextract.high.u32 %v1276
  %v1279 = vmul.u32.u64.compose %v1275, %v1270
  %v1280 = vextract.low.u32 %v1279
  %v1281 = vextract.high.u32 %v1279
  %v1282 = vmul.u32 %v1275, %v1266
  %v1283 = vadd.s32 %v1278, %v1280
  %vm1284 = vc.u32 %v1278, %v1280
  %v1285 = vadd.s32 %v1281, 1
  %v1286 = vsel %vm1284, %v1285, %v1281
  %v1287 = vadd.s32 %v1282, %v1286
  %v1288 = vadd.s32 %v1287, 536870912
  %v1289 = vshrl.u32 %v1288, 30
  %v1290 = vshll.u32 %v1289, 30
  %v1291 = vsub.s32 %v1287, %v1290
  %vm1292 = vcmp.lt.s32.totalorder %v1291, 0
  %v1293 = vsub.s32 0, %v1291
  %v1294 = vsel %vm1292, %v1293, %v1291
  %v1295 = vclz %v1294
  %v1296 = vsub.s32 %v1295, 2
  %vm1297 = vcmp.gt.s32.totalorder 0, %v1296
  %v1298 = vsel %vm1297, 0, %v1296
  %v1299 = vsub.s32 32, %v1298
  %v1300 = vshll.u32 %v1291, %v1298
  %v1301 = vshrl.u32 %v1283, %v1299
  %v1302 = vor.u32 %v1300, %v1301
  %v1303 = vsub.s32 4294967266, %v1298
  %v1304 = vadd.s32 %v1303, 127
  %v1305 = vshll.u32 %v1304, 23
  %v1306 = vor.u32 4788187, %v1305
  %v1307 = vand.u32 2147483647, %v1306
  %v1309 = vcvt.s32.f32 %v1302
  %v1310 = vmul.f32 %v1309, %v1307
  %v1311 = vxor.u32 %v1310, 2147483648
  %v1312 = vsel %vm1229, %v1311, %v1310
  %v1313 = vsub.s32 4, %v1289
  %v1314 = vsel %vm1229, %v1313, %v1289
  %v1315 = vsel %vm1228, %v698, %v1312
  %v1316 = vsel %vm1228, 0, %v1314
  %v1317 = vcosq.f32.pop %v1315
  %v1318 = vsinq.f32.pop %v1315
  %vm1319 = vweird.f32 %v698
  %v1320 = vadd.s32 %v1316, 3
  %v1321 = vand.u32 %v1320, 3
  %vm1322 = vcmp.lt.s32.totalorder %v1321, 2
  %vm1323 = vcmp.eq.s32.totalorder %v1321, 0
  %v1324 = vxor.u32 %v1318, 2147483648
  %v1325 = vsel %vm1323, %v1317, %v1324
  %vm1326 = vcmp.eq.s32.totalorder %v1321, 2
  %v1327 = vxor.u32 %v1317, 2147483648
  %v1328 = vsel %vm1326, %v1327, %v1318
  %v1329 = vsel %vm1322, %v1325, %v1328
  %v1330 = vsel %vm1319, nan, %v1329
  %v1331 = vmul.f32 %v296, %v1122
  %v1332 = vmul.f32 %v298, %v1226
  %v1333 = vmul.f32 %v367, %v1330
  %v1336 = vcombine.low %v1331, %v1332
  %1338 = vst [vmem:[%s11] sm:$0xff] %v1336
  %1339 = vst [vmem:[%s11 + $0x8] sm:$0xf] %v1333
  // Predicated region
  $region42: #{ab_mffe_forward.4} parent=0 // pred_check
    _
  $region43: #{ab_mffe_forward.4} parent=0 // pred_check_branch
    %1341 = sbr.rel (0) target = $region45
  $region44: #{ab_mffe_forward.4} parent=0 // pred_region
    _
  $region45: #{ab_mffe_forward.4} parent=0 // pred_fallthru
    _
  // Predicated region
  $region46: #{ab_mffe_forward.4} parent=0 // pred_check
    _
  $region47: #{ab_mffe_forward.4} parent=0 // pred_check_branch
    %1343 = sbr.rel (0) target = $region49
  $region48: #{ab_mffe_forward.4} parent=0 // pred_region
    _
  $region49: #{ab_mffe_forward.4} parent=0 // pred_fallthru
    _
  // Predicated region
  $region50: #{ab_mffe_forward.4} parent=0 // pred_check
    _
  $region51: #{ab_mffe_forward.4} parent=0 // pred_check_branch
    %1345 = sbr.rel (0) target = $region53
  $region52: #{ab_mffe_forward.4} parent=0 // pred_region
    _
  $region53: #{ab_mffe_forward.4} parent=0 // pred_fallthru
    _
  // Predicated region
  $region54: #{ab_mffe_forward.4} parent=0 // pred_check
    _
  $region55: #{ab_mffe_forward.4} parent=0 // pred_check_branch
    %1347 = sbr.rel (0) target = $region57
  $region56: #{ab_mffe_forward.4} parent=0 // pred_region
    _
  $region57: #{ab_mffe_forward.4} parent=0 // pred_fallthru
    _

// kernel: ab_mffe_forward.5
$region0: #{ab_mffe_forward.5}
  #allocation0 [shape = 'u32[]', space=smem, size = 0x4, offset = 0x4, fixed_abs, tag = 'smem constant byte address 0x4 - core index']
  #allocation1 [shape = 'u32[144,128]{1,0:T(1,128)}', space=vmem, size = 0x12000, scoped, tag = 'internal scratch']
  %s0 = inlined_call_operand.vmem [shape: f32[4,512], index: 0, kind: input, shape index: {}]
  %s1 = inlined_call_operand.vmem [shape: f32[4,512], index: 1, kind: input, shape index: {}]
  %s2 = inlined_call_operand.vmem [shape: f32[4,4], index: 2, kind: input, shape index: {}]
  %s3 = inlined_call_operand.vmem [shape: f32[4,4], index: 3, kind: input, shape index: {}]
  %s4 = inlined_call_operand.vmem [shape: f32[4,1], index: 4, kind: input, shape index: {}]
  %s5 = inlined_call_operand.vmem [shape: f32[4,512], index: 5, kind: output, shape index: {}]
  %s6 = sld [smem:[#allocation0]]
  $region30: #{ab_mffe_forward.5} parent=0
    _
  %s8 = ssub.s32 1, %s6
  %s9 = scalar_select 0, %s8, %s6
  // Predicated region
  $region2: #{ab_mffe_forward.5} parent=0 // pred_check
    _
  $region3: #{ab_mffe_forward.5} parent=0 // pred_check_branch
    %11 = sbr.rel (0) target = $region5
  $region4: #{ab_mffe_forward.5} parent=0 // pred_region
    _
  $region5: #{ab_mffe_forward.5} parent=0 // pred_fallthru
    _
  // Predicated region
  $region6: #{ab_mffe_forward.5} parent=0 // pred_check
    _
  $region7: #{ab_mffe_forward.5} parent=0 // pred_check_branch
    %13 = sbr.rel (0) target = $region9
  $region8: #{ab_mffe_forward.5} parent=0 // pred_region
    _
  $region9: #{ab_mffe_forward.5} parent=0 // pred_fallthru
    _
  // Predicated region
  $region10: #{ab_mffe_forward.5} parent=0 // pred_check
    _
  $region11: #{ab_mffe_forward.5} parent=0 // pred_check_branch
    %15 = sbr.rel (0) target = $region13
  $region12: #{ab_mffe_forward.5} parent=0 // pred_region
    _
  $region13: #{ab_mffe_forward.5} parent=0 // pred_fallthru
    _
  // Predicated region
  $region14: #{ab_mffe_forward.5} parent=0 // pred_check
    _
  $region15: #{ab_mffe_forward.5} parent=0 // pred_check_branch
    %17 = sbr.rel (0) target = $region17
  $region16: #{ab_mffe_forward.5} parent=0 // pred_region
    _
  $region17: #{ab_mffe_forward.5} parent=0 // pred_fallthru
    _
  // Predicated region
  $region18: #{ab_mffe_forward.5} parent=0 // pred_check
    _
  $region19: #{ab_mffe_forward.5} parent=0 // pred_check_branch
    %19 = sbr.rel (0) target = $region21
  $region20: #{ab_mffe_forward.5} parent=0 // pred_region
    _
  $region21: #{ab_mffe_forward.5} parent=0 // pred_fallthru
    _
  %v20 = vld [vmem:[%s2] sm:$0xf]
  %v21 = vld [vmem:[%s0] sm:$0xff]
  %v22 = vld [vmem:[%s0 + $0x8] sm:$0xff]
  %v23 = vld [vmem:[%s3] sm:$0xf]
  %v24 = vld [vmem:[%s1] sm:$0xff]
  %v25 = vld [vmem:[%s1 + $0x8] sm:$0xff]
  %v28 = vcombine.high %v24, %v24
  %v29 = vcombine.high %v25, %v25
  %vm30 = vcmask 31744
  %v32 = vsel %vm30, %v23, 0
  %vm34 = vcmask 1043456
  %v35 = vsel %vm34, %v24, 0
  %v37 = vsel %vm34, %v28, 0
  %v39 = vsel %vm34, %v25, 0
  %v41 = vsel %vm34, %v29, 0
  %43 = vmatprep.subr.mxu0 %v37
  %44 = vmatpush1.msra.mxu0 %v35
  %45 = vmatprep.subr.mxu0 0.0
  %46 = vmatpush1.msra.mxu0 0.0
  %47 = vmatprep.subr.mxu0 0.0
  %48 = vmatpush1.msra.mxu0 0.0
  %49 = vmatprep.subr.mxu0 0.0
  %50 = vmatpush1.msra.mxu0 0.0
  %51 = vmatprep.subr.mxu0 0.0
  %52 = vmatpush1.msra.mxu0 0.0
  %53 = vmatprep.subr.mxu0 0.0
  %54 = vmatpush1.msra.mxu0 0.0
  %55 = vmatprep.subr.mxu0 0.0
  %56 = vmatpush1.msra.mxu0 0.0
  %57 = vmatprep.subr.mxu0 0.0
  %58 = vmatpush1.msra.mxu0 0.0
  %59 = vmatprep.subr.mxu0 0.0
  %60 = vmatpush1.msra.mxu0 0.0
  %61 = vmatprep.subr.mxu0 0.0
  %62 = vmatpush1.msra.mxu0 0.0
  %63 = vmatprep.subr.mxu0 0.0
  %64 = vmatpush1.msra.mxu0 0.0
  %65 = vmatprep.subr.mxu0 0.0
  %66 = vmatpush1.msra.mxu0 0.0
  %67 = vmatprep.subr.mxu0 0.0
  %68 = vmatpush1.msra.mxu0 0.0
  %69 = vmatprep.subr.mxu0 0.0
  %70 = vmatpush1.msra.mxu0 0.0
  %71 = vmatprep.subr.mxu0 0.0
  %72 = vmatpush1.msra.mxu0 0.0
  %73 = vmatprep.subr.mxu0 0.0
  %74 = vmatpush1.msra.mxu0 0.0
  %75 = vmatprep.subr.mxu0 0.0
  %76 = vmatpush1.msra.mxu0 0.0
  %77 = vmatprep.subr.mxu0 0.0
  %78 = vmatpush1.msra.mxu0 0.0
  %79 = vmatprep.subr.mxu0 0.0
  %80 = vmatpush1.msra.mxu0 0.0
  %81 = vmatprep.subr.mxu0 0.0
  %82 = vmatpush1.msra.mxu0 0.0
  %83 = vmatprep.subr.mxu0 0.0
  %84 = vmatpush1.msra.mxu0 0.0
  %85 = vmatprep.subr.mxu0 0.0
  %86 = vmatpush1.msra.mxu0 0.0
  %87 = vmatprep.subr.mxu0 0.0
  %88 = vmatpush1.msra.mxu0 0.0
  %89 = vmatprep.subr.mxu0 0.0
  %90 = vmatpush1.msra.mxu0 0.0
  %91 = vmatprep.subr.mxu0 0.0
  %92 = vmatpush1.msra.mxu0 0.0
  %93 = vmatprep.subr.mxu0 0.0
  %94 = vmatpush1.msra.mxu0 0.0
  %95 = vmatprep.subr.mxu0 0.0
  %96 = vmatpush1.msra.mxu0 0.0
  %97 = vmatprep.subr.mxu0 0.0
  %98 = vmatpush1.msra.mxu0 0.0
  %99 = vmatprep.subr.mxu0 0.0
  %100 = vmatpush1.msra.mxu0 0.0
  %101 = vmatprep.subr.mxu0 0.0
  %102 = vmatpush1.msra.mxu0 0.0
  %103 = vmatprep.subr.mxu0 0.0
  %104 = vmatpush1.msra.mxu0 0.0
  %105 = vmatprep.subr.mxu0 0.0
  %106 = vmatpush1.msra.mxu0 0.0
  %107 = vmatprep.mubr.f32.mxu0 0.0
  %108 = vmatmul.mubr.f32.gmra.mrb[0].mxu0 %v32
  %v109 = vpop.f32.mrb[0].mxu0
  %v110 = vadd.f32 0.0, %v109
  %v111 = vpop.f32.mrb[0].mxu0
  %v112 = vadd.f32 0.0, %v111
  %113 = vdwg.mxu0
  %114 = vmatprep.subr.mxu0 %v41
  %115 = vmatpush1.msra.mxu0 %v39
  %116 = vmatprep.subr.mxu0 0.0
  %117 = vmatpush1.msra.mxu0 0.0
  %118 = vmatprep.subr.mxu0 0.0
  %119 = vmatpush1.msra.mxu0 0.0
  %120 = vmatprep.subr.mxu0 0.0
  %121 = vmatpush1.msra.mxu0 0.0
  %122 = vmatprep.subr.mxu0 0.0
  %123 = vmatpush1.msra.mxu0 0.0
  %124 = vmatprep.subr.mxu0 0.0
  %125 = vmatpush1.msra.mxu0 0.0
  %126 = vmatprep.subr.mxu0 0.0
  %127 = vmatpush1.msra.mxu0 0.0
  %128 = vmatprep.subr.mxu0 0.0
  %129 = vmatpush1.msra.mxu0 0.0
  %130 = vmatprep.subr.mxu0 0.0
  %131 = vmatpush1.msra.mxu0 0.0
  %132 = vmatprep.subr.mxu0 0.0
  %133 = vmatpush1.msra.mxu0 0.0
  %134 = vmatprep.subr.mxu0 0.0
  %135 = vmatpush1.msra.mxu0 0.0
  %136 = vmatprep.subr.mxu0 0.0
  %137 = vmatpush1.msra.mxu0 0.0
  %138 = vmatprep.subr.mxu0 0.0
  %139 = vmatpush1.msra.mxu0 0.0
  %140 = vmatprep.subr.mxu0 0.0
  %141 = vmatpush1.msra.mxu0 0.0
  %142 = vmatprep.subr.mxu0 0.0
  %143 = vmatpush1.msra.mxu0 0.0
  %144 = vmatprep.subr.mxu0 0.0
  %145 = vmatpush1.msra.mxu0 0.0
  %146 = vmatprep.subr.mxu0 0.0
  %147 = vmatpush1.msra.mxu0 0.0
  %148 = vmatprep.subr.mxu0 0.0
  %149 = vmatpush1.msra.mxu0 0.0
  %150 = vmatprep.subr.mxu0 0.0
  %151 = vmatpush1.msra.mxu0 0.0
  %152 = vmatprep.subr.mxu0 0.0
  %153 = vmatpush1.msra.mxu0 0.0
  %154 = vmatprep.subr.mxu0 0.0
  %155 = vmatpush1.msra.mxu0 0.0
  %156 = vmatprep.subr.mxu0 0.0
  %157 = vmatpush1.msra.mxu0 0.0
  %158 = vmatprep.subr.mxu0 0.0
  %159 = vmatpush1.msra.mxu0 0.0
  %160 = vmatprep.subr.mxu0 0.0
  %161 = vmatpush1.msra.mxu0 0.0
  %162 = vmatprep.subr.mxu0 0.0
  %163 = vmatpush1.msra.mxu0 0.0
  %164 = vmatprep.subr.mxu0 0.0
  %165 = vmatpush1.msra.mxu0 0.0
  %166 = vmatprep.subr.mxu0 0.0
  %167 = vmatpush1.msra.mxu0 0.0
  %168 = vmatprep.subr.mxu0 0.0
  %169 = vmatpush1.msra.mxu0 0.0
  %170 = vmatprep.subr.mxu0 0.0
  %171 = vmatpush1.msra.mxu0 0.0
  %172 = vmatprep.subr.mxu0 0.0
  %173 = vmatpush1.msra.mxu0 0.0
  %174 = vmatprep.subr.mxu0 0.0
  %175 = vmatpush1.msra.mxu0 0.0
  %176 = vmatprep.subr.mxu0 0.0
  %177 = vmatpush1.msra.mxu0 0.0
  %178 = vmatprep.mubr.f32.mxu0 0.0
  %179 = vmatmul.mubr.f32.gmra.mrb[0].mxu0 %v32
  %v180 = vpop.f32.mrb[0].mxu0
  %v181 = vadd.f32 0.0, %v180
  %v182 = vpop.f32.mrb[0].mxu0
  %v183 = vadd.f32 0.0, %v182
  %184 = vdwg.mxu0
  %v187 = vcombine.high %v21, %v21
  %v188 = vcombine.high %v22, %v22
  %v190 = vsel %vm30, %v20, 0
  %v192 = vsel %vm34, %v21, 0
  %v194 = vsel %vm34, %v187, 0
  %v196 = vsel %vm34, %v22, 0
  %v198 = vsel %vm34, %v188, 0
  %200 = vmatprep.subr.mxu0 %v194
  %201 = vmatpush1.msra.mxu0 %v192
  %202 = vmatprep.subr.mxu0 0.0
  %203 = vmatpush1.msra.mxu0 0.0
  %204 = vmatprep.subr.mxu0 0.0
  %205 = vmatpush1.msra.mxu0 0.0
  %206 = vmatprep.subr.mxu0 0.0
  %207 = vmatpush1.msra.mxu0 0.0
  %208 = vmatprep.subr.mxu0 0.0
  %209 = vmatpush1.msra.mxu0 0.0
  %210 = vmatprep.subr.mxu0 0.0
  %211 = vmatpush1.msra.mxu0 0.0
  %212 = vmatprep.subr.mxu0 0.0
  %213 = vmatpush1.msra.mxu0 0.0
  %214 = vmatprep.subr.mxu0 0.0
  %215 = vmatpush1.msra.mxu0 0.0
  %216 = vmatprep.subr.mxu0 0.0
  %217 = vmatpush1.msra.mxu0 0.0
  %218 = vmatprep.subr.mxu0 0.0
  %219 = vmatpush1.msra.mxu0 0.0
  %220 = vmatprep.subr.mxu0 0.0
  %221 = vmatpush1.msra.mxu0 0.0
  %222 = vmatprep.subr.mxu0 0.0
  %223 = vmatpush1.msra.mxu0 0.0
  %224 = vmatprep.subr.mxu0 0.0
  %225 = vmatpush1.msra.mxu0 0.0
  %226 = vmatprep.subr.mxu0 0.0
  %227 = vmatpush1.msra.mxu0 0.0
  %228 = vmatprep.subr.mxu0 0.0
  %229 = vmatpush1.msra.mxu0 0.0
  %230 = vmatprep.subr.mxu0 0.0
  %231 = vmatpush1.msra.mxu0 0.0
  %232 = vmatprep.subr.mxu0 0.0
  %233 = vmatpush1.msra.mxu0 0.0
  %234 = vmatprep.subr.mxu0 0.0
  %235 = vmatpush1.msra.mxu0 0.0
  %236 = vmatprep.subr.mxu0 0.0
  %237 = vmatpush1.msra.mxu0 0.0
  %238 = vmatprep.subr.mxu0 0.0
  %239 = vmatpush1.msra.mxu0 0.0
  %240 = vmatprep.subr.mxu0 0.0
  %241 = vmatpush1.msra.mxu0 0.0
  %242 = vmatprep.subr.mxu0 0.0
  %243 = vmatpush1.msra.mxu0 0.0
  %244 = vmatprep.subr.mxu0 0.0
  %245 = vmatpush1.msra.mxu0 0.0
  %246 = vmatprep.subr.mxu0 0.0
  %247 = vmatpush1.msra.mxu0 0.0
  %248 = vmatprep.subr.mxu0 0.0
  %249 = vmatpush1.msra.mxu0 0.0
  %250 = vmatprep.subr.mxu0 0.0
  %251 = vmatpush1.msra.mxu0 0.0
  %252 = vmatprep.subr.mxu0 0.0
  %253 = vmatpush1.msra.mxu0 0.0
  %254 = vmatprep.subr.mxu0 0.0
  %255 = vmatpush1.msra.mxu0 0.0
  %256 = vmatprep.subr.mxu0 0.0
  %257 = vmatpush1.msra.mxu0 0.0
  %258 = vmatprep.subr.mxu0 0.0
  %259 = vmatpush1.msra.mxu0 0.0
  %260 = vmatprep.subr.mxu0 0.0
  %261 = vmatpush1.msra.mxu0 0.0
  %262 = vmatprep.subr.mxu0 0.0
  %263 = vmatpush1.msra.mxu0 0.0
  %264 = vmatprep.mubr.f32.mxu0 0.0
  %265 = vmatmul.mubr.f32.gmra.mrb[0].mxu0 %v190
  %v266 = vpop.f32.mrb[0].mxu0
  %v267 = vadd.f32 %v110, %v266
  %v268 = vpop.f32.mrb[0].mxu0
  %v269 = vadd.f32 %v112, %v268
  %270 = vdwg.mxu0
  %271 = vmatprep.subr.mxu0 %v198
  %272 = vmatpush1.msra.mxu0 %v196
  %273 = vmatprep.subr.mxu0 0.0
  %274 = vmatpush1.msra.mxu0 0.0
  %275 = vmatprep.subr.mxu0 0.0
  %276 = vmatpush1.msra.mxu0 0.0
  %277 = vmatprep.subr.mxu0 0.0
  %278 = vmatpush1.msra.mxu0 0.0
  %279 = vmatprep.subr.mxu0 0.0
  %280 = vmatpush1.msra.mxu0 0.0
  %281 = vmatprep.subr.mxu0 0.0
  %282 = vmatpush1.msra.mxu0 0.0
  %283 = vmatprep.subr.mxu0 0.0
  %284 = vmatpush1.msra.mxu0 0.0
  %285 = vmatprep.subr.mxu0 0.0
  %286 = vmatpush1.msra.mxu0 0.0
  %287 = vmatprep.subr.mxu0 0.0
  %288 = vmatpush1.msra.mxu0 0.0
  %289 = vmatprep.subr.mxu0 0.0
  %290 = vmatpush1.msra.mxu0 0.0
  %291 = vmatprep.subr.mxu0 0.0
  %292 = vmatpush1.msra.mxu0 0.0
  %293 = vmatprep.subr.mxu0 0.0
  %294 = vmatpush1.msra.mxu0 0.0
  %295 = vmatprep.subr.mxu0 0.0
  %296 = vmatpush1.msra.mxu0 0.0
  %297 = vmatprep.subr.mxu0 0.0
  %298 = vmatpush1.msra.mxu0 0.0
  %299 = vmatprep.subr.mxu0 0.0
  %300 = vmatpush1.msra.mxu0 0.0
  %301 = vmatprep.subr.mxu0 0.0
  %302 = vmatpush1.msra.mxu0 0.0
  %303 = vmatprep.subr.mxu0 0.0
  %304 = vmatpush1.msra.mxu0 0.0
  %305 = vmatprep.subr.mxu0 0.0
  %306 = vmatpush1.msra.mxu0 0.0
  %307 = vmatprep.subr.mxu0 0.0
  %308 = vmatpush1.msra.mxu0 0.0
  %309 = vmatprep.subr.mxu0 0.0
  %310 = vmatpush1.msra.mxu0 0.0
  %311 = vmatprep.subr.mxu0 0.0
  %312 = vmatpush1.msra.mxu0 0.0
  %313 = vmatprep.subr.mxu0 0.0
  %314 = vmatpush1.msra.mxu0 0.0
  %315 = vmatprep.subr.mxu0 0.0
  %316 = vmatpush1.msra.mxu0 0.0
  %317 = vmatprep.subr.mxu0 0.0
  %318 = vmatpush1.msra.mxu0 0.0
  %319 = vmatprep.subr.mxu0 0.0
  %320 = vmatpush1.msra.mxu0 0.0
  %321 = vmatprep.subr.mxu0 0.0
  %322 = vmatpush1.msra.mxu0 0.0
  %323 = vmatprep.subr.mxu0 0.0
  %324 = vmatpush1.msra.mxu0 0.0
  %325 = vmatprep.subr.mxu0 0.0
  %326 = vmatpush1.msra.mxu0 0.0
  %327 = vmatprep.subr.mxu0 0.0
  %328 = vmatpush1.msra.mxu0 0.0
  %329 = vmatprep.subr.mxu0 0.0
  %330 = vmatpush1.msra.mxu0 0.0
  %331 = vmatprep.subr.mxu0 0.0
  %332 = vmatpush1.msra.mxu0 0.0
  %333 = vmatprep.subr.mxu0 0.0
  %334 = vmatpush1.msra.mxu0 0.0
  %335 = vmatprep.mubr.f32.mxu0 0.0
  %336 = vmatmul.mubr.f32.gmra.mrb[0].mxu0 %v190
  %v337 = vpop.f32.mrb[0].mxu0
  %v338 = vadd.f32 %v181, %v337
  %v339 = vpop.f32.mrb[0].mxu0
  %v340 = vadd.f32 %v183, %v339
  %341 = vdwg.mxu0
  %v342 = vld [vmem:[%s4] sm:$0xf]
  %344 = vset.pattern.permute.xlu0 0
  %345 = vperm.xlu0 %344, %v342
  %v346 = vpop.permute.xlu0 %345
  %v348 = vadd.f32 %v267, %v346
  %v349 = vadd.f32 %v269, %v346
  %v350 = vadd.f32 %v338, %v346
  %v351 = vadd.f32 %v340, %v346
  %v356 = vcombine.low %v348, %v349
  %v357 = vcombine.low %v350, %v351
  %360 = vst [vmem:[%s5] sm:$0xff] %v356
  %361 = vst [vmem:[%s5 + $0x8] sm:$0xff] %v357
  // Predicated region
  $region22: #{ab_mffe_forward.5} parent=0 // pred_check
    _
  $region23: #{ab_mffe_forward.5} parent=0 // pred_check_branch
    %363 = sbr.rel (0) target = $region25
  $region24: #{ab_mffe_forward.5} parent=0 // pred_region
    _
  $region25: #{ab_mffe_forward.5} parent=0 // pred_fallthru
    _
  // Predicated region
  $region26: #{ab_mffe_forward.5} parent=0 // pred_check
    _
  $region27: #{ab_mffe_forward.5} parent=0 // pred_check_branch
    %365 = sbr.rel (0) target = $region29
  $region28: #{ab_mffe_forward.5} parent=0 // pred_region
    _
  $region29: #{ab_mffe_forward.5} parent=0 // pred_fallthru
    _

// kernel: ab_mffe_forward.3
$region0: #{ab_mffe_forward.3}
  #allocation0 [shape = 'u32[]', space=smem, size = 0x4, offset = 0x4, fixed_abs, tag = 'smem constant byte address 0x4 - core index']
  #allocation1 [shape = 'u32[144,128]{1,0:T(1,128)}', space=vmem, size = 0x12000, scoped, tag = 'internal scratch']
  %s0 = inlined_call_operand.vmem [shape: f32[2,4,324], index: 0, kind: input, shape index: {}, may-alias: {0,5}]
  %s1 = inlined_call_operand.vmem [shape: f32[9,4,4], index: 1, kind: input, shape index: {}]
  %s2 = inlined_call_operand.vmem [shape: f32[4,1], index: 2, kind: input, shape index: {}]
  %s3 = inlined_call_operand.vmem [shape: f32[4,4], index: 3, kind: input, shape index: {}]
  %s4 = inlined_call_operand.vmem [shape: f32[4,1], index: 4, kind: input, shape index: {}]
  %s5 = inlined_call_operand.vmem [shape: f32[2,4,324], index: 5, kind: output, shape index: {}, may-alias: {0,5}]
  %s6 = sld [smem:[#allocation0]]
  $region53: #{ab_mffe_forward.3} parent=0
    _
  %s8 = ssub.s32 1, %s6
  %s9 = scalar_select 0, %s8, %s6
  loop: start=0, step=1, limit=4
  $region2: #{ab_mffe_forward.3} parent=0 // loop_pre_header
    _
  $region3: #{ab_mffe_forward.3} parent=0 // loop_header
    %s11 = sphi 0, %s15
    %p12 = scmp.ge.s32.totalorder %s11, 4
    %s21 = sphi 0, %s23
    %s24 = sphi 0, %s21
    %s25 = sphi 0, %s24
    %s41 = sphi 0, %s25
    %s45 = sphi 0, %s45
    %s47 = sphi 0, %s45
    %s48 = sphi 0, %s47
    %s62 = sphi 0, %s48
    %s66 = sphi 0, %s66
    %s68 = sphi 0, %s66
    %s69 = sphi 0, %s68
    %s83 = sphi 0, %s69
    %s87 = sphi 0, %s87
    %s89 = sphi 0, %s87
    %s90 = sphi 0, %s89
    %s104 = sphi 0, %s90
    %s108 = sphi 0, %s108
    %s110 = sphi 0, %s108
    %s111 = sphi 0, %s110
    %s125 = sphi 0, %s111
    %s131 = sphi 0, %s133
    %s134 = sphi 0, %s131
    %s135 = sphi 0, %s134
    %s151 = sphi 0, %s135
  $region4: #{ab_mffe_forward.3} parent=0 // loop_header_branch
    %14 = sbr.rel (%p12) target = $region8
  $region5: #{ab_mffe_forward.3} parent=0 // loop_body
    %s16 = ssub.s32 %s11, 1
    %s17 = ssub.s32 %s11, 2
    %s18 = sadd.s32 %s11, 1
    %s19 = ssub.s32 %s11, %s18
    %p20 = scmp.eq.s32.totalorder %s19, 0
    %s22 = sadd.s32 %s21, 1
    %s23 = scalar_select %p20, %s21, %s22
    %p26 = pneg %p20
    %p27 = scmp.eq.s32.totalorder %s11, 1
    %p28 = por %p26, %p27
    %p29 = scmp.ne.s32.totalorder %s21, %s24
    %p30 = scmp.eq.s32.totalorder %s11, 0
    %p31 = por %p29, %p30
    %p32 = scmp.ne.s32.totalorder %s21, %s24
    %p33 = scmp.eq.s32.totalorder %s16, 1
    %p34 = por %p32, %p33
    %p35 = scmp.ne.s32.totalorder %s24, %s25
    %p36 = scmp.eq.s32.totalorder %s16, 0
    %p37 = por %p35, %p36
    %p38 = scmp.ne.s32.totalorder %s24, %s25
    %p39 = scmp.eq.s32.totalorder %s17, 1
    %p40 = por %p38, %p39
    %p42 = scmp.ne.s32.totalorder %s25, %s41
    %p43 = scmp.eq.s32.totalorder %s17, 0
    %p44 = por %p42, %p43
    %s46 = sadd.s32 %s45, 1
    %p49 = scmp.eq.s32.totalorder %s11, 1
    %p50 = scmp.ne.s32.totalorder %s45, %s47
    %p51 = scmp.eq.s32.totalorder %s11, 0
    %p52 = por %p50, %p51
    %p53 = scmp.ne.s32.totalorder %s45, %s47
    %p54 = scmp.eq.s32.totalorder %s16, 1
    %p55 = por %p53, %p54
    %p56 = scmp.ne.s32.totalorder %s47, %s48
    %p57 = scmp.eq.s32.totalorder %s16, 0
    %p58 = por %p56, %p57
    %p59 = scmp.ne.s32.totalorder %s47, %s48
    %p60 = scmp.eq.s32.totalorder %s17, 1
    %p61 = por %p59, %p60
    %p63 = scmp.ne.s32.totalorder %s48, %s62
    %p64 = scmp.eq.s32.totalorder %s17, 0
    %p65 = por %p63, %p64
    %s67 = sadd.s32 %s66, 1
    %p70 = scmp.eq.s32.totalorder %s11, 1
    %p71 = scmp.ne.s32.totalorder %s66, %s68
    %p72 = scmp.eq.s32.totalorder %s11, 0
    %p73 = por %p71, %p72
    %p74 = scmp.ne.s32.totalorder %s66, %s68
    %p75 = scmp.eq.s32.totalorder %s16, 1
    %p76 = por %p74, %p75
    %p77 = scmp.ne.s32.totalorder %s68, %s69
    %p78 = scmp.eq.s32.totalorder %s16, 0
    %p79 = por %p77, %p78
    %p80 = scmp.ne.s32.totalorder %s68, %s69
    %p81 = scmp.eq.s32.totalorder %s17, 1
    %p82 = por %p80, %p81
    %p84 = scmp.ne.s32.totalorder %s69, %s83
    %p85 = scmp.eq.s32.totalorder %s17, 0
    %p86 = por %p84, %p85
    %s88 = sadd.s32 %s87, 1
    %p91 = scmp.eq.s32.totalorder %s11, 1
    %p92 = scmp.ne.s32.totalorder %s87, %s89
    %p93 = scmp.eq.s32.totalorder %s11, 0
    %p94 = por %p92, %p93
    %p95 = scmp.ne.s32.totalorder %s87, %s89
    %p96 = scmp.eq.s32.totalorder %s16, 1
    %p97 = por %p95, %p96
    %p98 = scmp.ne.s32.totalorder %s89, %s90
    %p99 = scmp.eq.s32.totalorder %s16, 0
    %p100 = por %p98, %p99
    %p101 = scmp.ne.s32.totalorder %s89, %s90
    %p102 = scmp.eq.s32.totalorder %s17, 1
    %p103 = por %p101, %p102
    %p105 = scmp.ne.s32.totalorder %s90, %s104
    %p106 = scmp.eq.s32.totalorder %s17, 0
    %p107 = por %p105, %p106
    %s109 = sadd.s32 %s108, 1
    %p112 = scmp.eq.s32.totalorder %s11, 1
    %p113 = scmp.ne.s32.totalorder %s108, %s110
    %p114 = scmp.eq.s32.totalorder %s11, 0
    %p115 = por %p113, %p114
    %p116 = scmp.ne.s32.totalorder %s108, %s110
    %p117 = scmp.eq.s32.totalorder %s16, 1
    %p118 = por %p116, %p117
    %p119 = scmp.ne.s32.totalorder %s110, %s111
    %p120 = scmp.eq.s32.totalorder %s16, 0
    %p121 = por %p119, %p120
    %p122 = scmp.ne.s32.totalorder %s110, %s111
    %p123 = scmp.eq.s32.totalorder %s17, 1
    %p124 = por %p122, %p123
    %p126 = scmp.ne.s32.totalorder %s111, %s125
    %p127 = scmp.eq.s32.totalorder %s17, 0
    %p128 = por %p126, %p127
    %s129 = ssub.s32 %s11, %s18
    %p130 = scmp.eq.s32.totalorder %s129, 0
    %s132 = sadd.s32 %s131, 1
    %s133 = scalar_select %p130, %s131, %s132
    %p136 = pneg %p130
    %p137 = scmp.eq.s32.totalorder %s11, 1
    %p138 = por %p136, %p137
    %p139 = scmp.ne.s32.totalorder %s131, %s134
    %p140 = scmp.eq.s32.totalorder %s11, 0
    %p141 = por %p139, %p140
    %p142 = scmp.ne.s32.totalorder %s131, %s134
    %p143 = scmp.eq.s32.totalorder %s16, 1
    %p144 = por %p142, %p143
    %p145 = scmp.ne.s32.totalorder %s134, %s135
    %p146 = scmp.eq.s32.totalorder %s16, 0
    %p147 = por %p145, %p146
    %p148 = scmp.ne.s32.totalorder %s134, %s135
    %p149 = scmp.eq.s32.totalorder %s17, 1
    %p150 = por %p148, %p149
    %p152 = scmp.ne.s32.totalorder %s135, %s151
    %p153 = scmp.eq.s32.totalorder %s17, 0
    %p154 = por %p152, %p153
    %p155 = scmp.le.s32.totalorder 1, %s11
    %p156 = scmp.lt.s32.totalorder %s11, 3
    %p157 = pnand %p155, %p156
    %p158 = pneg %p157
    // Predicated region
    $region9: #{ab_mffe_forward.3} parent=5 // pred_check
      _
    $region10: #{ab_mffe_forward.3} parent=5 // pred_check_branch
      %160 = sbr.rel (%p157) target = $region12
    $region11: #{ab_mffe_forward.3} parent=5 // pred_region
      %s161 = ssub.s32 %s11, 1
      // Predicated region
      $region13: #{ab_mffe_forward.3} parent=11 // pred_check
        %p162 = pneg %p58
      $region14: #{ab_mffe_forward.3} parent=11 // pred_check_branch
        %164 = sbr.rel (%p162) target = $region16
      $region15: #{ab_mffe_forward.3} parent=11 // pred_region
        _
      $region16: #{ab_mffe_forward.3} parent=11 // pred_fallthru
        _
      // Predicated region
      $region17: #{ab_mffe_forward.3} parent=11 // pred_check
        %p165 = pneg %p79
      $region18: #{ab_mffe_forward.3} parent=11 // pred_check_branch
        %167 = sbr.rel (%p165) target = $region20
      $region19: #{ab_mffe_forward.3} parent=11 // pred_region
        _
      $region20: #{ab_mffe_forward.3} parent=11 // pred_fallthru
        _
      // Predicated region
      $region21: #{ab_mffe_forward.3} parent=11 // pred_check
        %p168 = pneg %p100
      $region22: #{ab_mffe_forward.3} parent=11 // pred_check_branch
        %170 = sbr.rel (%p168) target = $region24
      $region23: #{ab_mffe_forward.3} parent=11 // pred_region
        _
      $region24: #{ab_mffe_forward.3} parent=11 // pred_fallthru
        _
      // Predicated region
      $region25: #{ab_mffe_forward.3} parent=11 // pred_check
        %p171 = pneg %p121
      $region26: #{ab_mffe_forward.3} parent=11 // pred_check_branch
        %173 = sbr.rel (%p171) target = $region28
      $region27: #{ab_mffe_forward.3} parent=11 // pred_region
        _
      $region28: #{ab_mffe_forward.3} parent=11 // pred_fallthru
        _
    $region12: #{ab_mffe_forward.3} parent=5 // pred_fallthru
      _
    %p174 = scmp.lt.s32.totalorder %s11, 2
    // Predicated region
    $region29: #{ab_mffe_forward.3} parent=5 // pred_check
      %p175 = pneg %p174
    $region30: #{ab_mffe_forward.3} parent=5 // pred_check_branch
      %177 = sbr.rel (%p175) target = $region32
    $region31: #{ab_mffe_forward.3} parent=5 // pred_region
      // Predicated region
      $region33: #{ab_mffe_forward.3} parent=31 // pred_check
        %p178 = pneg %p31
      $region34: #{ab_mffe_forward.3} parent=31 // pred_check_branch
        %180 = sbr.rel (%p178) target = $region36
      $region35: #{ab_mffe_forward.3} parent=31 // pred_region
        %p181 = scmp.lt.s32.totalorder %s11, 1
        %s182 = scalar_select %p181, %s11, 1
        %s183 = smul.addr %s182, 3
        %s184 = smul.addr %s183, 4
        %s185 = scalar_lea.vmem %s0, %s184
      $region36: #{ab_mffe_forward.3} parent=31 // pred_fallthru
        _
    $region32: #{ab_mffe_forward.3} parent=5 // pred_fallthru
      _
    %p186 = scmp.le.s32.totalorder 1, %s11
    %p187 = scmp.lt.s32.totalorder %s11, 3
    %p188 = pnand %p186, %p187
    %p189 = pneg %p188
    // Predicated region
    $region37: #{ab_mffe_forward.3} parent=5 // pred_check
      _
    $region38: #{ab_mffe_forward.3} parent=5 // pred_check_branch
      %191 = sbr.rel (%p188) target = $region40
    $region39: #{ab_mffe_forward.3} parent=5 // pred_region
      %s192 = ssub.s32 %s11, 1
      %p193 = scmp.lt.s32.totalorder %s16, 1
      %s194 = scalar_select %p193, %s16, 1
      %s195 = smul.addr %s194, 3
      %s196 = smul.addr %s195, 4
      %s197 = scalar_lea.vmem %s0, %s196
      %p198 = pneg %p37
      %p199 = pneg %p34
      %p200 = pneg %p58
      %p201 = pneg %p55
      %p202 = pneg %p79
      %p203 = pneg %p76
      %p204 = pneg %p100
      %p205 = pneg %p97
      %p206 = pneg %p121
      %p207 = pneg %p118
      %p208 = pneg %p147
      %p209 = pneg %p144
      %p210 = scmp.lt.s32.totalorder %s16, 1
      %s211 = scalar_select %p210, %s16, 1
      %s212 = smul.addr %s211, 3
      %s213 = smul.addr %s212, 4
      %s214 = scalar_lea.vmem %s5, %s213
      %p215 = scmp.lt.s32.totalorder %s16, 1
      %s216 = scalar_select %p215, %s16, 1
      %s217 = smul.addr %s216, 3
      %s218 = smul.addr %s217, 4
      %s219 = scalar_lea.vmem %s0, %s218
      %p220 = scmp.lt.s32.totalorder %s16, 1
      %s221 = scalar_select %p220, %s16, 1
      %s222 = smul.addr %s221, 3
      %s223 = smul.addr %s222, 4
      %s224 = scalar_lea.vmem %s5, %s223
      %v225 = vld [vmem:[%s219] sm:$0xff]
      %v226 = vld [vmem:[%s219 + $0x8] sm:$0xf]
      %v227 = vld [vmem:[%s1] sm:$0xf]
      %s228 = scalar_lea.vmem %s1, 4
      %v229 = vld [vmem:[%s228] sm:$0xf]
      %v232 = vcombine.high %v225, %v225
      %233 = vrot.lane.b32.xlu0 %v225, 127
      %v234 = vpop.permute.xlu0 %233
      %235 = vrot.lane.b32.xlu0 %v232, 127
      %v236 = vpop.permute.xlu0 %235
      %237 = vrot.lane.b32.xlu0 %v226, 127
      %v238 = vpop.permute.xlu0 %237
      %vm239 = vcmask 1039360
      %v240 = vsel %vm239, %v234, %v236
      %v241 = vsel %vm239, %v236, %v238
      %vm242 = vcmask 31744
      %v244 = vsel %vm242, %v229, 0
      %vm246 = vcmask 1043456
      %v247 = vsel %vm246, %v240, 0
      %v249 = vsel %vm246, %v241, 0
      %v251 = vsel %vm246, %v238, 0
      %253 = vmatprep.subr.mxu0 %v249
      %254 = vmatpush1.msra.mxu0 %v247
      %255 = vmatprep.subr.mxu0 0.0
      %256 = vmatpush1.msra.mxu0 0.0
      %257 = vmatprep.subr.mxu0 0.0
      %258 = vmatpush1.msra.mxu0 0.0
      %259 = vmatprep.subr.mxu0 0.0
      %260 = vmatpush1.msra.mxu0 0.0
      %261 = vmatprep.subr.mxu0 0.0
      %262 = vmatpush1.msra.mxu0 0.0
      %263 = vmatprep.subr.mxu0 0.0
      %264 = vmatpush1.msra.mxu0 0.0
      %265 = vmatprep.subr.mxu0 0.0
      %266 = vmatpush1.msra.mxu0 0.0
      %267 = vmatprep.subr.mxu0 0.0
      %268 = vmatpush1.msra.mxu0 0.0
      %269 = vmatprep.subr.mxu0 0.0
      %270 = vmatpush1.msra.mxu0 0.0
      %271 = vmatprep.subr.mxu0 0.0
      %272 = vmatpush1.msra.mxu0 0.0
      %273 = vmatprep.subr.mxu0 0.0
      %274 = vmatpush1.msra.mxu0 0.0
      %275 = vmatprep.subr.mxu0 0.0
      %276 = vmatpush1.msra.mxu0 0.0
      %277 = vmatprep.subr.mxu0 0.0
      %278 = vmatpush1.msra.mxu0 0.0
      %279 = vmatprep.subr.mxu0 0.0
      %280 = vmatpush1.msra.mxu0 0.0
      %281 = vmatprep.subr.mxu0 0.0
      %282 = vmatpush1.msra.mxu0 0.0
      %283 = vmatprep.subr.mxu0 0.0
      %284 = vmatpush1.msra.mxu0 0.0
      %285 = vmatprep.subr.mxu0 0.0
      %286 = vmatpush1.msra.mxu0 0.0
      %287 = vmatprep.subr.mxu0 0.0
      %288 = vmatpush1.msra.mxu0 0.0
      %289 = vmatprep.subr.mxu0 0.0
      %290 = vmatpush1.msra.mxu0 0.0
      %291 = vmatprep.subr.mxu0 0.0
      %292 = vmatpush1.msra.mxu0 0.0
      %293 = vmatprep.subr.mxu0 0.0
      %294 = vmatpush1.msra.mxu0 0.0
      %295 = vmatprep.subr.mxu0 0.0
      %296 = vmatpush1.msra.mxu0 0.0
      %297 = vmatprep.subr.mxu0 0.0
      %298 = vmatpush1.msra.mxu0 0.0
      %299 = vmatprep.subr.mxu0 0.0
      %300 = vmatpush1.msra.mxu0 0.0
      %301 = vmatprep.subr.mxu0 0.0
      %302 = vmatpush1.msra.mxu0 0.0
      %303 = vmatprep.subr.mxu0 0.0
      %304 = vmatpush1.msra.mxu0 0.0
      %305 = vmatprep.subr.mxu0 0.0
      %306 = vmatpush1.msra.mxu0 0.0
      %307 = vmatprep.subr.mxu0 0.0
      %308 = vmatpush1.msra.mxu0 0.0
      %309 = vmatprep.subr.mxu0 0.0
      %310 = vmatpush1.msra.mxu0 0.0
      %311 = vmatprep.subr.mxu0 0.0
      %312 = vmatpush1.msra.mxu0 0.0
      %313 = vmatprep.subr.mxu0 0.0
      %314 = vmatpush1.msra.mxu0 0.0
      %315 = vmatprep.subr.mxu0 0.0
      %316 = vmatpush1.msra.mxu0 0.0
      %317 = vmatprep.mubr.f32.mxu0 0.0
      %318 = vmatmul.mubr.f32.gmra.mrb[0].mxu0 %v244
      %v319 = vpop.f32.mrb[0].mxu0
      %v320 = vadd.f32 0.0, %v319
      %v321 = vpop.f32.mrb[0].mxu0
      %v322 = vadd.f32 0.0, %v321
      %323 = vdwg.mxu0
      %324 = vmatprep.subr.mxu0 0.0
      %325 = vmatpush1.msra.mxu0 %v251
      %326 = vmatprep.subr.mxu0 0.0
      %327 = vmatpush1.msra.mxu0 0.0
      %328 = vmatprep.subr.mxu0 0.0
      %329 = vmatpush1.msra.mxu0 0.0
      %330 = vmatprep.subr.mxu0 0.0
      %331 = vmatpush1.msra.mxu0 0.0
      %332 = vmatprep.subr.mxu0 0.0
      %333 = vmatpush1.msra.mxu0 0.0
      %334 = vmatprep.subr.mxu0 0.0
      %335 = vmatpush1.msra.mxu0 0.0
      %336 = vmatprep.subr.mxu0 0.0
      %337 = vmatpush1.msra.mxu0 0.0
      %338 = vmatprep.subr.mxu0 0.0
      %339 = vmatpush1.msra.mxu0 0.0
      %340 = vmatprep.subr.mxu0 0.0
      %341 = vmatpush1.msra.mxu0 0.0
      %342 = vmatprep.subr.mxu0 0.0
      %343 = vmatpush1.msra.mxu0 0.0
      %344 = vmatprep.subr.mxu0 0.0
      %345 = vmatpush1.msra.mxu0 0.0
      %346 = vmatprep.subr.mxu0 0.0
      %347 = vmatpush1.msra.mxu0 0.0
      %348 = vmatprep.subr.mxu0 0.0
      %349 = vmatpush1.msra.mxu0 0.0
      %350 = vmatprep.subr.mxu0 0.0
      %351 = vmatpush1.msra.mxu0 0.0
      %352 = vmatprep.subr.mxu0 0.0
      %353 = vmatpush1.msra.mxu0 0.0
      %354 = vmatprep.subr.mxu0 0.0
      %355 = vmatpush1.msra.mxu0 0.0
      %356 = vmatprep.subr.mxu0 0.0
      %357 = vmatpush1.msra.mxu0 0.0
      %358 = vmatprep.subr.mxu0 0.0
      %359 = vmatpush1.msra.mxu0 0.0
      %360 = vmatprep.subr.mxu0 0.0
      %361 = vmatpush1.msra.mxu0 0.0
      %362 = vmatprep.subr.mxu0 0.0
      %363 = vmatpush1.msra.mxu0 0.0
      %364 = vmatprep.subr.mxu0 0.0
      %365 = vmatpush1.msra.mxu0 0.0
      %366 = vmatprep.subr.mxu0 0.0
      %367 = vmatpush1.msra.mxu0 0.0
      %368 = vmatprep.subr.mxu0 0.0
      %369 = vmatpush1.msra.mxu0 0.0
      %370 = vmatprep.subr.mxu0 0.0
      %371 = vmatpush1.msra.mxu0 0.0
      %372 = vmatprep.subr.mxu0 0.0
      %373 = vmatpush1.msra.mxu0 0.0
      %374 = vmatprep.subr.mxu0 0.0
      %375 = vmatpush1.msra.mxu0 0.0
      %376 = vmatprep.subr.mxu0 0.0
      %377 = vmatpush1.msra.mxu0 0.0
      %378 = vmatprep.subr.mxu0 0.0
      %379 = vmatpush1.msra.mxu0 0.0
      %380 = vmatprep.subr.mxu0 0.0
      %381 = vmatpush1.msra.mxu0 0.0
      %382 = vmatprep.subr.mxu0 0.0
      %383 = vmatpush1.msra.mxu0 0.0
      %384 = vmatprep.subr.mxu0 0.0
      %385 = vmatpush1.msra.mxu0 0.0
      %386 = vmatprep.subr.mxu0 0.0
      %387 = vmatpush1.msra.mxu0 0.0
      %388 = vmatprep.mubr.f32.mxu0 0.0
      %389 = vmatmul.mubr.f32.gmra.mrb[0].mxu0 %v244
      %v390 = vpop.f32.mrb[0].mxu0
      %v391 = vadd.f32 0.0, %v390
      %v392 = vpop.f32.mrb[0].mxu0
      %393 = vdwg.mxu0
      %v395 = vsel %vm242, %v227, 0
      %v397 = vsel %vm246, %v225, 0
      %v399 = vsel %vm246, %v232, 0
      %v401 = vsel %vm246, %v226, 0
      %403 = vmatprep.subr.mxu0 %v399
      %404 = vmatpush1.msra.mxu0 %v397
      %405 = vmatprep.subr.mxu0 0.0
      %406 = vmatpush1.msra.mxu0 0.0
      %407 = vmatprep.subr.mxu0 0.0
      %408 = vmatpush1.msra.mxu0 0.0
      %409 = vmatprep.subr.mxu0 0.0
      %410 = vmatpush1.msra.mxu0 0.0
      %411 = vmatprep.subr.mxu0 0.0
      %412 = vmatpush1.msra.mxu0 0.0
      %413 = vmatprep.subr.mxu0 0.0
      %414 = vmatpush1.msra.mxu0 0.0
      %415 = vmatprep.subr.mxu0 0.0
      %416 = vmatpush1.msra.mxu0 0.0
      %417 = vmatprep.subr.mxu0 0.0
      %418 = vmatpush1.msra.mxu0 0.0
      %419 = vmatprep.subr.mxu0 0.0
      %420 = vmatpush1.msra.mxu0 0.0
      %421 = vmatprep.subr.mxu0 0.0
      %422 = vmatpush1.msra.mxu0 0.0
      %423 = vmatprep.subr.mxu0 0.0
      %424 = vmatpush1.msra.mxu0 0.0
      %425 = vmatprep.subr.mxu0 0.0
      %426 = vmatpush1.msra.mxu0 0.0
      %427 = vmatprep.subr.mxu0 0.0
      %428 = vmatpush1.msra.mxu0 0.0
      %429 = vmatprep.subr.mxu0 0.0
      %430 = vmatpush1.msra.mxu0 0.0
      %431 = vmatprep.subr.mxu0 0.0
      %432 = vmatpush1.msra.mxu0 0.0
      %433 = vmatprep.subr.mxu0 0.0
      %434 = vmatpush1.msra.mxu0 0.0
      %435 = vmatprep.subr.mxu0 0.0
      %436 = vmatpush1.msra.mxu0 0.0
      %437 = vmatprep.subr.mxu0 0.0
      %438 = vmatpush1.msra.mxu0 0.0
      %439 = vmatprep.subr.mxu0 0.0
      %440 = vmatpush1.msra.mxu0 0.0
      %441 = vmatprep.subr.mxu0 0.0
      %442 = vmatpush1.msra.mxu0 0.0
      %443 = vmatprep.subr.mxu0 0.0
      %444 = vmatpush1.msra.mxu0 0.0
      %445 = vmatprep.subr.mxu0 0.0
      %446 = vmatpush1.msra.mxu0 0.0
      %447 = vmatprep.subr.mxu0 0.0
      %448 = vmatpush1.msra.mxu0 0.0
      %449 = vmatprep.subr.mxu0 0.0
      %450 = vmatpush1.msra.mxu0 0.0
      %451 = vmatprep.subr.mxu0 0.0
      %452 = vmatpush1.msra.mxu0 0.0
      %453 = vmatprep.subr.mxu0 0.0
      %454 = vmatpush1.msra.mxu0 0.0
      %455 = vmatprep.subr.mxu0 0.0
      %456 = vmatpush1.msra.mxu0 0.0
      %457 = vmatprep.subr.mxu0 0.0
      %458 = vmatpush1.msra.mxu0 0.0
      %459 = vmatprep.subr.mxu0 0.0
      %460 = vmatpush1.msra.mxu0 0.0
      %461 = vmatprep.subr.mxu0 0.0
      %462 = vmatpush1.msra.mxu0 0.0
      %463 = vmatprep.subr.mxu0 0.0
      %464 = vmatpush1.msra.mxu0 0.0
      %465 = vmatprep.subr.mxu0 0.0
      %466 = vmatpush1.msra.mxu0 0.0
      %467 = vmatprep.mubr.f32.mxu0 0.0
      %468 = vmatmul.mubr.f32.gmra.mrb[0].mxu0 %v395
      %v469 = vpop.f32.mrb[0].mxu0
      %v470 = vadd.f32 %v320, %v469
      %v471 = vpop.f32.mrb[0].mxu0
      %v472 = vadd.f32 %v322, %v471
      %473 = vdwg.mxu0
      %474 = vmatprep.subr.mxu0 0.0
      %475 = vmatpush1.msra.mxu0 %v401
      %476 = vmatprep.subr.mxu0 0.0
      %477 = vmatpush1.msra.mxu0 0.0
      %478 = vmatprep.subr.mxu0 0.0
      %479 = vmatpush1.msra.mxu0 0.0
      %480 = vmatprep.subr.mxu0 0.0
      %481 = vmatpush1.msra.mxu0 0.0
      %482 = vmatprep.subr.mxu0 0.0
      %483 = vmatpush1.msra.mxu0 0.0
      %484 = vmatprep.subr.mxu0 0.0
      %485 = vmatpush1.msra.mxu0 0.0
      %486 = vmatprep.subr.mxu0 0.0
      %487 = vmatpush1.msra.mxu0 0.0
      %488 = vmatprep.subr.mxu0 0.0
      %489 = vmatpush1.msra.mxu0 0.0
      %490 = vmatprep.subr.mxu0 0.0
      %491 = vmatpush1.msra.mxu0 0.0
      %492 = vmatprep.subr.mxu0 0.0
      %493 = vmatpush1.msra.mxu0 0.0
      %494 = vmatprep.subr.mxu0 0.0
      %495 = vmatpush1.msra.mxu0 0.0
      %496 = vmatprep.subr.mxu0 0.0
      %497 = vmatpush1.msra.mxu0 0.0
      %498 = vmatprep.subr.mxu0 0.0
      %499 = vmatpush1.msra.mxu0 0.0
      %500 = vmatprep.subr.mxu0 0.0
      %501 = vmatpush1.msra.mxu0 0.0
      %502 = vmatprep.subr.mxu0 0.0
      %503 = vmatpush1.msra.mxu0 0.0
      %504 = vmatprep.subr.mxu0 0.0
      %505 = vmatpush1.msra.mxu0 0.0
      %506 = vmatprep.subr.mxu0 0.0
      %507 = vmatpush1.msra.mxu0 0.0
      %508 = vmatprep.subr.mxu0 0.0
      %509 = vmatpush1.msra.mxu0 0.0
      %510 = vmatprep.subr.mxu0 0.0
      %511 = vmatpush1.msra.mxu0 0.0
      %512 = vmatprep.subr.mxu0 0.0
      %513 = vmatpush1.msra.mxu0 0.0
      %514 = vmatprep.subr.mxu0 0.0
      %515 = vmatpush1.msra.mxu0 0.0
      %516 = vmatprep.subr.mxu0 0.0
      %517 = vmatpush1.msra.mxu0 0.0
      %518 = vmatprep.subr.mxu0 0.0
      %519 = vmatpush1.msra.mxu0 0.0
      %520 = vmatprep.subr.mxu0 0.0
      %521 = vmatpush1.msra.mxu0 0.0
      %522 = vmatprep.subr.mxu0 0.0
      %523 = vmatpush1.msra.mxu0 0.0
      %524 = vmatprep.subr.mxu0 0.0
      %525 = vmatpush1.msra.mxu0 0.0
      %526 = vmatprep.subr.mxu0 0.0
      %527 = vmatpush1.msra.mxu0 0.0
      %528 = vmatprep.subr.mxu0 0.0
      %529 = vmatpush1.msra.mxu0 0.0
      %530 = vmatprep.subr.mxu0 0.0
      %531 = vmatpush1.msra.mxu0 0.0
      %532 = vmatprep.subr.mxu0 0.0
      %533 = vmatpush1.msra.mxu0 0.0
      %534 = vmatprep.subr.mxu0 0.0
      %535 = vmatpush1.msra.mxu0 0.0
      %536 = vmatprep.subr.mxu0 0.0
      %537 = vmatpush1.msra.mxu0 0.0
      %538 = vmatprep.mubr.f32.mxu0 0.0
      %539 = vmatmul.mubr.f32.gmra.mrb[0].mxu0 %v395
      %v540 = vpop.f32.mrb[0].mxu0
      %v541 = vadd.f32 %v391, %v540
      %v542 = vpop.f32.mrb[0].mxu0
      %543 = vdwg.mxu0
      %s544 = scalar_lea.vmem %s1, 8
      %v545 = vld [vmem:[%s544] sm:$0xf]
      %546 = vrot.lane.b32.xlu0 %v225, 126
      %v547 = vpop.permute.xlu0 %546
      %548 = vrot.lane.b32.xlu0 %v232, 126
      %v549 = vpop.permute.xlu0 %548
      %550 = vrot.lane.b32.xlu0 %v226, 126
      %v551 = vpop.permute.xlu0 %550
      %vm552 = vcmask 1031168
      %v553 = vsel %vm552, %v547, %v549
      %v554 = vsel %vm552, %v549, %v551
      %v556 = vsel %vm242, %v545, 0
      %v558 = vsel %vm246, %v553, 0
      %v560 = vsel %vm246, %v554, 0
      %v562 = vsel %vm246, %v551, 0
      %564 = vmatprep.subr.mxu0 %v560
      %565 = vmatpush1.msra.mxu0 %v558
      %566 = vmatprep.subr.mxu0 0.0
      %567 = vmatpush1.msra.mxu0 0.0
      %568 = vmatprep.subr.mxu0 0.0
      %569 = vmatpush1.msra.mxu0 0.0
      %570 = vmatprep.subr.mxu0 0.0
      %571 = vmatpush1.msra.mxu0 0.0
      %572 = vmatprep.subr.mxu0 0.0
      %573 = vmatpush1.msra.mxu0 0.0
      %574 = vmatprep.subr.mxu0 0.0
      %575 = vmatpush1.msra.mxu0 0.0
      %576 = vmatprep.subr.mxu0 0.0
      %577 = vmatpush1.msra.mxu0 0.0
      %578 = vmatprep.subr.mxu0 0.0
      %579 = vmatpush1.msra.mxu0 0.0
      %580 = vmatprep.subr.mxu0 0.0
      %581 = vmatpush1.msra.mxu0 0.0
      %582 = vmatprep.subr.mxu0 0.0
      %583 = vmatpush1.msra.mxu0 0.0
      %584 = vmatprep.subr.mxu0 0.0
      %585 = vmatpush1.msra.mxu0 0.0
      %586 = vmatprep.subr.mxu0 0.0
      %587 = vmatpush1.msra.mxu0 0.0
      %588 = vmatprep.subr.mxu0 0.0
      %589 = vmatpush1.msra.mxu0 0.0
      %590 = vmatprep.subr.mxu0 0.0
      %591 = vmatpush1.msra.mxu0 0.0
      %592 = vmatprep.subr.mxu0 0.0
      %593 = vmatpush1.msra.mxu0 0.0
      %594 = vmatprep.subr.mxu0 0.0
      %595 = vmatpush1.msra.mxu0 0.0
      %596 = vmatprep.subr.mxu0 0.0
      %597 = vmatpush1.msra.mxu0 0.0
      %598 = vmatprep.subr.mxu0 0.0
      %599 = vmatpush1.msra.mxu0 0.0
      %600 = vmatprep.subr.mxu0 0.0
      %601 = vmatpush1.msra.mxu0 0.0
      %602 = vmatprep.subr.mxu0 0.0
      %603 = vmatpush1.msra.mxu0 0.0
      %604 = vmatprep.subr.mxu0 0.0
      %605 = vmatpush1.msra.mxu0 0.0
      %606 = vmatprep.subr.mxu0 0.0
      %607 = vmatpush1.msra.mxu0 0.0
      %608 = vmatprep.subr.mxu0 0.0
      %609 = vmatpush1.msra.mxu0 0.0
      %610 = vmatprep.subr.mxu0 0.0
      %611 = vmatpush1.msra.mxu0 0.0
      %612 = vmatprep.subr.mxu0 0.0
      %613 = vmatpush1.msra.mxu0 0.0
      %614 = vmatprep.subr.mxu0 0.0
      %615 = vmatpush1.msra.mxu0 0.0
      %616 = vmatprep.subr.mxu0 0.0
      %617 = vmatpush1.msra.mxu0 0.0
      %618 = vmatprep.subr.mxu0 0.0
      %619 = vmatpush1.msra.mxu0 0.0
      %620 = vmatprep.subr.mxu0 0.0
      %621 = vmatpush1.msra.mxu0 0.0
      %622 = vmatprep.subr.mxu0 0.0
      %623 = vmatpush1.msra.mxu0 0.0
      %624 = vmatprep.subr.mxu0 0.0
      %625 = vmatpush1.msra.mxu0 0.0
      %626 = vmatprep.subr.mxu0 0.0
      %627 = vmatpush1.msra.mxu0 0.0
      %628 = vmatprep.mubr.f32.mxu0 0.0
      %629 = vmatmul.mubr.f32.gmra.mrb[0].mxu0 %v556
      %v630 = vpop.f32.mrb[0].mxu0
      %v631 = vadd.f32 0.0, %v630
      %v632 = vpop.f32.mrb[0].mxu0
      %v633 = vadd.f32 0.0, %v632
      %634 = vdwg.mxu0
      %635 = vmatprep.subr.mxu0 0.0
      %636 = vmatpush1.msra.mxu0 %v562
      %637 = vmatprep.subr.mxu0 0.0
      %638 = vmatpush1.msra.mxu0 0.0
      %639 = vmatprep.subr.mxu0 0.0
      %640 = vmatpush1.msra.mxu0 0.0
      %641 = vmatprep.subr.mxu0 0.0
      %642 = vmatpush1.msra.mxu0 0.0
      %643 = vmatprep.subr.mxu0 0.0
      %644 = vmatpush1.msra.mxu0 0.0
      %645 = vmatprep.subr.mxu0 0.0
      %646 = vmatpush1.msra.mxu0 0.0
      %647 = vmatprep.subr.mxu0 0.0
      %648 = vmatpush1.msra.mxu0 0.0
      %649 = vmatprep.subr.mxu0 0.0
      %650 = vmatpush1.msra.mxu0 0.0
      %651 = vmatprep.subr.mxu0 0.0
      %652 = vmatpush1.msra.mxu0 0.0
      %653 = vmatprep.subr.mxu0 0.0
      %654 = vmatpush1.msra.mxu0 0.0
      %655 = vmatprep.subr.mxu0 0.0
      %656 = vmatpush1.msra.mxu0 0.0
      %657 = vmatprep.subr.mxu0 0.0
      %658 = vmatpush1.msra.mxu0 0.0
      %659 = vmatprep.subr.mxu0 0.0
      %660 = vmatpush1.msra.mxu0 0.0
      %661 = vmatprep.subr.mxu0 0.0
      %662 = vmatpush1.msra.mxu0 0.0
      %663 = vmatprep.subr.mxu0 0.0
      %664 = vmatpush1.msra.mxu0 0.0
      %665 = vmatprep.subr.mxu0 0.0
      %666 = vmatpush1.msra.mxu0 0.0
      %667 = vmatprep.subr.mxu0 0.0
      %668 = vmatpush1.msra.mxu0 0.0
      %669 = vmatprep.subr.mxu0 0.0
      %670 = vmatpush1.msra.mxu0 0.0
      %671 = vmatprep.subr.mxu0 0.0
      %672 = vmatpush1.msra.mxu0 0.0
      %673 = vmatprep.subr.mxu0 0.0
      %674 = vmatpush1.msra.mxu0 0.0
      %675 = vmatprep.subr.mxu0 0.0
      %676 = vmatpush1.msra.mxu0 0.0
      %677 = vmatprep.subr.mxu0 0.0
      %678 = vmatpush1.msra.mxu0 0.0
      %679 = vmatprep.subr.mxu0 0.0
      %680 = vmatpush1.msra.mxu0 0.0
      %681 = vmatprep.subr.mxu0 0.0
      %682 = vmatpush1.msra.mxu0 0.0
      %683 = vmatprep.subr.mxu0 0.0
      %684 = vmatpush1.msra.mxu0 0.0
      %685 = vmatprep.subr.mxu0 0.0
      %686 = vmatpush1.msra.mxu0 0.0
      %687 = vmatprep.subr.mxu0 0.0
      %688 = vmatpush1.msra.mxu0 0.0
      %689 = vmatprep.subr.mxu0 0.0
      %690 = vmatpush1.msra.mxu0 0.0
      %691 = vmatprep.subr.mxu0 0.0
      %692 = vmatpush1.msra.mxu0 0.0
      %693 = vmatprep.subr.mxu0 0.0
      %694 = vmatpush1.msra.mxu0 0.0
      %695 = vmatprep.subr.mxu0 0.0
      %696 = vmatpush1.msra.mxu0 0.0
      %697 = vmatprep.subr.mxu0 0.0
      %698 = vmatpush1.msra.mxu0 0.0
      %699 = vmatprep.mubr.f32.mxu0 0.0
      %700 = vmatmul.mubr.f32.gmra.mrb[0].mxu0 %v556
      %v701 = vpop.f32.mrb[0].mxu0
      %v702 = vadd.f32 0.0, %v701
      %v703 = vpop.f32.mrb[0].mxu0
      %704 = vdwg.mxu0
      %v705 = vadd.f32 %v470, %v631
      %v706 = vadd.f32 %v472, %v633
      %v707 = vadd.f32 %v541, %v702
      %s708 = scalar_lea.vmem %s1, 12
      %v709 = vld [vmem:[%s708] sm:$0xf]
      %710 = vrot.lane.b32.xlu0 %v225, 110
      %v711 = vpop.permute.xlu0 %710
      %712 = vrot.lane.b32.xlu0 %v232, 110
      %v713 = vpop.permute.xlu0 %712
      %714 = vrot.lane.b32.xlu0 %v226, 110
      %v715 = vpop.permute.xlu0 %714
      %vm716 = vcmask 900096
      %v717 = vsel %vm716, %v711, %v713
      %v718 = vsel %vm716, %v713, %v715
      %v720 = vsel %vm242, %v709, 0
      %v722 = vsel %vm246, %v717, 0
      %v724 = vsel %vm246, %v718, 0
      %v726 = vsel %vm246, %v715, 0
      %728 = vmatprep.subr.mxu0 %v724
      %729 = vmatpush1.msra.mxu0 %v722
      %730 = vmatprep.subr.mxu0 0.0
      %731 = vmatpush1.msra.mxu0 0.0
      %732 = vmatprep.subr.mxu0 0.0
      %733 = vmatpush1.msra.mxu0 0.0
      %734 = vmatprep.subr.mxu0 0.0
      %735 = vmatpush1.msra.mxu0 0.0
      %736 = vmatprep.subr.mxu0 0.0
      %737 = vmatpush1.msra.mxu0 0.0
      %738 = vmatprep.subr.mxu0 0.0
      %739 = vmatpush1.msra.mxu0 0.0
      %740 = vmatprep.subr.mxu0 0.0
      %741 = vmatpush1.msra.mxu0 0.0
      %742 = vmatprep.subr.mxu0 0.0
      %743 = vmatpush1.msra.mxu0 0.0
      %744 = vmatprep.subr.mxu0 0.0
      %745 = vmatpush1.msra.mxu0 0.0
      %746 = vmatprep.subr.mxu0 0.0
      %747 = vmatpush1.msra.mxu0 0.0
      %748 = vmatprep.subr.mxu0 0.0
      %749 = vmatpush1.msra.mxu0 0.0
      %750 = vmatprep.subr.mxu0 0.0
      %751 = vmatpush1.msra.mxu0 0.0
      %752 = vmatprep.subr.mxu0 0.0
      %753 = vmatpush1.msra.mxu0 0.0
      %754 = vmatprep.subr.mxu0 0.0
      %755 = vmatpush1.msra.mxu0 0.0
      %756 = vmatprep.subr.mxu0 0.0
      %757 = vmatpush1.msra.mxu0 0.0
      %758 = vmatprep.subr.mxu0 0.0
      %759 = vmatpush1.msra.mxu0 0.0
      %760 = vmatprep.subr.mxu0 0.0
      %761 = vmatpush1.msra.mxu0 0.0
      %762 = vmatprep.subr.mxu0 0.0
      %763 = vmatpush1.msra.mxu0 0.0
      %764 = vmatprep.subr.mxu0 0.0
      %765 = vmatpush1.msra.mxu0 0.0
      %766 = vmatprep.subr.mxu0 0.0
      %767 = vmatpush1.msra.mxu0 0.0
      %768 = vmatprep.subr.mxu0 0.0
      %769 = vmatpush1.msra.mxu0 0.0
      %770 = vmatprep.subr.mxu0 0.0
      %771 = vmatpush1.msra.mxu0 0.0
      %772 = vmatprep.subr.mxu0 0.0
      %773 = vmatpush1.msra.mxu0 0.0
      %774 = vmatprep.subr.mxu0 0.0
      %775 = vmatpush1.msra.mxu0 0.0
      %776 = vmatprep.subr.mxu0 0.0
      %777 = vmatpush1.msra.mxu0 0.0
      %778 = vmatprep.subr.mxu0 0.0
      %779 = vmatpush1.msra.mxu0 0.0
      %780 = vmatprep.subr.mxu0 0.0
      %781 = vmatpush1.msra.mxu0 0.0
      %782 = vmatprep.subr.mxu0 0.0
      %783 = vmatpush1.msra.mxu0 0.0
      %784 = vmatprep.subr.mxu0 0.0
      %785 = vmatpush1.msra.mxu0 0.0
      %786 = vmatprep.subr.mxu0 0.0
      %787 = vmatpush1.msra.mxu0 0.0
      %788 = vmatprep.subr.mxu0 0.0
      %789 = vmatpush1.msra.mxu0 0.0
      %790 = vmatprep.subr.mxu0 0.0
      %791 = vmatpush1.msra.mxu0 0.0
      %792 = vmatprep.mubr.f32.mxu0 0.0
      %793 = vmatmul.mubr.f32.gmra.mrb[0].mxu0 %v720
      %v794 = vpop.f32.mrb[0].mxu0
      %v795 = vadd.f32 0.0, %v794
      %v796 = vpop.f32.mrb[0].mxu0
      %v797 = vadd.f32 0.0, %v796
      %798 = vdwg.mxu0
      %799 = vmatprep.subr.mxu0 0.0
      %800 = vmatpush1.msra.mxu0 %v726
      %801 = vmatprep.subr.mxu0 0.0
      %802 = vmatpush1.msra.mxu0 0.0
      %803 = vmatprep.subr.mxu0 0.0
      %804 = vmatpush1.msra.mxu0 0.0
      %805 = vmatprep.subr.mxu0 0.0
      %806 = vmatpush1.msra.mxu0 0.0
      %807 = vmatprep.subr.mxu0 0.0
      %808 = vmatpush1.msra.mxu0 0.0
      %809 = vmatprep.subr.mxu0 0.0
      %810 = vmatpush1.msra.mxu0 0.0
      %811 = vmatprep.subr.mxu0 0.0
      %812 = vmatpush1.msra.mxu0 0.0
      %813 = vmatprep.subr.mxu0 0.0
      %814 = vmatpush1.msra.mxu0 0.0
      %815 = vmatprep.subr.mxu0 0.0
      %816 = vmatpush1.msra.mxu0 0.0
      %817 = vmatprep.subr.mxu0 0.0
      %818 = vmatpush1.msra.mxu0 0.0
      %819 = vmatprep.subr.mxu0 0.0
      %820 = vmatpush1.msra.mxu0 0.0
      %821 = vmatprep.subr.mxu0 0.0
      %822 = vmatpush1.msra.mxu0 0.0
      %823 = vmatprep.subr.mxu0 0.0
      %824 = vmatpush1.msra.mxu0 0.0
      %825 = vmatprep.subr.mxu0 0.0
      %826 = vmatpush1.msra.mxu0 0.0
      %827 = vmatprep.subr.mxu0 0.0
      %828 = vmatpush1.msra.mxu0 0.0
      %829 = vmatprep.subr.mxu0 0.0
      %830 = vmatpush1.msra.mxu0 0.0
      %831 = vmatprep.subr.mxu0 0.0
      %832 = vmatpush1.msra.mxu0 0.0
      %833 = vmatprep.subr.mxu0 0.0
      %834 = vmatpush1.msra.mxu0 0.0
      %835 = vmatprep.subr.mxu0 0.0
      %836 = vmatpush1.msra.mxu0 0.0
      %837 = vmatprep.subr.mxu0 0.0
      %838 = vmatpush1.msra.mxu0 0.0
      %839 = vmatprep.subr.mxu0 0.0
      %840 = vmatpush1.msra.mxu0 0.0
      %841 = vmatprep.subr.mxu0 0.0
      %842 = vmatpush1.msra.mxu0 0.0
      %843 = vmatprep.subr.mxu0 0.0
      %844 = vmatpush1.msra.mxu0 0.0
      %845 = vmatprep.subr.mxu0 0.0
      %846 = vmatpush1.msra.mxu0 0.0
      %847 = vmatprep.subr.mxu0 0.0
      %848 = vmatpush1.msra.mxu0 0.0
      %849 = vmatprep.subr.mxu0 0.0
      %850 = vmatpush1.msra.mxu0 0.0
      %851 = vmatprep.subr.mxu0 0.0
      %852 = vmatpush1.msra.mxu0 0.0
      %853 = vmatprep.subr.mxu0 0.0
      %854 = vmatpush1.msra.mxu0 0.0
      %855 = vmatprep.subr.mxu0 0.0
      %856 = vmatpush1.msra.mxu0 0.0
      %857 = vmatprep.subr.mxu0 0.0
      %858 = vmatpush1.msra.mxu0 0.0
      %859 = vmatprep.subr.mxu0 0.0
      %860 = vmatpush1.msra.mxu0 0.0
      %861 = vmatprep.subr.mxu0 0.0
      %862 = vmatpush1.msra.mxu0 0.0
      %863 = vmatprep.mubr.f32.mxu0 0.0
      %864 = vmatmul.mubr.f32.gmra.mrb[0].mxu0 %v720
      %v865 = vpop.f32.mrb[0].mxu0
      %v866 = vadd.f32 0.0, %v865
      %v867 = vpop.f32.mrb[0].mxu0
      %868 = vdwg.mxu0
      %v869 = vadd.f32 %v705, %v795
      %v870 = vadd.f32 %v706, %v797
      %v871 = vadd.f32 %v707, %v866
      %s872 = scalar_lea.vmem %s1, 16
      %v873 = vld [vmem:[%s872] sm:$0xf]
      %874 = vrot.lane.b32.xlu0 %v225, 109
      %v875 = vpop.permute.xlu0 %874
      %876 = vrot.lane.b32.xlu0 %v232, 109
      %v877 = vpop.permute.xlu0 %876
      %878 = vrot.lane.b32.xlu0 %v226, 109
      %v879 = vpop.permute.xlu0 %878
      %vm880 = vcmask 891904
      %v881 = vsel %vm880, %v875, %v877
      %v882 = vsel %vm880, %v877, %v879
      %v884 = vsel %vm242, %v873, 0
      %v886 = vsel %vm246, %v881, 0
      %v888 = vsel %vm246, %v882, 0
      %v890 = vsel %vm246, %v879, 0
      %892 = vmatprep.subr.mxu0 %v888
      %893 = vmatpush1.msra.mxu0 %v886
      %894 = vmatprep.subr.mxu0 0.0
      %895 = vmatpush1.msra.mxu0 0.0
      %896 = vmatprep.subr.mxu0 0.0
      %897 = vmatpush1.msra.mxu0 0.0
      %898 = vmatprep.subr.mxu0 0.0
      %899 = vmatpush1.msra.mxu0 0.0
      %900 = vmatprep.subr.mxu0 0.0
      %901 = vmatpush1.msra.mxu0 0.0
      %902 = vmatprep.subr.mxu0 0.0
      %903 = vmatpush1.msra.mxu0 0.0
      %904 = vmatprep.subr.mxu0 0.0
      %905 = vmatpush1.msra.mxu0 0.0
      %906 = vmatprep.subr.mxu0 0.0
      %907 = vmatpush1.msra.mxu0 0.0
      %908 = vmatprep.subr.mxu0 0.0
      %909 = vmatpush1.msra.mxu0 0.0
      %910 = vmatprep.subr.mxu0 0.0
      %911 = vmatpush1.msra.mxu0 0.0
      %912 = vmatprep.subr.mxu0 0.0
      %913 = vmatpush1.msra.mxu0 0.0
      %914 = vmatprep.subr.mxu0 0.0
      %915 = vmatpush1.msra.mxu0 0.0
      %916 = vmatprep.subr.mxu0 0.0
      %917 = vmatpush1.msra.mxu0 0.0
      %918 = vmatprep.subr.mxu0 0.0
      %919 = vmatpush1.msra.mxu0 0.0
      %920 = vmatprep.subr.mxu0 0.0
      %921 = vmatpush1.msra.mxu0 0.0
      %922 = vmatprep.subr.mxu0 0.0
      %923 = vmatpush1.msra.mxu0 0.0
      %924 = vmatprep.subr.mxu0 0.0
      %925 = vmatpush1.msra.mxu0 0.0
      %926 = vmatprep.subr.mxu0 0.0
      %927 = vmatpush1.msra.mxu0 0.0
      %928 = vmatprep.subr.mxu0 0.0
      %929 = vmatpush1.msra.mxu0 0.0
      %930 = vmatprep.subr.mxu0 0.0
      %931 = vmatpush1.msra.mxu0 0.0
      %932 = vmatprep.subr.mxu0 0.0
      %933 = vmatpush1.msra.mxu0 0.0
      %934 = vmatprep.subr.mxu0 0.0
      %935 = vmatpush1.msra.mxu0 0.0
      %936 = vmatprep.subr.mxu0 0.0
      %937 = vmatpush1.msra.mxu0 0.0
      %938 = vmatprep.subr.mxu0 0.0
      %939 = vmatpush1.msra.mxu0 0.0
      %940 = vmatprep.subr.mxu0 0.0
      %941 = vmatpush1.msra.mxu0 0.0
      %942 = vmatprep.subr.mxu0 0.0
      %943 = vmatpush1.msra.mxu0 0.0
      %944 = vmatprep.subr.mxu0 0.0
      %945 = vmatpush1.msra.mxu0 0.0
      %946 = vmatprep.subr.mxu0 0.0
      %947 = vmatpush1.msra.mxu0 0.0
      %948 = vmatprep.subr.mxu0 0.0
      %949 = vmatpush1.msra.mxu0 0.0
      %950 = vmatprep.subr.mxu0 0.0
      %951 = vmatpush1.msra.mxu0 0.0
      %952 = vmatprep.subr.mxu0 0.0
      %953 = vmatpush1.msra.mxu0 0.0
      %954 = vmatprep.subr.mxu0 0.0
      %955 = vmatpush1.msra.mxu0 0.0
      %956 = vmatprep.mubr.f32.mxu0 0.0
      %957 = vmatmul.mubr.f32.gmra.mrb[0].mxu0 %v884
      %v958 = vpop.f32.mrb[0].mxu0
      %v959 = vadd.f32 0.0, %v958
      %v960 = vpop.f32.mrb[0].mxu0
      %v961 = vadd.f32 0.0, %v960
      %962 = vdwg.mxu0
      %963 = vmatprep.subr.mxu0 0.0
      %964 = vmatpush1.msra.mxu0 %v890
      %965 = vmatprep.subr.mxu0 0.0
      %966 = vmatpush1.msra.mxu0 0.0
      %967 = vmatprep.subr.mxu0 0.0
      %968 = vmatpush1.msra.mxu0 0.0
      %969 = vmatprep.subr.mxu0 0.0
      %970 = vmatpush1.msra.mxu0 0.0
      %971 = vmatprep.subr.mxu0 0.0
      %972 = vmatpush1.msra.mxu0 0.0
      %973 = vmatprep.subr.mxu0 0.0
      %974 = vmatpush1.msra.mxu0 0.0
      %975 = vmatprep.subr.mxu0 0.0
      %976 = vmatpush1.msra.mxu0 0.0
      %977 = vmatprep.subr.mxu0 0.0
      %978 = vmatpush1.msra.mxu0 0.0
      %979 = vmatprep.subr.mxu0 0.0
      %980 = vmatpush1.msra.mxu0 0.0
      %981 = vmatprep.subr.mxu0 0.0
      %982 = vmatpush1.msra.mxu0 0.0
      %983 = vmatprep.subr.mxu0 0.0
      %984 = vmatpush1.msra.mxu0 0.0
      %985 = vmatprep.subr.mxu0 0.0
      %986 = vmatpush1.msra.mxu0 0.0
      %987 = vmatprep.subr.mxu0 0.0
      %988 = vmatpush1.msra.mxu0 0.0
      %989 = vmatprep.subr.mxu0 0.0
      %990 = vmatpush1.msra.mxu0 0.0
      %991 = vmatprep.subr.mxu0 0.0
      %992 = vmatpush1.msra.mxu0 0.0
      %993 = vmatprep.subr.mxu0 0.0
      %994 = vmatpush1.msra.mxu0 0.0
      %995 = vmatprep.subr.mxu0 0.0
      %996 = vmatpush1.msra.mxu0 0.0
      %997 = vmatprep.subr.mxu0 0.0
      %998 = vmatpush1.msra.mxu0 0.0
      %999 = vmatprep.subr.mxu0 0.0
      %1000 = vmatpush1.msra.mxu0 0.0
      %1001 = vmatprep.subr.mxu0 0.0
      %1002 = vmatpush1.msra.mxu0 0.0
      %1003 = vmatprep.subr.mxu0 0.0
      %1004 = vmatpush1.msra.mxu0 0.0
      %1005 = vmatprep.subr.mxu0 0.0
      %1006 = vmatpush1.msra.mxu0 0.0
      %1007 = vmatprep.subr.mxu0 0.0
      %1008 = vmatpush1.msra.mxu0 0.0
      %1009 = vmatprep.subr.mxu0 0.0
      %1010 = vmatpush1.msra.mxu0 0.0
      %1011 = vmatprep.subr.mxu0 0.0
      %1012 = vmatpush1.msra.mxu0 0.0
      %1013 = vmatprep.subr.mxu0 0.0
      %1014 = vmatpush1.msra.mxu0 0.0
      %1015 = vmatprep.subr.mxu0 0.0
      %1016 = vmatpush1.msra.mxu0 0.0
      %1017 = vmatprep.subr.mxu0 0.0
      %1018 = vmatpush1.msra.mxu0 0.0
      %1019 = vmatprep.subr.mxu0 0.0
      %1020 = vmatpush1.msra.mxu0 0.0
      %1021 = vmatprep.subr.mxu0 0.0
      %1022 = vmatpush1.msra.mxu0 0.0
      %1023 = vmatprep.subr.mxu0 0.0
      %1024 = vmatpush1.msra.mxu0 0.0
      %1025 = vmatprep.subr.mxu0 0.0
      %1026 = vmatpush1.msra.mxu0 0.0
      %1027 = vmatprep.mubr.f32.mxu0 0.0
      %1028 = vmatmul.mubr.f32.gmra.mrb[0].mxu0 %v884
      %v1029 = vpop.f32.mrb[0].mxu0
      %v1030 = vadd.f32 0.0, %v1029
      %v1031 = vpop.f32.mrb[0].mxu0
      %1032 = vdwg.mxu0
      %v1033 = vadd.f32 %v869, %v959
      %v1034 = vadd.f32 %v870, %v961
      %v1035 = vadd.f32 %v871, %v1030
      %s1036 = scalar_lea.vmem %s1, 20
      %v1037 = vld [vmem:[%s1036] sm:$0xf]
      %1038 = vrot.lane.b32.xlu0 %v225, 108
      %v1039 = vpop.permute.xlu0 %1038
      %1040 = vrot.lane.b32.xlu0 %v232, 108
      %v1041 = vpop.permute.xlu0 %1040
      %1042 = vrot.lane.b32.xlu0 %v226, 108
      %v1043 = vpop.permute.xlu0 %1042
      %vm1044 = vcmask 883712
      %v1045 = vsel %vm1044, %v1039, %v1041
      %v1046 = vsel %vm1044, %v1041, %v1043
      %v1048 = vsel %vm242, %v1037, 0
      %v1050 = vsel %vm246, %v1045, 0
      %v1052 = vsel %vm246, %v1046, 0
      %v1054 = vsel %vm246, %v1043, 0
      %1056 = vmatprep.subr.mxu0 %v1052
      %1057 = vmatpush1.msra.mxu0 %v1050
      %1058 = vmatprep.subr.mxu0 0.0
      %1059 = vmatpush1.msra.mxu0 0.0
      %1060 = vmatprep.subr.mxu0 0.0
      %1061 = vmatpush1.msra.mxu0 0.0
      %1062 = vmatprep.subr.mxu0 0.0
      %1063 = vmatpush1.msra.mxu0 0.0
      %1064 = vmatprep.subr.mxu0 0.0
      %1065 = vmatpush1.msra.mxu0 0.0
      %1066 = vmatprep.subr.mxu0 0.0
      %1067 = vmatpush1.msra.mxu0 0.0
      %1068 = vmatprep.subr.mxu0 0.0
      %1069 = vmatpush1.msra.mxu0 0.0
      %1070 = vmatprep.subr.mxu0 0.0
      %1071 = vmatpush1.msra.mxu0 0.0
      %1072 = vmatprep.subr.mxu0 0.0
      %1073 = vmatpush1.msra.mxu0 0.0
      %1074 = vmatprep.subr.mxu0 0.0
      %1075 = vmatpush1.msra.mxu0 0.0
      %1076 = vmatprep.subr.mxu0 0.0
      %1077 = vmatpush1.msra.mxu0 0.0
      %1078 = vmatprep.subr.mxu0 0.0
      %1079 = vmatpush1.msra.mxu0 0.0
      %1080 = vmatprep.subr.mxu0 0.0
      %1081 = vmatpush1.msra.mxu0 0.0
      %1082 = vmatprep.subr.mxu0 0.0
      %1083 = vmatpush1.msra.mxu0 0.0
      %1084 = vmatprep.subr.mxu0 0.0
      %1085 = vmatpush1.msra.mxu0 0.0
      %1086 = vmatprep.subr.mxu0 0.0
      %1087 = vmatpush1.msra.mxu0 0.0
      %1088 = vmatprep.subr.mxu0 0.0
      %1089 = vmatpush1.msra.mxu0 0.0
      %1090 = vmatprep.subr.mxu0 0.0
      %1091 = vmatpush1.msra.mxu0 0.0
      %1092 = vmatprep.subr.mxu0 0.0
      %1093 = vmatpush1.msra.mxu0 0.0
      %1094 = vmatprep.subr.mxu0 0.0
      %1095 = vmatpush1.msra.mxu0 0.0
      %1096 = vmatprep.subr.mxu0 0.0
      %1097 = vmatpush1.msra.mxu0 0.0
      %1098 = vmatprep.subr.mxu0 0.0
      %1099 = vmatpush1.msra.mxu0 0.0
      %1100 = vmatprep.subr.mxu0 0.0
      %1101 = vmatpush1.msra.mxu0 0.0
      %1102 = vmatprep.subr.mxu0 0.0
      %1103 = vmatpush1.msra.mxu0 0.0
      %1104 = vmatprep.subr.mxu0 0.0
      %1105 = vmatpush1.msra.mxu0 0.0
      %1106 = vmatprep.subr.mxu0 0.0
      %1107 = vmatpush1.msra.mxu0 0.0
      %1108 = vmatprep.subr.mxu0 0.0
      %1109 = vmatpush1.msra.mxu0 0.0
      %1110 = vmatprep.subr.mxu0 0.0
      %1111 = vmatpush1.msra.mxu0 0.0
      %1112 = vmatprep.subr.mxu0 0.0
      %1113 = vmatpush1.msra.mxu0 0.0
      %1114 = vmatprep.subr.mxu0 0.0
      %1115 = vmatpush1.msra.mxu0 0.0
      %1116 = vmatprep.subr.mxu0 0.0
      %1117 = vmatpush1.msra.mxu0 0.0
      %1118 = vmatprep.subr.mxu0 0.0
      %1119 = vmatpush1.msra.mxu0 0.0
      %1120 = vmatprep.mubr.f32.mxu0 0.0
      %1121 = vmatmul.mubr.f32.gmra.mrb[0].mxu0 %v1048
      %v1122 = vpop.f32.mrb[0].mxu0
      %v1123 = vadd.f32 0.0, %v1122
      %v1124 = vpop.f32.mrb[0].mxu0
      %v1125 = vadd.f32 0.0, %v1124
      %1126 = vdwg.mxu0
      %1127 = vmatprep.subr.mxu0 0.0
      %1128 = vmatpush1.msra.mxu0 %v1054
      %1129 = vmatprep.subr.mxu0 0.0
      %1130 = vmatpush1.msra.mxu0 0.0
      %1131 = vmatprep.subr.mxu0 0.0
      %1132 = vmatpush1.msra.mxu0 0.0
      %1133 = vmatprep.subr.mxu0 0.0
      %1134 = vmatpush1.msra.mxu0 0.0
      %1135 = vmatprep.subr.mxu0 0.0
      %1136 = vmatpush1.msra.mxu0 0.0
      %1137 = vmatprep.subr.mxu0 0.0
      %1138 = vmatpush1.msra.mxu0 0.0
      %1139 = vmatprep.subr.mxu0 0.0
      %1140 = vmatpush1.msra.mxu0 0.0
      %1141 = vmatprep.subr.mxu0 0.0
      %1142 = vmatpush1.msra.mxu0 0.0
      %1143 = vmatprep.subr.mxu0 0.0
      %1144 = vmatpush1.msra.mxu0 0.0
      %1145 = vmatprep.subr.mxu0 0.0
      %1146 = vmatpush1.msra.mxu0 0.0
      %1147 = vmatprep.subr.mxu0 0.0
      %1148 = vmatpush1.msra.mxu0 0.0
      %1149 = vmatprep.subr.mxu0 0.0
      %1150 = vmatpush1.msra.mxu0 0.0
      %1151 = vmatprep.subr.mxu0 0.0
      %1152 = vmatpush1.msra.mxu0 0.0
      %1153 = vmatprep.subr.mxu0 0.0
      %1154 = vmatpush1.msra.mxu0 0.0
      %1155 = vmatprep.subr.mxu0 0.0
      %1156 = vmatpush1.msra.mxu0 0.0
      %1157 = vmatprep.subr.mxu0 0.0
      %1158 = vmatpush1.msra.mxu0 0.0
      %1159 = vmatprep.subr.mxu0 0.0
      %1160 = vmatpush1.msra.mxu0 0.0
      %1161 = vmatprep.subr.mxu0 0.0
      %1162 = vmatpush1.msra.mxu0 0.0
      %1163 = vmatprep.subr.mxu0 0.0
      %1164 = vmatpush1.msra.mxu0 0.0
      %1165 = vmatprep.subr.mxu0 0.0
      %1166 = vmatpush1.msra.mxu0 0.0
      %1167 = vmatprep.subr.mxu0 0.0
      %1168 = vmatpush1.msra.mxu0 0.0
      %1169 = vmatprep.subr.mxu0 0.0
      %1170 = vmatpush1.msra.mxu0 0.0
      %1171 = vmatprep.subr.mxu0 0.0
      %1172 = vmatpush1.msra.mxu0 0.0
      %1173 = vmatprep.subr.mxu0 0.0
      %1174 = vmatpush1.msra.mxu0 0.0
      %1175 = vmatprep.subr.mxu0 0.0
      %1176 = vmatpush1.msra.mxu0 0.0
      %1177 = vmatprep.subr.mxu0 0.0
      %1178 = vmatpush1.msra.mxu0 0.0
      %1179 = vmatprep.subr.mxu0 0.0
      %1180 = vmatpush1.msra.mxu0 0.0
      %1181 = vmatprep.subr.mxu0 0.0
      %1182 = vmatpush1.msra.mxu0 0.0
      %1183 = vmatprep.subr.mxu0 0.0
      %1184 = vmatpush1.msra.mxu0 0.0
      %1185 = vmatprep.subr.mxu0 0.0
      %1186 = vmatpush1.msra.mxu0 0.0
      %1187 = vmatprep.subr.mxu0 0.0
      %1188 = vmatpush1.msra.mxu0 0.0
      %1189 = vmatprep.subr.mxu0 0.0
      %1190 = vmatpush1.msra.mxu0 0.0
      %1191 = vmatprep.mubr.f32.mxu0 0.0
      %1192 = vmatmul.mubr.f32.gmra.mrb[0].mxu0 %v1048
      %v1193 = vpop.f32.mrb[0].mxu0
      %v1194 = vadd.f32 0.0, %v1193
      %v1195 = vpop.f32.mrb[0].mxu0
      %1196 = vdwg.mxu0
      %v1197 = vadd.f32 %v1033, %v1123
      %v1198 = vadd.f32 %v1034, %v1125
      %v1199 = vadd.f32 %v1035, %v1194
      %s1200 = scalar_lea.vmem %s1, 24
      %v1201 = vld [vmem:[%s1200] sm:$0xf]
      %1202 = vrot.lane.b32.xlu0 %v225, 92
      %v1203 = vpop.permute.xlu0 %1202
      %1204 = vrot.lane.b32.xlu0 %v232, 92
      %v1205 = vpop.permute.xlu0 %1204
      %1206 = vrot.lane.b32.xlu0 %v226, 92
      %v1207 = vpop.permute.xlu0 %1206
      %vm1208 = vcmask 752640
      %v1209 = vsel %vm1208, %v1203, %v1205
      %v1210 = vsel %vm1208, %v1205, %v1207
      %v1212 = vsel %vm242, %v1201, 0
      %v1214 = vsel %vm246, %v1209, 0
      %v1216 = vsel %vm246, %v1210, 0
      %v1218 = vsel %vm246, %v1207, 0
      %1220 = vmatprep.subr.mxu0 %v1216
      %1221 = vmatpush1.msra.mxu0 %v1214
      %1222 = vmatprep.subr.mxu0 0.0
      %1223 = vmatpush1.msra.mxu0 0.0
      %1224 = vmatprep.subr.mxu0 0.0
      %1225 = vmatpush1.msra.mxu0 0.0
      %1226 = vmatprep.subr.mxu0 0.0
      %1227 = vmatpush1.msra.mxu0 0.0
      %1228 = vmatprep.subr.mxu0 0.0
      %1229 = vmatpush1.msra.mxu0 0.0
      %1230 = vmatprep.subr.mxu0 0.0
      %1231 = vmatpush1.msra.mxu0 0.0
      %1232 = vmatprep.subr.mxu0 0.0
      %1233 = vmatpush1.msra.mxu0 0.0
      %1234 = vmatprep.subr.mxu0 0.0
      %1235 = vmatpush1.msra.mxu0 0.0
      %1236 = vmatprep.subr.mxu0 0.0
      %1237 = vmatpush1.msra.mxu0 0.0
      %1238 = vmatprep.subr.mxu0 0.0
      %1239 = vmatpush1.msra.mxu0 0.0
      %1240 = vmatprep.subr.mxu0 0.0
      %1241 = vmatpush1.msra.mxu0 0.0
      %1242 = vmatprep.subr.mxu0 0.0
      %1243 = vmatpush1.msra.mxu0 0.0
      %1244 = vmatprep.subr.mxu0 0.0
      %1245 = vmatpush1.msra.mxu0 0.0
      %1246 = vmatprep.subr.mxu0 0.0
      %1247 = vmatpush1.msra.mxu0 0.0
      %1248 = vmatprep.subr.mxu0 0.0
      %1249 = vmatpush1.msra.mxu0 0.0
      %1250 = vmatprep.subr.mxu0 0.0
      %1251 = vmatpush1.msra.mxu0 0.0
      %1252 = vmatprep.subr.mxu0 0.0
      %1253 = vmatpush1.msra.mxu0 0.0
      %1254 = vmatprep.subr.mxu0 0.0
      %1255 = vmatpush1.msra.mxu0 0.0
      %1256 = vmatprep.subr.mxu0 0.0
      %1257 = vmatpush1.msra.mxu0 0.0
      %1258 = vmatprep.subr.mxu0 0.0
      %1259 = vmatpush1.msra.mxu0 0.0
      %1260 = vmatprep.subr.mxu0 0.0
      %1261 = vmatpush1.msra.mxu0 0.0
      %1262 = vmatprep.subr.mxu0 0.0
      %1263 = vmatpush1.msra.mxu0 0.0
      %1264 = vmatprep.subr.mxu0 0.0
      %1265 = vmatpush1.msra.mxu0 0.0
      %1266 = vmatprep.subr.mxu0 0.0
      %1267 = vmatpush1.msra.mxu0 0.0
      %1268 = vmatprep.subr.mxu0 0.0
      %1269 = vmatpush1.msra.mxu0 0.0
      %1270 = vmatprep.subr.mxu0 0.0
      %1271 = vmatpush1.msra.mxu0 0.0
      %1272 = vmatprep.subr.mxu0 0.0
      %1273 = vmatpush1.msra.mxu0 0.0
      %1274 = vmatprep.subr.mxu0 0.0
      %1275 = vmatpush1.msra.mxu0 0.0
      %1276 = vmatprep.subr.mxu0 0.0
      %1277 = vmatpush1.msra.mxu0 0.0
      %1278 = vmatprep.subr.mxu0 0.0
      %1279 = vmatpush1.msra.mxu0 0.0
      %1280 = vmatprep.subr.mxu0 0.0
      %1281 = vmatpush1.msra.mxu0 0.0
      %1282 = vmatprep.subr.mxu0 0.0
      %1283 = vmatpush1.msra.mxu0 0.0
      %1284 = vmatprep.mubr.f32.mxu0 0.0
      %1285 = vmatmul.mubr.f32.gmra.mrb[0].mxu0 %v1212
      %v1286 = vpop.f32.mrb[0].mxu0
      %v1287 = vadd.f32 0.0, %v1286
      %v1288 = vpop.f32.mrb[0].mxu0
      %v1289 = vadd.f32 0.0, %v1288
      %1290 = vdwg.mxu0
      %1291 = vmatprep.subr.mxu0 0.0
      %1292 = vmatpush1.msra.mxu0 %v1218
      %1293 = vmatprep.subr.mxu0 0.0
      %1294 = vmatpush1.msra.mxu0 0.0
      %1295 = vmatprep.subr.mxu0 0.0
      %1296 = vmatpush1.msra.mxu0 0.0
      %1297 = vmatprep.subr.mxu0 0.0
      %1298 = vmatpush1.msra.mxu0 0.0
      %1299 = vmatprep.subr.mxu0 0.0
      %1300 = vmatpush1.msra.mxu0 0.0
      %1301 = vmatprep.subr.mxu0 0.0
      %1302 = vmatpush1.msra.mxu0 0.0
      %1303 = vmatprep.subr.mxu0 0.0
      %1304 = vmatpush1.msra.mxu0 0.0
      %1305 = vmatprep.subr.mxu0 0.0
      %1306 = vmatpush1.msra.mxu0 0.0
      %1307 = vmatprep.subr.mxu0 0.0
      %1308 = vmatpush1.msra.mxu0 0.0
      %1309 = vmatprep.subr.mxu0 0.0
      %1310 = vmatpush1.msra.mxu0 0.0
      %1311 = vmatprep.subr.mxu0 0.0
      %1312 = vmatpush1.msra.mxu0 0.0
      %1313 = vmatprep.subr.mxu0 0.0
      %1314 = vmatpush1.msra.mxu0 0.0
      %1315 = vmatprep.subr.mxu0 0.0
      %1316 = vmatpush1.msra.mxu0 0.0
      %1317 = vmatprep.subr.mxu0 0.0
      %1318 = vmatpush1.msra.mxu0 0.0
      %1319 = vmatprep.subr.mxu0 0.0
      %1320 = vmatpush1.msra.mxu0 0.0
      %1321 = vmatprep.subr.mxu0 0.0
      %1322 = vmatpush1.msra.mxu0 0.0
      %1323 = vmatprep.subr.mxu0 0.0
      %1324 = vmatpush1.msra.mxu0 0.0
      %1325 = vmatprep.subr.mxu0 0.0
      %1326 = vmatpush1.msra.mxu0 0.0
      %1327 = vmatprep.subr.mxu0 0.0
      %1328 = vmatpush1.msra.mxu0 0.0
      %1329 = vmatprep.subr.mxu0 0.0
      %1330 = vmatpush1.msra.mxu0 0.0
      %1331 = vmatprep.subr.mxu0 0.0
      %1332 = vmatpush1.msra.mxu0 0.0
      %1333 = vmatprep.subr.mxu0 0.0
      %1334 = vmatpush1.msra.mxu0 0.0
      %1335 = vmatprep.subr.mxu0 0.0
      %1336 = vmatpush1.msra.mxu0 0.0
      %1337 = vmatprep.subr.mxu0 0.0
      %1338 = vmatpush1.msra.mxu0 0.0
      %1339 = vmatprep.subr.mxu0 0.0
      %1340 = vmatpush1.msra.mxu0 0.0
      %1341 = vmatprep.subr.mxu0 0.0
      %1342 = vmatpush1.msra.mxu0 0.0
      %1343 = vmatprep.subr.mxu0 0.0
      %1344 = vmatpush1.msra.mxu0 0.0
      %1345 = vmatprep.subr.mxu0 0.0
      %1346 = vmatpush1.msra.mxu0 0.0
      %1347 = vmatprep.subr.mxu0 0.0
      %1348 = vmatpush1.msra.mxu0 0.0
      %1349 = vmatprep.subr.mxu0 0.0
      %1350 = vmatpush1.msra.mxu0 0.0
      %1351 = vmatprep.subr.mxu0 0.0
      %1352 = vmatpush1.msra.mxu0 0.0
      %1353 = vmatprep.subr.mxu0 0.0
      %1354 = vmatpush1.msra.mxu0 0.0
      %1355 = vmatprep.mubr.f32.mxu0 0.0
      %1356 = vmatmul.mubr.f32.gmra.mrb[0].mxu0 %v1212
      %v1357 = vpop.f32.mrb[0].mxu0
      %v1358 = vadd.f32 0.0, %v1357
      %v1359 = vpop.f32.mrb[0].mxu0
      %1360 = vdwg.mxu0
      %v1361 = vadd.f32 %v1197, %v1287
      %v1362 = vadd.f32 %v1198, %v1289
      %v1363 = vadd.f32 %v1199, %v1358
      %s1364 = scalar_lea.vmem %s1, 28
      %v1365 = vld [vmem:[%s1364] sm:$0xf]
      %1366 = vrot.lane.b32.xlu0 %v225, 91
      %v1367 = vpop.permute.xlu0 %1366
      %1368 = vrot.lane.b32.xlu0 %v232, 91
      %v1369 = vpop.permute.xlu0 %1368
      %1370 = vrot.lane.b32.xlu0 %v226, 91
      %v1371 = vpop.permute.xlu0 %1370
      %vm1372 = vcmask 744448
      %v1373 = vsel %vm1372, %v1367, %v1369
      %v1374 = vsel %vm1372, %v1369, %v1371
      %v1376 = vsel %vm242, %v1365, 0
      %v1378 = vsel %vm246, %v1373, 0
      %v1380 = vsel %vm246, %v1374, 0
      %v1382 = vsel %vm246, %v1371, 0
      %1384 = vmatprep.subr.mxu0 %v1380
      %1385 = vmatpush1.msra.mxu0 %v1378
      %1386 = vmatprep.subr.mxu0 0.0
      %1387 = vmatpush1.msra.mxu0 0.0
      %1388 = vmatprep.subr.mxu0 0.0
      %1389 = vmatpush1.msra.mxu0 0.0
      %1390 = vmatprep.subr.mxu0 0.0
      %1391 = vmatpush1.msra.mxu0 0.0
      %1392 = vmatprep.subr.mxu0 0.0
      %1393 = vmatpush1.msra.mxu0 0.0
      %1394 = vmatprep.subr.mxu0 0.0
      %1395 = vmatpush1.msra.mxu0 0.0
      %1396 = vmatprep.subr.mxu0 0.0
      %1397 = vmatpush1.msra.mxu0 0.0
      %1398 = vmatprep.subr.mxu0 0.0
      %1399 = vmatpush1.msra.mxu0 0.0
      %1400 = vmatprep.subr.mxu0 0.0
      %1401 = vmatpush1.msra.mxu0 0.0
      %1402 = vmatprep.subr.mxu0 0.0
      %1403 = vmatpush1.msra.mxu0 0.0
      %1404 = vmatprep.subr.mxu0 0.0
      %1405 = vmatpush1.msra.mxu0 0.0
      %1406 = vmatprep.subr.mxu0 0.0
      %1407 = vmatpush1.msra.mxu0 0.0
      %1408 = vmatprep.subr.mxu0 0.0
      %1409 = vmatpush1.msra.mxu0 0.0
      %1410 = vmatprep.subr.mxu0 0.0
      %1411 = vmatpush1.msra.mxu0 0.0
      %1412 = vmatprep.subr.mxu0 0.0
      %1413 = vmatpush1.msra.mxu0 0.0
      %1414 = vmatprep.subr.mxu0 0.0
      %1415 = vmatpush1.msra.mxu0 0.0
      %1416 = vmatprep.subr.mxu0 0.0
      %1417 = vmatpush1.msra.mxu0 0.0
      %1418 = vmatprep.subr.mxu0 0.0
      %1419 = vmatpush1.msra.mxu0 0.0
      %1420 = vmatprep.subr.mxu0 0.0
      %1421 = vmatpush1.msra.mxu0 0.0
      %1422 = vmatprep.subr.mxu0 0.0
      %1423 = vmatpush1.msra.mxu0 0.0
      %1424 = vmatprep.subr.mxu0 0.0
      %1425 = vmatpush1.msra.mxu0 0.0
      %1426 = vmatprep.subr.mxu0 0.0
      %1427 = vmatpush1.msra.mxu0 0.0
      %1428 = vmatprep.subr.mxu0 0.0
      %1429 = vmatpush1.msra.mxu0 0.0
      %1430 = vmatprep.subr.mxu0 0.0
      %1431 = vmatpush1.msra.mxu0 0.0
      %1432 = vmatprep.subr.mxu0 0.0
      %1433 = vmatpush1.msra.mxu0 0.0
      %1434 = vmatprep.subr.mxu0 0.0
      %1435 = vmatpush1.msra.mxu0 0.0
      %1436 = vmatprep.subr.mxu0 0.0
      %1437 = vmatpush1.msra.mxu0 0.0
      %1438 = vmatprep.subr.mxu0 0.0
      %1439 = vmatpush1.msra.mxu0 0.0
      %1440 = vmatprep.subr.mxu0 0.0
      %1441 = vmatpush1.msra.mxu0 0.0
      %1442 = vmatprep.subr.mxu0 0.0
      %1443 = vmatpush1.msra.mxu0 0.0
      %1444 = vmatprep.subr.mxu0 0.0
      %1445 = vmatpush1.msra.mxu0 0.0
      %1446 = vmatprep.subr.mxu0 0.0
      %1447 = vmatpush1.msra.mxu0 0.0
      %1448 = vmatprep.mubr.f32.mxu0 0.0
      %1449 = vmatmul.mubr.f32.gmra.mrb[0].mxu0 %v1376
      %v1450 = vpop.f32.mrb[0].mxu0
      %v1451 = vadd.f32 0.0, %v1450
      %v1452 = vpop.f32.mrb[0].mxu0
      %v1453 = vadd.f32 0.0, %v1452
      %1454 = vdwg.mxu0
      %1455 = vmatprep.subr.mxu0 0.0
      %1456 = vmatpush1.msra.mxu0 %v1382
      %1457 = vmatprep.subr.mxu0 0.0
      %1458 = vmatpush1.msra.mxu0 0.0
      %1459 = vmatprep.subr.mxu0 0.0
      %1460 = vmatpush1.msra.mxu0 0.0
      %1461 = vmatprep.subr.mxu0 0.0
      %1462 = vmatpush1.msra.mxu0 0.0
      %1463 = vmatprep.subr.mxu0 0.0
      %1464 = vmatpush1.msra.mxu0 0.0
      %1465 = vmatprep.subr.mxu0 0.0
      %1466 = vmatpush1.msra.mxu0 0.0
      %1467 = vmatprep.subr.mxu0 0.0
      %1468 = vmatpush1.msra.mxu0 0.0
      %1469 = vmatprep.subr.mxu0 0.0
      %1470 = vmatpush1.msra.mxu0 0.0
      %1471 = vmatprep.subr.mxu0 0.0
      %1472 = vmatpush1.msra.mxu0 0.0
      %1473 = vmatprep.subr.mxu0 0.0
      %1474 = vmatpush1.msra.mxu0 0.0
      %1475 = vmatprep.subr.mxu0 0.0
      %1476 = vmatpush1.msra.mxu0 0.0
      %1477 = vmatprep.subr.mxu0 0.0
      %1478 = vmatpush1.msra.mxu0 0.0
      %1479 = vmatprep.subr.mxu0 0.0
      %1480 = vmatpush1.msra.mxu0 0.0
      %1481 = vmatprep.subr.mxu0 0.0
      %1482 = vmatpush1.msra.mxu0 0.0
      %1483 = vmatprep.subr.mxu0 0.0
      %1484 = vmatpush1.msra.mxu0 0.0
      %1485 = vmatprep.subr.mxu0 0.0
      %1486 = vmatpush1.msra.mxu0 0.0
      %1487 = vmatprep.subr.mxu0 0.0
      %1488 = vmatpush1.msra.mxu0 0.0
      %1489 = vmatprep.subr.mxu0 0.0
      %1490 = vmatpush1.msra.mxu0 0.0
      %1491 = vmatprep.subr.mxu0 0.0
      %1492 = vmatpush1.msra.mxu0 0.0
      %1493 = vmatprep.subr.mxu0 0.0
      %1494 = vmatpush1.msra.mxu0 0.0
      %1495 = vmatprep.subr.mxu0 0.0
      %1496 = vmatpush1.msra.mxu0 0.0
      %1497 = vmatprep.subr.mxu0 0.0
      %1498 = vmatpush1.msra.mxu0 0.0
      %1499 = vmatprep.subr.mxu0 0.0
      %1500 = vmatpush1.msra.mxu0 0.0
      %1501 = vmatprep.subr.mxu0 0.0
      %1502 = vmatpush1.msra.mxu0 0.0
      %1503 = vmatprep.subr.mxu0 0.0
      %1504 = vmatpush1.msra.mxu0 0.0
      %1505 = vmatprep.subr.mxu0 0.0
      %1506 = vmatpush1.msra.mxu0 0.0
      %1507 = vmatprep.subr.mxu0 0.0
      %1508 = vmatpush1.msra.mxu0 0.0
      %1509 = vmatprep.subr.mxu0 0.0
      %1510 = vmatpush1.msra.mxu0 0.0
      %1511 = vmatprep.subr.mxu0 0.0
      %1512 = vmatpush1.msra.mxu0 0.0
      %1513 = vmatprep.subr.mxu0 0.0
      %1514 = vmatpush1.msra.mxu0 0.0
      %1515 = vmatprep.subr.mxu0 0.0
      %1516 = vmatpush1.msra.mxu0 0.0
      %1517 = vmatprep.subr.mxu0 0.0
      %1518 = vmatpush1.msra.mxu0 0.0
      %1519 = vmatprep.mubr.f32.mxu0 0.0
      %1520 = vmatmul.mubr.f32.gmra.mrb[0].mxu0 %v1376
      %v1521 = vpop.f32.mrb[0].mxu0
      %v1522 = vadd.f32 0.0, %v1521
      %v1523 = vpop.f32.mrb[0].mxu0
      %1524 = vdwg.mxu0
      %v1525 = vadd.f32 %v1361, %v1451
      %v1526 = vadd.f32 %v1362, %v1453
      %v1527 = vadd.f32 %v1363, %v1522
      %s1528 = scalar_lea.vmem %s1, 32
      %v1529 = vld [vmem:[%s1528] sm:$0xf]
      %1530 = vrot.lane.b32.xlu0 %v225, 90
      %v1531 = vpop.permute.xlu0 %1530
      %1532 = vrot.lane.b32.xlu0 %v232, 90
      %v1533 = vpop.permute.xlu0 %1532
      %1534 = vrot.lane.b32.xlu0 %v226, 90
      %v1535 = vpop.permute.xlu0 %1534
      %vm1536 = vcmask 736256
      %v1537 = vsel %vm1536, %v1531, %v1533
      %v1538 = vsel %vm1536, %v1533, %v1535
      %v1540 = vsel %vm242, %v1529, 0
      %v1542 = vsel %vm246, %v1537, 0
      %v1544 = vsel %vm246, %v1538, 0
      %v1546 = vsel %vm246, %v1535, 0
      %1548 = vmatprep.subr.mxu0 %v1544
      %1549 = vmatpush1.msra.mxu0 %v1542
      %1550 = vmatprep.subr.mxu0 0.0
      %1551 = vmatpush1.msra.mxu0 0.0
      %1552 = vmatprep.subr.mxu0 0.0
      %1553 = vmatpush1.msra.mxu0 0.0
      %1554 = vmatprep.subr.mxu0 0.0
      %1555 = vmatpush1.msra.mxu0 0.0
      %1556 = vmatprep.subr.mxu0 0.0
      %1557 = vmatpush1.msra.mxu0 0.0
      %1558 = vmatprep.subr.mxu0 0.0
      %1559 = vmatpush1.msra.mxu0 0.0
      %1560 = vmatprep.subr.mxu0 0.0
      %1561 = vmatpush1.msra.mxu0 0.0
      %1562 = vmatprep.subr.mxu0 0.0
      %1563 = vmatpush1.msra.mxu0 0.0
      %1564 = vmatprep.subr.mxu0 0.0
      %1565 = vmatpush1.msra.mxu0 0.0
      %1566 = vmatprep.subr.mxu0 0.0
      %1567 = vmatpush1.msra.mxu0 0.0
      %1568 = vmatprep.subr.mxu0 0.0
      %1569 = vmatpush1.msra.mxu0 0.0
      %1570 = vmatprep.subr.mxu0 0.0
      %1571 = vmatpush1.msra.mxu0 0.0
      %1572 = vmatprep.subr.mxu0 0.0
      %1573 = vmatpush1.msra.mxu0 0.0
      %1574 = vmatprep.subr.mxu0 0.0
      %1575 = vmatpush1.msra.mxu0 0.0
      %1576 = vmatprep.subr.mxu0 0.0
      %1577 = vmatpush1.msra.mxu0 0.0
      %1578 = vmatprep.subr.mxu0 0.0
      %1579 = vmatpush1.msra.mxu0 0.0
      %1580 = vmatprep.subr.mxu0 0.0
      %1581 = vmatpush1.msra.mxu0 0.0
      %1582 = vmatprep.subr.mxu0 0.0
      %1583 = vmatpush1.msra.mxu0 0.0
      %1584 = vmatprep.subr.mxu0 0.0
      %1585 = vmatpush1.msra.mxu0 0.0
      %1586 = vmatprep.subr.mxu0 0.0
      %1587 = vmatpush1.msra.mxu0 0.0
      %1588 = vmatprep.subr.mxu0 0.0
      %1589 = vmatpush1.msra.mxu0 0.0
      %1590 = vmatprep.subr.mxu0 0.0
      %1591 = vmatpush1.msra.mxu0 0.0
      %1592 = vmatprep.subr.mxu0 0.0
      %1593 = vmatpush1.msra.mxu0 0.0
      %1594 = vmatprep.subr.mxu0 0.0
      %1595 = vmatpush1.msra.mxu0 0.0
      %1596 = vmatprep.subr.mxu0 0.0
      %1597 = vmatpush1.msra.mxu0 0.0
      %1598 = vmatprep.subr.mxu0 0.0
      %1599 = vmatpush1.msra.mxu0 0.0
      %1600 = vmatprep.subr.mxu0 0.0
      %1601 = vmatpush1.msra.mxu0 0.0
      %1602 = vmatprep.subr.mxu0 0.0
      %1603 = vmatpush1.msra.mxu0 0.0
      %1604 = vmatprep.subr.mxu0 0.0
      %1605 = vmatpush1.msra.mxu0 0.0
      %1606 = vmatprep.subr.mxu0 0.0
      %1607 = vmatpush1.msra.mxu0 0.0
      %1608 = vmatprep.subr.mxu0 0.0
      %1609 = vmatpush1.msra.mxu0 0.0
      %1610 = vmatprep.subr.mxu0 0.0
      %1611 = vmatpush1.msra.mxu0 0.0
      %1612 = vmatprep.mubr.f32.mxu0 0.0
      %1613 = vmatmul.mubr.f32.gmra.mrb[0].mxu0 %v1540
      %v1614 = vpop.f32.mrb[0].mxu0
      %v1615 = vadd.f32 0.0, %v1614
      %v1616 = vpop.f32.mrb[0].mxu0
      %v1617 = vadd.f32 0.0, %v1616
      %1618 = vdwg.mxu0
      %1619 = vmatprep.subr.mxu0 0.0
      %1620 = vmatpush1.msra.mxu0 %v1546
      %1621 = vmatprep.subr.mxu0 0.0
      %1622 = vmatpush1.msra.mxu0 0.0
      %1623 = vmatprep.subr.mxu0 0.0
      %1624 = vmatpush1.msra.mxu0 0.0
      %1625 = vmatprep.subr.mxu0 0.0
      %1626 = vmatpush1.msra.mxu0 0.0
      %1627 = vmatprep.subr.mxu0 0.0
      %1628 = vmatpush1.msra.mxu0 0.0
      %1629 = vmatprep.subr.mxu0 0.0
      %1630 = vmatpush1.msra.mxu0 0.0
      %1631 = vmatprep.subr.mxu0 0.0
      %1632 = vmatpush1.msra.mxu0 0.0
      %1633 = vmatprep.subr.mxu0 0.0
      %1634 = vmatpush1.msra.mxu0 0.0
      %1635 = vmatprep.subr.mxu0 0.0
      %1636 = vmatpush1.msra.mxu0 0.0
      %1637 = vmatprep.subr.mxu0 0.0
      %1638 = vmatpush1.msra.mxu0 0.0
      %1639 = vmatprep.subr.mxu0 0.0
      %1640 = vmatpush1.msra.mxu0 0.0
      %1641 = vmatprep.subr.mxu0 0.0
      %1642 = vmatpush1.msra.mxu0 0.0
      %1643 = vmatprep.subr.mxu0 0.0
      %1644 = vmatpush1.msra.mxu0 0.0
      %1645 = vmatprep.subr.mxu0 0.0
      %1646 = vmatpush1.msra.mxu0 0.0
      %1647 = vmatprep.subr.mxu0 0.0
      %1648 = vmatpush1.msra.mxu0 0.0
      %1649 = vmatprep.subr.mxu0 0.0
      %1650 = vmatpush1.msra.mxu0 0.0
      %1651 = vmatprep.subr.mxu0 0.0
      %1652 = vmatpush1.msra.mxu0 0.0
      %1653 = vmatprep.subr.mxu0 0.0
      %1654 = vmatpush1.msra.mxu0 0.0
      %1655 = vmatprep.subr.mxu0 0.0
      %1656 = vmatpush1.msra.mxu0 0.0
      %1657 = vmatprep.subr.mxu0 0.0
      %1658 = vmatpush1.msra.mxu0 0.0
      %1659 = vmatprep.subr.mxu0 0.0
      %1660 = vmatpush1.msra.mxu0 0.0
      %1661 = vmatprep.subr.mxu0 0.0
      %1662 = vmatpush1.msra.mxu0 0.0
      %1663 = vmatprep.subr.mxu0 0.0
      %1664 = vmatpush1.msra.mxu0 0.0
      %1665 = vmatprep.subr.mxu0 0.0
      %1666 = vmatpush1.msra.mxu0 0.0
      %1667 = vmatprep.subr.mxu0 0.0
      %1668 = vmatpush1.msra.mxu0 0.0
      %1669 = vmatprep.subr.mxu0 0.0
      %1670 = vmatpush1.msra.mxu0 0.0
      %1671 = vmatprep.subr.mxu0 0.0
      %1672 = vmatpush1.msra.mxu0 0.0
      %1673 = vmatprep.subr.mxu0 0.0
      %1674 = vmatpush1.msra.mxu0 0.0
      %1675 = vmatprep.subr.mxu0 0.0
      %1676 = vmatpush1.msra.mxu0 0.0
      %1677 = vmatprep.subr.mxu0 0.0
      %1678 = vmatpush1.msra.mxu0 0.0
      %1679 = vmatprep.subr.mxu0 0.0
      %1680 = vmatpush1.msra.mxu0 0.0
      %1681 = vmatprep.subr.mxu0 0.0
      %1682 = vmatpush1.msra.mxu0 0.0
      %1683 = vmatprep.mubr.f32.mxu0 0.0
      %1684 = vmatmul.mubr.f32.gmra.mrb[0].mxu0 %v1540
      %v1685 = vpop.f32.mrb[0].mxu0
      %v1686 = vadd.f32 0.0, %v1685
      %v1687 = vpop.f32.mrb[0].mxu0
      %1688 = vdwg.mxu0
      %v1689 = vadd.f32 %v1525, %v1615
      %v1690 = vadd.f32 %v1526, %v1617
      %v1691 = vadd.f32 %v1527, %v1686
      %v1692 = vld [vmem:[%s2] sm:$0xf]
      %1694 = vset.pattern.permute.xlu0 0
      %1695 = vperm.xlu0 %1694, %v1692
      %v1696 = vpop.permute.xlu0 %1695
      %v1698 = vadd.f32 %v1689, %v1696
      %v1699 = vadd.f32 %v1690, %v1696
      %v1700 = vadd.f32 %v1691, %v1696
      %vm1701 = vcmp.ge.f32.partialorder %v1698, 0.0
      %vm1702 = vcmp.ge.f32.partialorder %v1699, 0.0
      %vm1703 = vcmp.ge.f32.partialorder %v1700, 0.0
      %v1704 = vmul.f32 %v1698, 0.01
      %v1705 = vmul.f32 %v1699, 0.01
      %v1706 = vmul.f32 %v1700, 0.01
      %v1707 = vsel %vm1701, %v1698, %v1704
      %v1708 = vsel %vm1702, %v1699, %v1705
      %v1709 = vsel %vm1703, %v1700, %v1706
      %v1710 = vld [vmem:[%s3] sm:$0xf]
      %v1712 = vsel %vm242, %v1710, 0
      %v1715 = vsel %vm246, %v1707, 0
      %v1718 = vsel %vm246, %v1708, 0
      %v1721 = vsel %vm246, %v1709, 0
      %1723 = vmatprep.subr.mxu0 %v1718
      %1724 = vmatpush1.msra.mxu0 %v1715
      %1725 = vmatprep.subr.mxu0 0.0
      %1726 = vmatpush1.msra.mxu0 0.0
      %1727 = vmatprep.subr.mxu0 0.0
      %1728 = vmatpush1.msra.mxu0 0.0
      %1729 = vmatprep.subr.mxu0 0.0
      %1730 = vmatpush1.msra.mxu0 0.0
      %1731 = vmatprep.subr.mxu0 0.0
      %1732 = vmatpush1.msra.mxu0 0.0
      %1733 = vmatprep.subr.mxu0 0.0
      %1734 = vmatpush1.msra.mxu0 0.0
      %1735 = vmatprep.subr.mxu0 0.0
      %1736 = vmatpush1.msra.mxu0 0.0
      %1737 = vmatprep.subr.mxu0 0.0
      %1738 = vmatpush1.msra.mxu0 0.0
      %1739 = vmatprep.subr.mxu0 0.0
      %1740 = vmatpush1.msra.mxu0 0.0
      %1741 = vmatprep.subr.mxu0 0.0
      %1742 = vmatpush1.msra.mxu0 0.0
      %1743 = vmatprep.subr.mxu0 0.0
      %1744 = vmatpush1.msra.mxu0 0.0
      %1745 = vmatprep.subr.mxu0 0.0
      %1746 = vmatpush1.msra.mxu0 0.0
      %1747 = vmatprep.subr.mxu0 0.0
      %1748 = vmatpush1.msra.mxu0 0.0
      %1749 = vmatprep.subr.mxu0 0.0
      %1750 = vmatpush1.msra.mxu0 0.0
      %1751 = vmatprep.subr.mxu0 0.0
      %1752 = vmatpush1.msra.mxu0 0.0
      %1753 = vmatprep.subr.mxu0 0.0
      %1754 = vmatpush1.msra.mxu0 0.0
      %1755 = vmatprep.subr.mxu0 0.0
      %1756 = vmatpush1.msra.mxu0 0.0
      %1757 = vmatprep.subr.mxu0 0.0
      %1758 = vmatpush1.msra.mxu0 0.0
      %1759 = vmatprep.subr.mxu0 0.0
      %1760 = vmatpush1.msra.mxu0 0.0
      %1761 = vmatprep.subr.mxu0 0.0
      %1762 = vmatpush1.msra.mxu0 0.0
      %1763 = vmatprep.subr.mxu0 0.0
      %1764 = vmatpush1.msra.mxu0 0.0
      %1765 = vmatprep.subr.mxu0 0.0
      %1766 = vmatpush1.msra.mxu0 0.0
      %1767 = vmatprep.subr.mxu0 0.0
      %1768 = vmatpush1.msra.mxu0 0.0
      %1769 = vmatprep.subr.mxu0 0.0
      %1770 = vmatpush1.msra.mxu0 0.0
      %1771 = vmatprep.subr.mxu0 0.0
      %1772 = vmatpush1.msra.mxu0 0.0
      %1773 = vmatprep.subr.mxu0 0.0
      %1774 = vmatpush1.msra.mxu0 0.0
      %1775 = vmatprep.subr.mxu0 0.0
      %1776 = vmatpush1.msra.mxu0 0.0
      %1777 = vmatprep.subr.mxu0 0.0
      %1778 = vmatpush1.msra.mxu0 0.0
      %1779 = vmatprep.subr.mxu0 0.0
      %1780 = vmatpush1.msra.mxu0 0.0
      %1781 = vmatprep.subr.mxu0 0.0
      %1782 = vmatpush1.msra.mxu0 0.0
      %1783 = vmatprep.subr.mxu0 0.0
      %1784 = vmatpush1.msra.mxu0 0.0
      %1785 = vmatprep.subr.mxu0 0.0
      %1786 = vmatpush1.msra.mxu0 0.0
      %1787 = vmatprep.mubr.f32.mxu0 0.0
      %1788 = vmatmul.mubr.f32.gmra.mrb[0].mxu0 %v1712
      %v1789 = vpop.f32.mrb[0].mxu0
      %v1790 = vadd.f32 0.0, %v1789
      %v1791 = vpop.f32.mrb[0].mxu0
      %v1792 = vadd.f32 0.0, %v1791
      %1793 = vdwg.mxu0
      %1794 = vmatprep.subr.mxu0 0.0
      %1795 = vmatpush1.msra.mxu0 %v1721
      %1796 = vmatprep.subr.mxu0 0.0
      %1797 = vmatpush1.msra.mxu0 0.0
      %1798 = vmatprep.subr.mxu0 0.0
      %1799 = vmatpush1.msra.mxu0 0.0
      %1800 = vmatprep.subr.mxu0 0.0
      %1801 = vmatpush1.msra.mxu0 0.0
      %1802 = vmatprep.subr.mxu0 0.0
      %1803 = vmatpush1.msra.mxu0 0.0
      %1804 = vmatprep.subr.mxu0 0.0
      %1805 = vmatpush1.msra.mxu0 0.0
      %1806 = vmatprep.subr.mxu0 0.0
      %1807 = vmatpush1.msra.mxu0 0.0
      %1808 = vmatprep.subr.mxu0 0.0
      %1809 = vmatpush1.msra.mxu0 0.0
      %1810 = vmatprep.subr.mxu0 0.0
      %1811 = vmatpush1.msra.mxu0 0.0
      %1812 = vmatprep.subr.mxu0 0.0
      %1813 = vmatpush1.msra.mxu0 0.0
      %1814 = vmatprep.subr.mxu0 0.0
      %1815 = vmatpush1.msra.mxu0 0.0
      %1816 = vmatprep.subr.mxu0 0.0
      %1817 = vmatpush1.msra.mxu0 0.0
      %1818 = vmatprep.subr.mxu0 0.0
      %1819 = vmatpush1.msra.mxu0 0.0
      %1820 = vmatprep.subr.mxu0 0.0
      %1821 = vmatpush1.msra.mxu0 0.0
      %1822 = vmatprep.subr.mxu0 0.0
      %1823 = vmatpush1.msra.mxu0 0.0
      %1824 = vmatprep.subr.mxu0 0.0
      %1825 = vmatpush1.msra.mxu0 0.0
      %1826 = vmatprep.subr.mxu0 0.0
      %1827 = vmatpush1.msra.mxu0 0.0
      %1828 = vmatprep.subr.mxu0 0.0
      %1829 = vmatpush1.msra.mxu0 0.0
      %1830 = vmatprep.subr.mxu0 0.0
      %1831 = vmatpush1.msra.mxu0 0.0
      %1832 = vmatprep.subr.mxu0 0.0
      %1833 = vmatpush1.msra.mxu0 0.0
      %1834 = vmatprep.subr.mxu0 0.0
      %1835 = vmatpush1.msra.mxu0 0.0
      %1836 = vmatprep.subr.mxu0 0.0
      %1837 = vmatpush1.msra.mxu0 0.0
      %1838 = vmatprep.subr.mxu0 0.0
      %1839 = vmatpush1.msra.mxu0 0.0
      %1840 = vmatprep.subr.mxu0 0.0
      %1841 = vmatpush1.msra.mxu0 0.0
      %1842 = vmatprep.subr.mxu0 0.0
      %1843 = vmatpush1.msra.mxu0 0.0
      %1844 = vmatprep.subr.mxu0 0.0
      %1845 = vmatpush1.msra.mxu0 0.0
      %1846 = vmatprep.subr.mxu0 0.0
      %1847 = vmatpush1.msra.mxu0 0.0
      %1848 = vmatprep.subr.mxu0 0.0
      %1849 = vmatpush1.msra.mxu0 0.0
      %1850 = vmatprep.subr.mxu0 0.0
      %1851 = vmatpush1.msra.mxu0 0.0
      %1852 = vmatprep.subr.mxu0 0.0
      %1853 = vmatpush1.msra.mxu0 0.0
      %1854 = vmatprep.subr.mxu0 0.0
      %1855 = vmatpush1.msra.mxu0 0.0
      %1856 = vmatprep.subr.mxu0 0.0
      %1857 = vmatpush1.msra.mxu0 0.0
      %1858 = vmatprep.mubr.f32.mxu0 0.0
      %1859 = vmatmul.mubr.f32.gmra.mrb[0].mxu0 %v1712
      %v1860 = vpop.f32.mrb[0].mxu0
      %v1861 = vadd.f32 0.0, %v1860
      %v1862 = vpop.f32.mrb[0].mxu0
      %1863 = vdwg.mxu0
      %v1867 = vcombine.low %v1790, %v1792
      %1868 = vrot.lane.b32.xlu0 %v1867, 19
      %v1869 = vpop.permute.xlu0 %1868
      %1870 = vrot.lane.b32.xlu0 %v1861, 19
      %v1871 = vpop.permute.xlu0 %1870
      %v1872 = vrot.slane %v1869, 4
      %vm1873 = vcmask 154624
      %v1874 = vsel %vm1873, %v1872, %v1869
      %v1875 = vsel %vm1873, %v1872, %v1871
      %v1878 = vadd.f32 %v225, %v1874
      %v1879 = vadd.f32 %v226, %v1875
      %v1880 = vld [vmem:[%s4] sm:$0xf]
      %1882 = vset.pattern.permute.xlu0 0
      %1883 = vperm.xlu0 %1882, %v1880
      %v1884 = vpop.permute.xlu0 %1883
      %v1886 = vunpack.c.l.s4 839922192
      %v1887 = vunpack.c.0.s8 %v1886
      %v1888 = vlaneseq
      %v1889 = vshrl.u32 %v1888, 7
      %v1890 = vsub.s32 %v1887, %v1889
      %v1891 = vrot.slane %v1884, %v1890
      %v1893 = vadd.f32 %v1878, %v1891
      %v1894 = vadd.f32 %v1879, %v1891
      %1895 = vst [vmem:[%s224] sm:$0xff] 0.0
      %vm1896 = vcmask 551936
      %1897 = vst.msk [vmem:[%s224 + $0x8] sm:$0xf] %vm1896, 0.0
      %vm1898 = vcmask 1043608
      %vm1899 = vcmask 1047556
      %vm1900 = vmor %vm1899, %vm1898
      %1901 = vst.msk [vmem:[%s224] sm:$0xff] %vm1900, %v1893
      %vm1902 = vcmask 396288
      %1903 = vst.msk [vmem:[%s224 + $0x8] sm:$0xf] %vm1902, %v1894
      %p1904 = scmp.lt.s32.totalorder %s16, 1
      %s1905 = scalar_select %p1904, %s16, 1
      %s1906 = smul.addr %s1905, 3
      %s1907 = smul.addr %s1906, 4
      %s1908 = scalar_lea.vmem %s5, %s1907
      // Predicated region
      $region41: #{ab_mffe_forward.3} parent=39 // pred_check
        %p1909 = pneg %p144
      $region42: #{ab_mffe_forward.3} parent=39 // pred_check_branch
        %1911 = sbr.rel (%p1909) target = $region44
      $region43: #{ab_mffe_forward.3} parent=39 // pred_region
        _
      $region44: #{ab_mffe_forward.3} parent=39 // pred_fallthru
        _
    $region40: #{ab_mffe_forward.3} parent=5 // pred_fallthru
      _
    %p1912 = scmp.le.s32.totalorder 2, %s11
    // Predicated region
    $region45: #{ab_mffe_forward.3} parent=5 // pred_check
      %p1913 = pneg %p1912
    $region46: #{ab_mffe_forward.3} parent=5 // pred_check_branch
      %1915 = sbr.rel (%p1913) target = $region48
    $region47: #{ab_mffe_forward.3} parent=5 // pred_region
      %s1916 = ssub.s32 %s11, 2
      // Predicated region
      $region49: #{ab_mffe_forward.3} parent=47 // pred_check
        %p1917 = pneg %p150
      $region50: #{ab_mffe_forward.3} parent=47 // pred_check_branch
        %1919 = sbr.rel (%p1917) target = $region52
      $region51: #{ab_mffe_forward.3} parent=47 // pred_region
        %p1920 = scmp.lt.s32.totalorder %s17, 1
        %s1921 = scalar_select %p1920, %s17, 1
        %s1922 = smul.addr %s1921, 3
        %s1923 = smul.addr %s1922, 4
        %s1924 = scalar_lea.vmem %s5, %s1923
      $region52: #{ab_mffe_forward.3} parent=47 // pred_fallthru
        _
    $region48: #{ab_mffe_forward.3} parent=5 // pred_fallthru
      _
  $region6: #{ab_mffe_forward.3} parent=0 // loop_footer
    %s15 = sadd.s32 1, %s11
  $region7: #{ab_mffe_forward.3} parent=0 // loop_footer_branch
    %10 = sbr.rel target = $region3
  $region8: #{ab_mffe_forward.3} parent=0 // loop_exit
    _

</llo_original>
